<compile_context>
chip_gen: v6e
topology: v6e:2x2x1
jax: 0.10.0
libtpu: 0.0.40
codegen_flags: <defaults>
</compile_context>

<pallas_src>
import math

import jax
import jax.numpy as jnp
from jax.experimental import pallas as pl
from jax.experimental.pallas import tpu as pltpu

COND_DIM = 1
CHANNELS = 1
IMG_SIZE = 28
IMG_FEAT = CHANNELS * IMG_SIZE * IMG_SIZE            # 784
IN_DIM = COND_DIM + IMG_FEAT                         # 785
HID = 512
OUT_DIM = 1


def _leaky_relu(x, slope=0.2):
    return jnp.where(x > 0, x, slope * x)


def _disc_kernel(lab_ref, img_ref,
                 w1i_ref, w1l_ref, b1_ref,
                 w2_ref, b2_ref,
                 w3_ref, b3_ref,
                 w4_ref, b4_ref,
                 out_ref):
    # Inputs arrive f32; feed the MXU in bf16 with f32 accumulation.
    x_img = img_ref[...].astype(jnp.bfloat16)                    # [tb, 784]
    lab = lab_ref[...]                                           # [tb, 1] f32

    # Layer 1: Linear(785 -> 512) split as img-part (MXU) + label-part (VPU).
    h = jnp.dot(x_img, w1i_ref[...], preferred_element_type=jnp.float32)
    h = h + lab * w1l_ref[...] + b1_ref[...]
    h = _leaky_relu(h)

    # Layer 2: Linear(512 -> 512) + Dropout(0.4) + LeakyReLU(0.2)
    # TODO(synk): Dropout(0.4) is identity in eval mode; training-mode RNG mask not implemented.
    h = jnp.dot(h.astype(jnp.bfloat16), w2_ref[...],
                preferred_element_type=jnp.float32) + b2_ref[...]
    h = _leaky_relu(h)

    # Layer 3: Linear(512 -> 512) + Dropout(0.4) + LeakyReLU(0.2)
    h = jnp.dot(h.astype(jnp.bfloat16), w3_ref[...],
                preferred_element_type=jnp.float32) + b3_ref[...]
    h = _leaky_relu(h)

    # Layer 4: Linear(512 -> 1) as VPU multiply + XLU lane reduction.
    out = jnp.sum(h * w4_ref[...], axis=-1, keepdims=True) + b4_ref[...]
    out_ref[...] = out.astype(out_ref.dtype)


@jax.jit
def discriminator_forward(img, label_embedding, kparams):
    """img: [B, 1, 28, 28] f32 (NCHW), label_embedding: [B, 1] f32."""
    b = img.shape[0]
    img_flat = img.reshape(b, IMG_FEAT)          # contiguous reshape: free

    # Batch tiling: 256-row tiles for large batches, one padded tile otherwise.
    tile_b = 256 if b >= 256 else max(8, ((b + 7) // 8) * 8)
    b_pad = ((b + tile_b - 1) // tile_b) * tile_b
    if b_pad != b:
        img_flat = jnp.pad(img_flat, ((0, b_pad - b), (0, 0)))
        lab = jnp.pad(label_embedding, ((0, b_pad - b), (0, 0)))
    else:
        lab = label_embedding

    w1i = kparams["w1_img"]
    w1l = kparams["w1_lab"]
    b1 = kparams["b1"]
    w2, b2 = kparams["w2"], kparams["b2"]
    w3, b3 = kparams["w3"], kparams["b3"]
    w4, b4 = kparams["w4"], kparams["b4"]

    def batch_spec(feat):
        return pl.BlockSpec((tile_b, feat), lambda i: (i, 0))

    def const_spec(shape):
        return pl.BlockSpec(shape, lambda i: (0, 0))

    weight_bytes = (IMG_FEAT * HID + 2 * HID * HID) * 2 \
        + (4 * HID + 1 + OUT_DIM) * 4
    flops = 2 * b_pad * (IMG_FEAT * HID + 2 * HID * HID + HID)
    bytes_accessed = b_pad * (IMG_FEAT + COND_DIM + OUT_DIM) * 4 + weight_bytes

    out_p = pl.pallas_call(
        _disc_kernel,
        out_shape=jax.ShapeDtypeStruct((b_pad, OUT_DIM), jnp.float32),
        grid=(b_pad // tile_b,),
        in_specs=[
            batch_spec(COND_DIM),            # label embedding [B, 1]  f32
            batch_spec(IMG_FEAT),            # flattened image [B, 784] f32
            const_spec((IMG_FEAT, HID)),     # W1 image rows   bf16
            const_spec((1, HID)),            # W1 label row    f32
            const_spec((1, HID)),            # b1              f32
            const_spec((HID, HID)),          # W2              bf16
            const_spec((1, HID)),            # b2              f32
            const_spec((HID, HID)),          # W3              bf16
            const_spec((1, HID)),            # b3              f32
            const_spec((1, HID)),            # W4 as row       f32
            const_spec((1, OUT_DIM)),        # b4              f32
        ],
        out_specs=batch_spec(OUT_DIM),
        compiler_params=pltpu.CompilerParams(
            dimension_semantics=("parallel",),
            vmem_limit_bytes=32 << 20),
        cost_estimate=pl.CostEstimate(
            flops=flops, transcendentals=0, bytes_accessed=bytes_accessed),
    )(lab, img_flat, w1i, w1l, b1, w2, b2, w3, b3, w4, b4)

    return out_p[:b]  # [B, 1]


def init_params(key):
    """nn.Linear-style init (U[-1/sqrt(fan_in), 1/sqrt(fan_in)]), f32.

    Weights are stored as [in, out] so x @ W + b == PyTorch x @ W_t.T + b.
    """
    dims = [(IN_DIM, HID), (HID, HID), (HID, HID), (HID, OUT_DIM)]
    params = []
    for fan_in, fan_out in dims:
        key, kw, kb = jax.random.split(key, 3)
        bound = 1.0 / math.sqrt(fan_in)
        w = jax.random.uniform(kw, (fan_in, fan_out), jnp.float32, -bound, bound)
        b = jax.random.uniform(kb, (1, fan_out), jnp.float32, -bound, bound)
        params.append((w, b))
    return params


def prepare_params(params):
    """Convert f32 [in,out] params to the kernel layout.

    Big matrices -> bf16 (MXU-native, half the weight HBM traffic);
    tiny row-vectors / biases stay f32.
    """
    (w1, b1), (w2, b2), (w3, b3), (w4, b4) = params
    return {
        "w1_lab": w1[:COND_DIM, :],                         # [1, 512]  f32
        "w1_img": w1[COND_DIM:, :].astype(jnp.bfloat16),    # [784, 512] bf16
        "b1": b1,                                           # [1, 512]  f32
        "w2": w2.astype(jnp.bfloat16), "b2": b2,
        "w3": w3.astype(jnp.bfloat16), "b3": b3,
        "w4": jnp.transpose(w4),                            # [1, 512]  f32
        "b4": b4,                                           # [1, 1]    f32
    }


def _reference(img, lab, kp):
    """Pure-JAX reference mirroring the kernel math (bf16 weights, f32 acc)."""
    x_img = img.reshape(img.shape[0], -1).astype(jnp.bfloat16)
    lrelu = lambda h: jnp.where(h > 0, h, 0.2 * h)
    h = jnp.dot(x_img, kp["w1_img"], preferred_element_type=jnp.float32)
    h = h + lab * kp["w1_lab"] + kp["b1"]
    h = lrelu(h)
    h = jnp.dot(h.astype(jnp.bfloat16), kp["w2"],
                preferred_element_type=jnp.float32) + kp["b2"]
    h = lrelu(h)
    h = jnp.dot(h.astype(jnp.bfloat16), kp["w3"],
                preferred_element_type=jnp.float32) + kp["b3"]
    h = lrelu(h)
    return jnp.sum(h * kp["w4"], axis=-1, keepdims=True) + kp["b4"]


if __name__ == "__main__":
    key = jax.random.PRNGKey(0)
    k_params, k_img, k_lab = jax.random.split(key, 3)

    params = init_params(k_params)
    kparams = prepare_params(params)

    batch = 2
    img = jax.random.normal(k_img, (batch, CHANNELS, IMG_SIZE, IMG_SIZE), jnp.float32)
    label_embedding = jax.random.normal(k_lab, (batch, COND_DIM), jnp.float32)

    validity = discriminator_forward(img, label_embedding, kparams)
    jax.block_until_ready(validity)

    assert validity.shape == (batch, 1), validity.shape
    assert validity.dtype == jnp.float32

    expected = _reference(img, label_embedding, kparams)
    assert jnp.allclose(validity, expected, atol=5e-3, rtol=5e-3), (
        jnp.max(jnp.abs(validity - expected)))

    print("KERNEL_OK")
</pallas_src>

<mosaic_0001>
module attributes {stable_mosaic.version = 11 : i64} {
  func.func @_disc_kernel(%arg0: i32, %arg1: memref<8x1xf32, #tpu.memory_space<vmem>>, %arg2: memref<8x784xf32, #tpu.memory_space<vmem>>, %arg3: memref<784x512xbf16, #tpu.memory_space<vmem>>, %arg4: memref<1x512xf32, #tpu.memory_space<vmem>>, %arg5: memref<1x512xf32, #tpu.memory_space<vmem>>, %arg6: memref<512x512xbf16, #tpu.memory_space<vmem>>, %arg7: memref<1x512xf32, #tpu.memory_space<vmem>>, %arg8: memref<512x512xbf16, #tpu.memory_space<vmem>>, %arg9: memref<1x512xf32, #tpu.memory_space<vmem>>, %arg10: memref<1x512xf32, #tpu.memory_space<vmem>>, %arg11: memref<1x1xf32, #tpu.memory_space<vmem>>, %arg12: memref<8x1xf32, #tpu.memory_space<vmem>>) attributes {dimension_semantics = [#tpu.dimension_semantics<parallel>], iteration_bounds = array<i64: 1>, scalar_prefetch = 0 : i64, scratch_operands = 0 : i64, tpu.core_type = #tpu.core_type<tc>, window_params = [{transform_indices = @transform_0, window_bounds = array<i64: 8, 1>}, {transform_indices = @transform_1, window_bounds = array<i64: 8, 784>}, {pipeline_mode = #tpu.pipeline_mode<synchronous>, transform_indices = @transform_2, window_bounds = array<i64: 784, 512>}, {pipeline_mode = #tpu.pipeline_mode<synchronous>, transform_indices = @transform_3, window_bounds = array<i64: 1, 512>}, {pipeline_mode = #tpu.pipeline_mode<synchronous>, transform_indices = @transform_4, window_bounds = array<i64: 1, 512>}, {pipeline_mode = #tpu.pipeline_mode<synchronous>, transform_indices = @transform_5, window_bounds = array<i64: 512, 512>}, {pipeline_mode = #tpu.pipeline_mode<synchronous>, transform_indices = @transform_6, window_bounds = array<i64: 1, 512>}, {pipeline_mode = #tpu.pipeline_mode<synchronous>, transform_indices = @transform_7, window_bounds = array<i64: 512, 512>}, {pipeline_mode = #tpu.pipeline_mode<synchronous>, transform_indices = @transform_8, window_bounds = array<i64: 1, 512>}, {pipeline_mode = #tpu.pipeline_mode<synchronous>, transform_indices = @transform_9, window_bounds = array<i64: 1, 512>}, {pipeline_mode = #tpu.pipeline_mode<synchronous>, transform_indices = @transform_10, window_bounds = array<i64: 1, 1>}, {transform_indices = @transform_11, window_bounds = array<i64: 8, 1>}]} {
    %c0 = arith.constant 0 : index
    %c0_0 = arith.constant 0 : index
    %0 = vector.load %arg2[%c0, %c0_0] : memref<8x784xf32, #tpu.memory_space<vmem>>, vector<8x784xf32>
    %1 = arith.truncf %0 : vector<8x784xf32> to vector<8x784xbf16>
    %c0_1 = arith.constant 0 : index
    %c0_2 = arith.constant 0 : index
    %2 = vector.load %arg1[%c0_1, %c0_2] : memref<8x1xf32, #tpu.memory_space<vmem>>, vector<8x1xf32>
    %c0_3 = arith.constant 0 : index
    %c0_4 = arith.constant 0 : index
    %3 = vector.load %arg3[%c0_3, %c0_4] : memref<784x512xbf16, #tpu.memory_space<vmem>>, vector<784x512xbf16>
    %cst = arith.constant dense<0.000000e+00> : vector<8x512xf32>
    %4 = tpu.matmul %1, %3, %cst {dimension_numbers = #tpu.dot_dimension_numbers<[1], [0], [0], [1], [0, 0, 1, 1], [], []>} : vector<8x784xbf16>, vector<784x512xbf16>, vector<8x512xf32> -> vector<8x512xf32>
    %c0_5 = arith.constant 0 : index
    %c0_6 = arith.constant 0 : index
    %5 = vector.load %arg4[%c0_5, %c0_6] : memref<1x512xf32, #tpu.memory_space<vmem>>, vector<1x512xf32>
    %6 = vector.broadcast %2 : vector<8x1xf32> to vector<8x512xf32>
    %7 = vector.broadcast %5 : vector<1x512xf32> to vector<8x512xf32>
    %8 = arith.mulf %6, %7 : vector<8x512xf32>
    %9 = arith.addf %4, %8 : vector<8x512xf32>
    %c0_7 = arith.constant 0 : index
    %c0_8 = arith.constant 0 : index
    %10 = vector.load %arg5[%c0_7, %c0_8] : memref<1x512xf32, #tpu.memory_space<vmem>>, vector<1x512xf32>
    %11 = vector.broadcast %10 : vector<1x512xf32> to vector<8x512xf32>
    %12 = arith.addf %9, %11 : vector<8x512xf32>
    %cst_9 = arith.constant 0.000000e+00 : f32
    %13 = vector.broadcast %cst_9 : f32 to vector<8x512xf32>
    %14 = arith.cmpf ogt, %12, %13 : vector<8x512xf32>
    %cst_10 = arith.constant 2.000000e-01 : f32
    %15 = vector.broadcast %cst_10 : f32 to vector<8x512xf32>
    %16 = arith.mulf %15, %12 : vector<8x512xf32>
    %17 = arith.select %14, %12, %16 : vector<8x512xi1>, vector<8x512xf32>
    %18 = arith.truncf %17 : vector<8x512xf32> to vector<8x512xbf16>
    %c0_11 = arith.constant 0 : index
    %c0_12 = arith.constant 0 : index
    %19 = vector.load %arg6[%c0_11, %c0_12] : memref<512x512xbf16, #tpu.memory_space<vmem>>, vector<512x512xbf16>
    %cst_13 = arith.constant dense<0.000000e+00> : vector<8x512xf32>
    %20 = tpu.matmul %18, %19, %cst_13 {dimension_numbers = #tpu.dot_dimension_numbers<[1], [0], [0], [1], [0, 0, 1, 1], [], []>} : vector<8x512xbf16>, vector<512x512xbf16>, vector<8x512xf32> -> vector<8x512xf32>
    %c0_14 = arith.constant 0 : index
    %c0_15 = arith.constant 0 : index
    %21 = vector.load %arg7[%c0_14, %c0_15] : memref<1x512xf32, #tpu.memory_space<vmem>>, vector<1x512xf32>
    %22 = vector.broadcast %21 : vector<1x512xf32> to vector<8x512xf32>
    %23 = arith.addf %20, %22 : vector<8x512xf32>
    %cst_16 = arith.constant 0.000000e+00 : f32
    %24 = vector.broadcast %cst_16 : f32 to vector<8x512xf32>
    %25 = arith.cmpf ogt, %23, %24 : vector<8x512xf32>
    %cst_17 = arith.constant 2.000000e-01 : f32
    %26 = vector.broadcast %cst_17 : f32 to vector<8x512xf32>
    %27 = arith.mulf %26, %23 : vector<8x512xf32>
    %28 = arith.select %25, %23, %27 : vector<8x512xi1>, vector<8x512xf32>
    %29 = arith.truncf %28 : vector<8x512xf32> to vector<8x512xbf16>
    %c0_18 = arith.constant 0 : index
    %c0_19 = arith.constant 0 : index
    %30 = vector.load %arg8[%c0_18, %c0_19] : memref<512x512xbf16, #tpu.memory_space<vmem>>, vector<512x512xbf16>
    %cst_20 = arith.constant dense<0.000000e+00> : vector<8x512xf32>
    %31 = tpu.matmul %29, %30, %cst_20 {dimension_numbers = #tpu.dot_dimension_numbers<[1], [0], [0], [1], [0, 0, 1, 1], [], []>} : vector<8x512xbf16>, vector<512x512xbf16>, vector<8x512xf32> -> vector<8x512xf32>
    %c0_21 = arith.constant 0 : index
    %c0_22 = arith.constant 0 : index
    %32 = vector.load %arg9[%c0_21, %c0_22] : memref<1x512xf32, #tpu.memory_space<vmem>>, vector<1x512xf32>
    %33 = vector.broadcast %32 : vector<1x512xf32> to vector<8x512xf32>
    %34 = arith.addf %31, %33 : vector<8x512xf32>
    %cst_23 = arith.constant 0.000000e+00 : f32
    %35 = vector.broadcast %cst_23 : f32 to vector<8x512xf32>
    %36 = arith.cmpf ogt, %34, %35 : vector<8x512xf32>
    %cst_24 = arith.constant 2.000000e-01 : f32
    %37 = vector.broadcast %cst_24 : f32 to vector<8x512xf32>
    %38 = arith.mulf %37, %34 : vector<8x512xf32>
    %39 = arith.select %36, %34, %38 : vector<8x512xi1>, vector<8x512xf32>
    %c0_25 = arith.constant 0 : index
    %c0_26 = arith.constant 0 : index
    %40 = vector.load %arg10[%c0_25, %c0_26] : memref<1x512xf32, #tpu.memory_space<vmem>>, vector<1x512xf32>
    %41 = vector.broadcast %40 : vector<1x512xf32> to vector<8x512xf32>
    %42 = arith.mulf %39, %41 : vector<8x512xf32>
    %cst_27 = arith.constant dense<0.000000e+00> : vector<8xf32>
    %43 = vector.multi_reduction <add>, %42, %cst_27 [1] : vector<8x512xf32> to vector<8xf32>
    %44 = vector.shape_cast %43 : vector<8xf32> to vector<8x1xf32>
    %c0_28 = arith.constant 0 : index
    %c0_29 = arith.constant 0 : index
    %45 = vector.load %arg11[%c0_28, %c0_29] : memref<1x1xf32, #tpu.memory_space<vmem>>, vector<1x1xf32>
    %46 = vector.broadcast %45 : vector<1x1xf32> to vector<8x1xf32>
    %47 = arith.addf %44, %46 : vector<8x1xf32>
    %c0_30 = arith.constant 0 : index
    %c0_31 = arith.constant 0 : index
    %48 = vector.load %arg12[%c0_30, %c0_31] : memref<8x1xf32, #tpu.memory_space<vmem>>, vector<8x1xf32>
    tpu.vector_store %arg12[%c0_30, %c0_31], %47 {strides = array<i32>} : memref<8x1xf32, #tpu.memory_space<vmem>>, vector<8x1xf32>,
    return
  }
  func.func @transform_0(%arg0: i32) -> (i32, i32) {
    %c0_i32 = arith.constant 0 : i32
    %c0_i32_0 = arith.constant 0 : i32
    return %arg0, %c0_i32 : i32, i32
  }
  func.func @transform_1(%arg0: i32) -> (i32, i32) {
    %c0_i32 = arith.constant 0 : i32
    %c0_i32_0 = arith.constant 0 : i32
    return %arg0, %c0_i32 : i32, i32
  }
  func.func @transform_2(%arg0: i32) -> (i32, i32) {
    %c0_i32 = arith.constant 0 : i32
    %c0_i32_0 = arith.constant 0 : i32
    %c0_i32_1 = arith.constant 0 : i32
    return %c0_i32, %c0_i32_0 : i32, i32
  }
  func.func @transform_3(%arg0: i32) -> (i32, i32) {
    %c0_i32 = arith.constant 0 : i32
    %c0_i32_0 = arith.constant 0 : i32
    %c0_i32_1 = arith.constant 0 : i32
    return %c0_i32, %c0_i32_0 : i32, i32
  }
  func.func @transform_4(%arg0: i32) -> (i32, i32) {
    %c0_i32 = arith.constant 0 : i32
    %c0_i32_0 = arith.constant 0 : i32
    %c0_i32_1 = arith.constant 0 : i32
    return %c0_i32, %c0_i32_0 : i32, i32
  }
  func.func @transform_5(%arg0: i32) -> (i32, i32) {
    %c0_i32 = arith.constant 0 : i32
    %c0_i32_0 = arith.constant 0 : i32
    %c0_i32_1 = arith.constant 0 : i32
    return %c0_i32, %c0_i32_0 : i32, i32
  }
  func.func @transform_6(%arg0: i32) -> (i32, i32) {
    %c0_i32 = arith.constant 0 : i32
    %c0_i32_0 = arith.constant 0 : i32
    %c0_i32_1 = arith.constant 0 : i32
    return %c0_i32, %c0_i32_0 : i32, i32
  }
  func.func @transform_7(%arg0: i32) -> (i32, i32) {
    %c0_i32 = arith.constant 0 : i32
    %c0_i32_0 = arith.constant 0 : i32
    %c0_i32_1 = arith.constant 0 : i32
    return %c0_i32, %c0_i32_0 : i32, i32
  }
  func.func @transform_8(%arg0: i32) -> (i32, i32) {
    %c0_i32 = arith.constant 0 : i32
    %c0_i32_0 = arith.constant 0 : i32
    %c0_i32_1 = arith.constant 0 : i32
    return %c0_i32, %c0_i32_0 : i32, i32
  }
  func.func @transform_9(%arg0: i32) -> (i32, i32) {
    %c0_i32 = arith.constant 0 : i32
    %c0_i32_0 = arith.constant 0 : i32
    %c0_i32_1 = arith.constant 0 : i32
    return %c0_i32, %c0_i32_0 : i32, i32
  }
  func.func @transform_10(%arg0: i32) -> (i32, i32) {
    %c0_i32 = arith.constant 0 : i32
    %c0_i32_0 = arith.constant 0 : i32
    %c0_i32_1 = arith.constant 0 : i32
    return %c0_i32, %c0_i32_0 : i32, i32
  }
  func.func @transform_11(%arg0: i32) -> (i32, i32) {
    %c0_i32 = arith.constant 0 : i32
    %c0_i32_0 = arith.constant 0 : i32
    return %arg0, %c0_i32 : i32, i32
  }
}

</mosaic_0001>

<llo_original>
// kernel: discriminator_forward.1
$region0: #{discriminator_forward.1}
  #allocation0 [shape = 'u32[]', space=smem, size = 0x4, offset = 0x4, fixed_abs, tag = 'smem constant byte address 0x4 - core index']
  #allocation1 [shape = 'u32[144,128]{1,0:T(1,128)}', space=vmem, size = 0x12000, scoped, tag = 'internal scratch']
  #allocation2 [shape = 'f32[1,1]{1,0:T(1,128)S(1)}', space=vmem, size = 0x200, scoped, tag = 'scoped memory for discriminator_forward.1']
  %s0 = inlined_call_operand.vmem [shape: f32[8,1], index: 0, kind: input, shape index: {}]
  %s1 = inlined_call_operand.vmem [shape: f32[8,784], index: 1, kind: input, shape index: {}]
  %s2 = inlined_call_operand.hbm [shape: bf16[784,512], index: 2, kind: input, shape index: {}]
  %s3 = inlined_call_operand.vmem [shape: f32[1,512], index: 3, kind: input, shape index: {}]
  %s4 = inlined_call_operand.vmem [shape: f32[1,512], index: 4, kind: input, shape index: {}]
  %s5 = inlined_call_operand.hbm [shape: bf16[512,512], index: 5, kind: input, shape index: {}]
  %s6 = inlined_call_operand.vmem [shape: f32[1,512], index: 6, kind: input, shape index: {}]
  %s7 = inlined_call_operand.hbm [shape: bf16[512,512], index: 7, kind: input, shape index: {}]
  %s8 = inlined_call_operand.vmem [shape: f32[1,512], index: 8, kind: input, shape index: {}]
  %s9 = inlined_call_operand.vmem [shape: f32[1,512], index: 9, kind: input, shape index: {}]
  %s10 = inlined_call_operand.<no memory space> [shape: f32[1,1], index: 10, kind: input, shape index: {}]
  %s11 = inlined_call_operand.vmem [shape: f32[8,1], index: 11, kind: output, shape index: {}]
  %s12 = sld [smem:[#allocation0]]
  $region66: #{discriminator_forward.1} parent=0
    _
  %s14 = ssub.s32 1, %s12
  %s15 = scalar_select 0, %s14, %s12
  %v16 = vstv %s10
  %17 = vst [vmem:[#allocation2] sm:$0x1] %v16
  $region1: #{discriminator_forward.1} parent=0
    #allocation3 [shape = 'u8[802816]{0}', space=vmem, size = 0xc4000, scoped, tag = 'input window, operand 2, single buffered']
    #allocation4 [shape = 's32[1]{0}', space=sflag, size = 0x4, scoped, tag = 'scoped memory for discriminator_forward.1']
    #allocation5 [shape = 'u8[524288]{0}', space=vmem, size = 0x80000, scoped, tag = 'input window, operand 5, single buffered']
    #allocation6 [shape = 's32[1]{0}', space=sflag, size = 0x4, scoped, tag = 'scoped memory for discriminator_forward.1']
    #allocation7 [shape = 'u8[524288]{0}', space=vmem, size = 0x80000, scoped, tag = 'input window, operand 7, single buffered']
    %18 = vsyncpa [#allocation4], 0
    %19 = vsyncpa [#allocation6], 0
    // Predicated region
    $region2: #{discriminator_forward.1} parent=1 // pred_check
      _
    $region3: #{discriminator_forward.1} parent=1 // pred_check_branch
      %21 = sbr.rel (0) target = $region5
    $region4: #{discriminator_forward.1} parent=1 // pred_region
      _
    $region5: #{discriminator_forward.1} parent=1 // pred_fallthru
      _
    // Predicated region
    $region6: #{discriminator_forward.1} parent=1 // pred_check
      _
    $region7: #{discriminator_forward.1} parent=1 // pred_check_branch
      %23 = sbr.rel (0) target = $region9
    $region8: #{discriminator_forward.1} parent=1 // pred_region
      _
    $region9: #{discriminator_forward.1} parent=1 // pred_fallthru
      _
    // Predicated region
    $region10: #{discriminator_forward.1} parent=1 // pred_check
      _
    $region11: #{discriminator_forward.1} parent=1 // pred_check_branch
      %25 = sbr.rel (0) target = $region13
    $region12: #{discriminator_forward.1} parent=1 // pred_region
      %s27 = ssub.s32 25088, 25088
      %28 = vsyncadd [#allocation4], %s27
      %s29 = sshll.u32 [#allocation3], 4
      %s30 = int_to_ptr.vmem [resolvable:$true] %s29
      %35 = dma.hbm_to_vmem [thread:$0]  %s2, 25088, %s30, [#allocation4], 256, 256, 16
    $region13: #{discriminator_forward.1} parent=1 // pred_fallthru
      _
    // Predicated region
    $region14: #{discriminator_forward.1} parent=1 // pred_check
      _
    $region15: #{discriminator_forward.1} parent=1 // pred_check_branch
      %37 = sbr.rel (0) target = $region17
    $region16: #{discriminator_forward.1} parent=1 // pred_region
      _
    $region17: #{discriminator_forward.1} parent=1 // pred_fallthru
      _
    // Predicated region
    $region18: #{discriminator_forward.1} parent=1 // pred_check
      _
    $region19: #{discriminator_forward.1} parent=1 // pred_check_branch
      %39 = sbr.rel (0) target = $region21
    $region20: #{discriminator_forward.1} parent=1 // pred_region
      _
    $region21: #{discriminator_forward.1} parent=1 // pred_fallthru
      _
    // Predicated region
    $region22: #{discriminator_forward.1} parent=1 // pred_check
      _
    $region23: #{discriminator_forward.1} parent=1 // pred_check_branch
      %41 = sbr.rel (0) target = $region25
    $region24: #{discriminator_forward.1} parent=1 // pred_region
      %s43 = ssub.s32 16384, 16384
      %44 = vsyncadd [#allocation6], %s43
      %s45 = sshll.u32 [#allocation5], 4
      %s46 = int_to_ptr.vmem [resolvable:$true] %s45
      %51 = dma.hbm_to_vmem [thread:$0]  %s5, 16384, %s46, [#allocation6], 256, 256, 16
    $region25: #{discriminator_forward.1} parent=1 // pred_fallthru
      _
    // Predicated region
    $region26: #{discriminator_forward.1} parent=1 // pred_check
      _
    $region27: #{discriminator_forward.1} parent=1 // pred_check_branch
      %53 = sbr.rel (0) target = $region29
    $region28: #{discriminator_forward.1} parent=1 // pred_region
      _
    $region29: #{discriminator_forward.1} parent=1 // pred_fallthru
      _
    // Predicated region
    $region30: #{discriminator_forward.1} parent=1 // pred_check
      _
    $region31: #{discriminator_forward.1} parent=1 // pred_check_branch
      %55 = sbr.rel (0) target = $region33
    $region32: #{discriminator_forward.1} parent=1 // pred_region
      %s57 = ssub.s32 16384, 16384
      %58 = vsyncadd [#allocation6], %s57
      %s59 = sshll.u32 [#allocation7], 4
      %s60 = int_to_ptr.vmem [resolvable:$true] %s59
      %65 = dma.hbm_to_vmem [thread:$0]  %s7, 16384, %s60, [#allocation6], 256, 256, 16
    $region33: #{discriminator_forward.1} parent=1 // pred_fallthru
      _
    // Predicated region
    $region34: #{discriminator_forward.1} parent=1 // pred_check
      _
    $region35: #{discriminator_forward.1} parent=1 // pred_check_branch
      %67 = sbr.rel (0) target = $region37
    $region36: #{discriminator_forward.1} parent=1 // pred_region
      _
    $region37: #{discriminator_forward.1} parent=1 // pred_fallthru
      _
    // Predicated region
    $region38: #{discriminator_forward.1} parent=1 // pred_check
      _
    $region39: #{discriminator_forward.1} parent=1 // pred_check_branch
      %69 = sbr.rel (0) target = $region41
    $region40: #{discriminator_forward.1} parent=1 // pred_region
      _
    $region41: #{discriminator_forward.1} parent=1 // pred_fallthru
      _
    // Predicated region
    $region42: #{discriminator_forward.1} parent=1 // pred_check
      _
    $region43: #{discriminator_forward.1} parent=1 // pred_check_branch
      %71 = sbr.rel (0) target = $region45
    $region44: #{discriminator_forward.1} parent=1 // pred_region
      _
    $region45: #{discriminator_forward.1} parent=1 // pred_fallthru
      _
    // Predicated region
    $region46: #{discriminator_forward.1} parent=1 // pred_check
      _
    $region47: #{discriminator_forward.1} parent=1 // pred_check_branch
      %73 = sbr.rel (0) target = $region49
    $region48: #{discriminator_forward.1} parent=1 // pred_region
      %74 = dma.done [#allocation4], 25088
    $region49: #{discriminator_forward.1} parent=1 // pred_fallthru
      _
    // Predicated region
    $region50: #{discriminator_forward.1} parent=1 // pred_check
      _
    $region51: #{discriminator_forward.1} parent=1 // pred_check_branch
      %76 = sbr.rel (0) target = $region53
    $region52: #{discriminator_forward.1} parent=1 // pred_region
      %77 = dma.done [#allocation6], 16384
    $region53: #{discriminator_forward.1} parent=1 // pred_fallthru
      _
    // Predicated region
    $region54: #{discriminator_forward.1} parent=1 // pred_check
      _
    $region55: #{discriminator_forward.1} parent=1 // pred_check_branch
      %79 = sbr.rel (0) target = $region57
    $region56: #{discriminator_forward.1} parent=1 // pred_region
      %80 = dma.done [#allocation6], 16384
    $region57: #{discriminator_forward.1} parent=1 // pred_fallthru
      _
    %v82 = vld [vmem:[%s1] sm:$0xff]
    %v83 = vld [vmem:[%s1 + $0x8] sm:$0xff]
    %v84 = vld [vmem:[%s1 + $0x10] sm:$0xff]
    %v85 = vld [vmem:[%s1 + $0x18] sm:$0xff]
    %v86 = vld [vmem:[%s1 + $0x20] sm:$0xff]
    %v87 = vld [vmem:[%s1 + $0x28] sm:$0xff]
    %v88 = vld [vmem:[%s1 + $0x30] sm:$0xff]
    %v89 = vpack.c.bf16 %v82, %v82
    %v90 = vpack.c.bf16 %v83, %v83
    %v91 = vpack.c.bf16 %v84, %v84
    %v92 = vpack.c.bf16 %v85, %v85
    %v93 = vpack.c.bf16 %v86, %v86
    %v94 = vpack.c.bf16 %v87, %v87
    %v95 = vpack.c.bf16 %v88, %v88
    %v96 = vld [vmem:[%s0] sm:$0xff]
    %v97 = vld [vmem:[#allocation3] sm:$0xff]
    %v98 = vld [vmem:[#allocation3 + $0x8] sm:$0xff]
    %v99 = vld [vmem:[#allocation3 + $0x10] sm:$0xff]
    %v100 = vld [vmem:[#allocation3 + $0x18] sm:$0xff]
    %v101 = vld [vmem:[#allocation3 + $0x20] sm:$0xff]
    %v102 = vld [vmem:[#allocation3 + $0x28] sm:$0xff]
    %v103 = vld [vmem:[#allocation3 + $0x30] sm:$0xff]
    %v104 = vld [vmem:[#allocation3 + $0x38] sm:$0xff]
    %v105 = vld [vmem:[#allocation3 + $0x40] sm:$0xff]
    %v106 = vld [vmem:[#allocation3 + $0x48] sm:$0xff]
    %v107 = vld [vmem:[#allocation3 + $0x50] sm:$0xff]
    %v108 = vld [vmem:[#allocation3 + $0x58] sm:$0xff]
    %v109 = vld [vmem:[#allocation3 + $0x60] sm:$0xff]
    %v110 = vld [vmem:[#allocation3 + $0x68] sm:$0xff]
    %v111 = vld [vmem:[#allocation3 + $0x70] sm:$0xff]
    %v112 = vld [vmem:[#allocation3 + $0x78] sm:$0xff]
    %v113 = vld [vmem:[#allocation3 + $0x80] sm:$0xff]
    %v114 = vld [vmem:[#allocation3 + $0x88] sm:$0xff]
    %v115 = vld [vmem:[#allocation3 + $0x90] sm:$0xff]
    %v116 = vld [vmem:[#allocation3 + $0x98] sm:$0xff]
    %v117 = vld [vmem:[#allocation3 + $0xa0] sm:$0xff]
    %v118 = vld [vmem:[#allocation3 + $0xa8] sm:$0xff]
    %v119 = vld [vmem:[#allocation3 + $0xb0] sm:$0xff]
    %v120 = vld [vmem:[#allocation3 + $0xb8] sm:$0xff]
    %v121 = vld [vmem:[#allocation3 + $0xc0] sm:$0xff]
    %v122 = vld [vmem:[#allocation3 + $0xc8] sm:$0xff]
    %v123 = vld [vmem:[#allocation3 + $0xd0] sm:$0xff]
    %v124 = vld [vmem:[#allocation3 + $0xd8] sm:$0xff]
    %v125 = vld [vmem:[#allocation3 + $0xe0] sm:$0xff]
    %v126 = vld [vmem:[#allocation3 + $0xe8] sm:$0xff]
    %v127 = vld [vmem:[#allocation3 + $0xf0] sm:$0xff]
    %v128 = vld [vmem:[#allocation3 + $0xf8] sm:$0xff]
    %v129 = vld [vmem:[#allocation3 + $0x100] sm:$0xff]
    %v130 = vld [vmem:[#allocation3 + $0x108] sm:$0xff]
    %v131 = vld [vmem:[#allocation3 + $0x110] sm:$0xff]
    %v132 = vld [vmem:[#allocation3 + $0x118] sm:$0xff]
    %v133 = vld [vmem:[#allocation3 + $0x120] sm:$0xff]
    %v134 = vld [vmem:[#allocation3 + $0x128] sm:$0xff]
    %v135 = vld [vmem:[#allocation3 + $0x130] sm:$0xff]
    %v136 = vld [vmem:[#allocation3 + $0x138] sm:$0xff]
    %v137 = vld [vmem:[#allocation3 + $0x140] sm:$0xff]
    %v138 = vld [vmem:[#allocation3 + $0x148] sm:$0xff]
    %v139 = vld [vmem:[#allocation3 + $0x150] sm:$0xff]
    %v140 = vld [vmem:[#allocation3 + $0x158] sm:$0xff]
    %v141 = vld [vmem:[#allocation3 + $0x160] sm:$0xff]
    %v142 = vld [vmem:[#allocation3 + $0x168] sm:$0xff]
    %v143 = vld [vmem:[#allocation3 + $0x170] sm:$0xff]
    %v144 = vld [vmem:[#allocation3 + $0x178] sm:$0xff]
    %v145 = vld [vmem:[#allocation3 + $0x180] sm:$0xff]
    %v146 = vld [vmem:[#allocation3 + $0x188] sm:$0xff]
    %v147 = vld [vmem:[#allocation3 + $0x190] sm:$0xff]
    %v148 = vld [vmem:[#allocation3 + $0x198] sm:$0xff]
    %v149 = vld [vmem:[#allocation3 + $0x1a0] sm:$0xff]
    %v150 = vld [vmem:[#allocation3 + $0x1a8] sm:$0xff]
    %v151 = vld [vmem:[#allocation3 + $0x1b0] sm:$0xff]
    %v152 = vld [vmem:[#allocation3 + $0x1b8] sm:$0xff]
    %v153 = vld [vmem:[#allocation3 + $0x1c0] sm:$0xff]
    %v154 = vld [vmem:[#allocation3 + $0x1c8] sm:$0xff]
    %v155 = vld [vmem:[#allocation3 + $0x1d0] sm:$0xff]
    %v156 = vld [vmem:[#allocation3 + $0x1d8] sm:$0xff]
    %v157 = vld [vmem:[#allocation3 + $0x1e0] sm:$0xff]
    %v158 = vld [vmem:[#allocation3 + $0x1e8] sm:$0xff]
    %v159 = vld [vmem:[#allocation3 + $0x1f0] sm:$0xff]
    %v160 = vld [vmem:[#allocation3 + $0x1f8] sm:$0xff]
    %v161 = vld [vmem:[#allocation3 + $0x200] sm:$0xff]
    %v162 = vld [vmem:[#allocation3 + $0x208] sm:$0xff]
    %v163 = vld [vmem:[#allocation3 + $0x210] sm:$0xff]
    %v164 = vld [vmem:[#allocation3 + $0x218] sm:$0xff]
    %v165 = vld [vmem:[#allocation3 + $0x220] sm:$0xff]
    %v166 = vld [vmem:[#allocation3 + $0x228] sm:$0xff]
    %v167 = vld [vmem:[#allocation3 + $0x230] sm:$0xff]
    %v168 = vld [vmem:[#allocation3 + $0x238] sm:$0xff]
    %v169 = vld [vmem:[#allocation3 + $0x240] sm:$0xff]
    %v170 = vld [vmem:[#allocation3 + $0x248] sm:$0xff]
    %v171 = vld [vmem:[#allocation3 + $0x250] sm:$0xff]
    %v172 = vld [vmem:[#allocation3 + $0x258] sm:$0xff]
    %v173 = vld [vmem:[#allocation3 + $0x260] sm:$0xff]
    %v174 = vld [vmem:[#allocation3 + $0x268] sm:$0xff]
    %v175 = vld [vmem:[#allocation3 + $0x270] sm:$0xff]
    %v176 = vld [vmem:[#allocation3 + $0x278] sm:$0xff]
    %v177 = vld [vmem:[#allocation3 + $0x280] sm:$0xff]
    %v178 = vld [vmem:[#allocation3 + $0x288] sm:$0xff]
    %v179 = vld [vmem:[#allocation3 + $0x290] sm:$0xff]
    %v180 = vld [vmem:[#allocation3 + $0x298] sm:$0xff]
    %v181 = vld [vmem:[#allocation3 + $0x2a0] sm:$0xff]
    %v182 = vld [vmem:[#allocation3 + $0x2a8] sm:$0xff]
    %v183 = vld [vmem:[#allocation3 + $0x2b0] sm:$0xff]
    %v184 = vld [vmem:[#allocation3 + $0x2b8] sm:$0xff]
    %v185 = vld [vmem:[#allocation3 + $0x2c0] sm:$0xff]
    %v186 = vld [vmem:[#allocation3 + $0x2c8] sm:$0xff]
    %v187 = vld [vmem:[#allocation3 + $0x2d0] sm:$0xff]
    %v188 = vld [vmem:[#allocation3 + $0x2d8] sm:$0xff]
    %v189 = vld [vmem:[#allocation3 + $0x2e0] sm:$0xff]
    %v190 = vld [vmem:[#allocation3 + $0x2e8] sm:$0xff]
    %v191 = vld [vmem:[#allocation3 + $0x2f0] sm:$0xff]
    %v192 = vld [vmem:[#allocation3 + $0x2f8] sm:$0xff]
    %v193 = vld [vmem:[#allocation3 + $0x300] sm:$0xff]
    %v194 = vld [vmem:[#allocation3 + $0x308] sm:$0xff]
    %v195 = vld [vmem:[#allocation3 + $0x310] sm:$0xff]
    %v196 = vld [vmem:[#allocation3 + $0x318] sm:$0xff]
    %v197 = vld [vmem:[#allocation3 + $0x320] sm:$0xff]
    %v198 = vld [vmem:[#allocation3 + $0x328] sm:$0xff]
    %v199 = vld [vmem:[#allocation3 + $0x330] sm:$0xff]
    %v200 = vld [vmem:[#allocation3 + $0x338] sm:$0xff]
    %v201 = vld [vmem:[#allocation3 + $0x340] sm:$0xff]
    %v202 = vld [vmem:[#allocation3 + $0x348] sm:$0xff]
    %v203 = vld [vmem:[#allocation3 + $0x350] sm:$0xff]
    %v204 = vld [vmem:[#allocation3 + $0x358] sm:$0xff]
    %v205 = vld [vmem:[#allocation3 + $0x360] sm:$0xff]
    %v206 = vld [vmem:[#allocation3 + $0x368] sm:$0xff]
    %v207 = vld [vmem:[#allocation3 + $0x370] sm:$0xff]
    %v208 = vld [vmem:[#allocation3 + $0x378] sm:$0xff]
    %v209 = vld [vmem:[#allocation3 + $0x380] sm:$0xff]
    %v210 = vld [vmem:[#allocation3 + $0x388] sm:$0xff]
    %v211 = vld [vmem:[#allocation3 + $0x390] sm:$0xff]
    %v212 = vld [vmem:[#allocation3 + $0x398] sm:$0xff]
    %v213 = vld [vmem:[#allocation3 + $0x3a0] sm:$0xff]
    %v214 = vld [vmem:[#allocation3 + $0x3a8] sm:$0xff]
    %v215 = vld [vmem:[#allocation3 + $0x3b0] sm:$0xff]
    %v216 = vld [vmem:[#allocation3 + $0x3b8] sm:$0xff]
    %v217 = vld [vmem:[#allocation3 + $0x3c0] sm:$0xff]
    %v218 = vld [vmem:[#allocation3 + $0x3c8] sm:$0xff]
    %v219 = vld [vmem:[#allocation3 + $0x3d0] sm:$0xff]
    %v220 = vld [vmem:[#allocation3 + $0x3d8] sm:$0xff]
    %v221 = vld [vmem:[#allocation3 + $0x3e0] sm:$0xff]
    %v222 = vld [vmem:[#allocation3 + $0x3e8] sm:$0xff]
    %v223 = vld [vmem:[#allocation3 + $0x3f0] sm:$0xff]
    %v224 = vld [vmem:[#allocation3 + $0x3f8] sm:$0xff]
    %v225 = vld [vmem:[#allocation3 + $0x400] sm:$0xff]
    %v226 = vld [vmem:[#allocation3 + $0x408] sm:$0xff]
    %v227 = vld [vmem:[#allocation3 + $0x410] sm:$0xff]
    %v228 = vld [vmem:[#allocation3 + $0x418] sm:$0xff]
    %v229 = vld [vmem:[#allocation3 + $0x420] sm:$0xff]
    %v230 = vld [vmem:[#allocation3 + $0x428] sm:$0xff]
    %v231 = vld [vmem:[#allocation3 + $0x430] sm:$0xff]
    %v232 = vld [vmem:[#allocation3 + $0x438] sm:$0xff]
    %v233 = vld [vmem:[#allocation3 + $0x440] sm:$0xff]
    %v234 = vld [vmem:[#allocation3 + $0x448] sm:$0xff]
    %v235 = vld [vmem:[#allocation3 + $0x450] sm:$0xff]
    %v236 = vld [vmem:[#allocation3 + $0x458] sm:$0xff]
    %v237 = vld [vmem:[#allocation3 + $0x460] sm:$0xff]
    %v238 = vld [vmem:[#allocation3 + $0x468] sm:$0xff]
    %v239 = vld [vmem:[#allocation3 + $0x470] sm:$0xff]
    %v240 = vld [vmem:[#allocation3 + $0x478] sm:$0xff]
    %v241 = vld [vmem:[#allocation3 + $0x480] sm:$0xff]
    %v242 = vld [vmem:[#allocation3 + $0x488] sm:$0xff]
    %v243 = vld [vmem:[#allocation3 + $0x490] sm:$0xff]
    %v244 = vld [vmem:[#allocation3 + $0x498] sm:$0xff]
    %v245 = vld [vmem:[#allocation3 + $0x4a0] sm:$0xff]
    %v246 = vld [vmem:[#allocation3 + $0x4a8] sm:$0xff]
    %v247 = vld [vmem:[#allocation3 + $0x4b0] sm:$0xff]
    %v248 = vld [vmem:[#allocation3 + $0x4b8] sm:$0xff]
    %v249 = vld [vmem:[#allocation3 + $0x4c0] sm:$0xff]
    %v250 = vld [vmem:[#allocation3 + $0x4c8] sm:$0xff]
    %v251 = vld [vmem:[#allocation3 + $0x4d0] sm:$0xff]
    %v252 = vld [vmem:[#allocation3 + $0x4d8] sm:$0xff]
    %v253 = vld [vmem:[#allocation3 + $0x4e0] sm:$0xff]
    %v254 = vld [vmem:[#allocation3 + $0x4e8] sm:$0xff]
    %v255 = vld [vmem:[#allocation3 + $0x4f0] sm:$0xff]
    %v256 = vld [vmem:[#allocation3 + $0x4f8] sm:$0xff]
    %v257 = vld [vmem:[#allocation3 + $0x500] sm:$0xff]
    %v258 = vld [vmem:[#allocation3 + $0x508] sm:$0xff]
    %v259 = vld [vmem:[#allocation3 + $0x510] sm:$0xff]
    %v260 = vld [vmem:[#allocation3 + $0x518] sm:$0xff]
    %v261 = vld [vmem:[#allocation3 + $0x520] sm:$0xff]
    %v262 = vld [vmem:[#allocation3 + $0x528] sm:$0xff]
    %v263 = vld [vmem:[#allocation3 + $0x530] sm:$0xff]
    %v264 = vld [vmem:[#allocation3 + $0x538] sm:$0xff]
    %v265 = vld [vmem:[#allocation3 + $0x540] sm:$0xff]
    %v266 = vld [vmem:[#allocation3 + $0x548] sm:$0xff]
    %v267 = vld [vmem:[#allocation3 + $0x550] sm:$0xff]
    %v268 = vld [vmem:[#allocation3 + $0x558] sm:$0xff]
    %v269 = vld [vmem:[#allocation3 + $0x560] sm:$0xff]
    %v270 = vld [vmem:[#allocation3 + $0x568] sm:$0xff]
    %v271 = vld [vmem:[#allocation3 + $0x570] sm:$0xff]
    %v272 = vld [vmem:[#allocation3 + $0x578] sm:$0xff]
    %v273 = vld [vmem:[#allocation3 + $0x580] sm:$0xff]
    %v274 = vld [vmem:[#allocation3 + $0x588] sm:$0xff]
    %v275 = vld [vmem:[#allocation3 + $0x590] sm:$0xff]
    %v276 = vld [vmem:[#allocation3 + $0x598] sm:$0xff]
    %v277 = vld [vmem:[#allocation3 + $0x5a0] sm:$0xff]
    %v278 = vld [vmem:[#allocation3 + $0x5a8] sm:$0xff]
    %v279 = vld [vmem:[#allocation3 + $0x5b0] sm:$0xff]
    %v280 = vld [vmem:[#allocation3 + $0x5b8] sm:$0xff]
    %v281 = vld [vmem:[#allocation3 + $0x5c0] sm:$0xff]
    %v282 = vld [vmem:[#allocation3 + $0x5c8] sm:$0xff]
    %v283 = vld [vmem:[#allocation3 + $0x5d0] sm:$0xff]
    %v284 = vld [vmem:[#allocation3 + $0x5d8] sm:$0xff]
    %v285 = vld [vmem:[#allocation3 + $0x5e0] sm:$0xff]
    %v286 = vld [vmem:[#allocation3 + $0x5e8] sm:$0xff]
    %v287 = vld [vmem:[#allocation3 + $0x5f0] sm:$0xff]
    %v288 = vld [vmem:[#allocation3 + $0x5f8] sm:$0xff]
    %v289 = vld [vmem:[#allocation3 + $0x600] sm:$0xff]
    %v290 = vld [vmem:[#allocation3 + $0x608] sm:$0xff]
    %v291 = vld [vmem:[#allocation3 + $0x610] sm:$0xff]
    %v292 = vld [vmem:[#allocation3 + $0x618] sm:$0xff]
    %v293 = vld [vmem:[%s3] sm:$0xf]
    %295 = vset.pattern.permute.xlu0 0
    %296 = vperm.xlu0 %295, %v96
    %v297 = vpop.permute.xlu0 %296
    %v300 = vlaneseq
    %v301 = vshrl.u32 %v300, 7
    %v302 = vsub.s32 0, %v301
    %v303 = vrot.slane %v293, %v302
    %v304 = vlaneseq
    %v305 = vshrl.u32 %v304, 7
    %v306 = vsub.s32 1, %v305
    %v307 = vrot.slane %v293, %v306
    %v308 = vlaneseq
    %v309 = vshrl.u32 %v308, 7
    %v310 = vsub.s32 2, %v309
    %v311 = vrot.slane %v293, %v310
    %v312 = vlaneseq
    %v313 = vshrl.u32 %v312, 7
    %v314 = vsub.s32 3, %v313
    %v315 = vrot.slane %v293, %v314
    %v320 = vmul.f32 %v297, %v303
    %v321 = vmul.f32 %v297, %v307
    %v322 = vmul.f32 %v297, %v311
    %v323 = vmul.f32 %v297, %v315
    %v520 = vunpack.c.l.b16 %v97
    %v521 = vunpack.c.h.b16 %v97
    %v522 = vunpack.c.l.b16 %v98
    %v523 = vunpack.c.h.b16 %v98
    %v524 = vunpack.c.l.b16 %v99
    %v525 = vunpack.c.h.b16 %v99
    %v526 = vunpack.c.l.b16 %v100
    %v527 = vunpack.c.h.b16 %v100
    %v528 = vunpack.c.l.b16 %v101
    %v529 = vunpack.c.h.b16 %v101
    %v530 = vunpack.c.l.b16 %v102
    %v531 = vunpack.c.h.b16 %v102
    %v532 = vunpack.c.l.b16 %v103
    %v533 = vunpack.c.h.b16 %v103
    %v534 = vunpack.c.l.b16 %v104
    %v535 = vunpack.c.h.b16 %v104
    %v536 = vunpack.c.l.b16 %v105
    %v537 = vunpack.c.h.b16 %v105
    %v538 = vunpack.c.l.b16 %v106
    %v539 = vunpack.c.h.b16 %v106
    %v540 = vunpack.c.l.b16 %v107
    %v541 = vunpack.c.h.b16 %v107
    %v542 = vunpack.c.l.b16 %v108
    %v543 = vunpack.c.h.b16 %v108
    %v544 = vunpack.c.l.b16 %v109
    %v545 = vunpack.c.h.b16 %v109
    %v546 = vunpack.c.l.b16 %v110
    %v547 = vunpack.c.h.b16 %v110
    %v548 = vunpack.c.l.b16 %v111
    %v549 = vunpack.c.h.b16 %v111
    %v550 = vunpack.c.l.b16 %v112
    %v551 = vunpack.c.h.b16 %v112
    %v552 = vunpack.c.l.b16 %v113
    %v553 = vunpack.c.h.b16 %v113
    %v554 = vunpack.c.l.b16 %v114
    %v555 = vunpack.c.h.b16 %v114
    %v556 = vunpack.c.l.b16 %v115
    %v557 = vunpack.c.h.b16 %v115
    %v558 = vunpack.c.l.b16 %v116
    %v559 = vunpack.c.h.b16 %v116
    %v560 = vunpack.c.l.b16 %v117
    %v561 = vunpack.c.h.b16 %v117
    %v562 = vunpack.c.l.b16 %v118
    %v563 = vunpack.c.h.b16 %v118
    %v564 = vunpack.c.l.b16 %v119
    %v565 = vunpack.c.h.b16 %v119
    %v566 = vunpack.c.l.b16 %v120
    %v567 = vunpack.c.h.b16 %v120
    %v568 = vunpack.c.l.b16 %v121
    %v569 = vunpack.c.h.b16 %v121
    %v570 = vunpack.c.l.b16 %v122
    %v571 = vunpack.c.h.b16 %v122
    %v572 = vunpack.c.l.b16 %v123
    %v573 = vunpack.c.h.b16 %v123
    %v574 = vunpack.c.l.b16 %v124
    %v575 = vunpack.c.h.b16 %v124
    %v576 = vunpack.c.l.b16 %v125
    %v577 = vunpack.c.h.b16 %v125
    %v578 = vunpack.c.l.b16 %v126
    %v579 = vunpack.c.h.b16 %v126
    %v580 = vunpack.c.l.b16 %v127
    %v581 = vunpack.c.h.b16 %v127
    %v582 = vunpack.c.l.b16 %v128
    %v583 = vunpack.c.h.b16 %v128
    %v584 = vunpack.c.l.b16 %v129
    %v585 = vunpack.c.h.b16 %v129
    %v586 = vunpack.c.l.b16 %v130
    %v587 = vunpack.c.h.b16 %v130
    %v588 = vunpack.c.l.b16 %v131
    %v589 = vunpack.c.h.b16 %v131
    %v590 = vunpack.c.l.b16 %v132
    %v591 = vunpack.c.h.b16 %v132
    %v592 = vunpack.c.l.b16 %v133
    %v593 = vunpack.c.h.b16 %v133
    %v594 = vunpack.c.l.b16 %v134
    %v595 = vunpack.c.h.b16 %v134
    %v596 = vunpack.c.l.b16 %v135
    %v597 = vunpack.c.h.b16 %v135
    %v598 = vunpack.c.l.b16 %v136
    %v599 = vunpack.c.h.b16 %v136
    %v600 = vunpack.c.l.b16 %v137
    %v601 = vunpack.c.h.b16 %v137
    %v602 = vunpack.c.l.b16 %v138
    %v603 = vunpack.c.h.b16 %v138
    %v604 = vunpack.c.l.b16 %v139
    %v605 = vunpack.c.h.b16 %v139
    %v606 = vunpack.c.l.b16 %v140
    %v607 = vunpack.c.h.b16 %v140
    %v608 = vunpack.c.l.b16 %v141
    %v609 = vunpack.c.h.b16 %v141
    %v610 = vunpack.c.l.b16 %v142
    %v611 = vunpack.c.h.b16 %v142
    %v612 = vunpack.c.l.b16 %v143
    %v613 = vunpack.c.h.b16 %v143
    %v614 = vunpack.c.l.b16 %v144
    %v615 = vunpack.c.h.b16 %v144
    %v616 = vunpack.c.l.b16 %v145
    %v617 = vunpack.c.h.b16 %v145
    %v618 = vunpack.c.l.b16 %v146
    %v619 = vunpack.c.h.b16 %v146
    %v620 = vunpack.c.l.b16 %v147
    %v621 = vunpack.c.h.b16 %v147
    %v622 = vunpack.c.l.b16 %v148
    %v623 = vunpack.c.h.b16 %v148
    %v624 = vunpack.c.l.b16 %v149
    %v625 = vunpack.c.h.b16 %v149
    %v626 = vunpack.c.l.b16 %v150
    %v627 = vunpack.c.h.b16 %v150
    %v628 = vunpack.c.l.b16 %v151
    %v629 = vunpack.c.h.b16 %v151
    %v630 = vunpack.c.l.b16 %v152
    %v631 = vunpack.c.h.b16 %v152
    %v632 = vunpack.c.l.b16 %v153
    %v633 = vunpack.c.h.b16 %v153
    %v634 = vunpack.c.l.b16 %v154
    %v635 = vunpack.c.h.b16 %v154
    %v636 = vunpack.c.l.b16 %v155
    %v637 = vunpack.c.h.b16 %v155
    %v638 = vunpack.c.l.b16 %v156
    %v639 = vunpack.c.h.b16 %v156
    %v640 = vunpack.c.l.b16 %v157
    %v641 = vunpack.c.h.b16 %v157
    %v642 = vunpack.c.l.b16 %v158
    %v643 = vunpack.c.h.b16 %v158
    %v644 = vunpack.c.l.b16 %v159
    %v645 = vunpack.c.h.b16 %v159
    %v646 = vunpack.c.l.b16 %v160
    %v647 = vunpack.c.h.b16 %v160
    %v648 = vunpack.c.l.b16 %v161
    %v649 = vunpack.c.h.b16 %v161
    %v650 = vunpack.c.l.b16 %v162
    %v651 = vunpack.c.h.b16 %v162
    %v652 = vunpack.c.l.b16 %v163
    %v653 = vunpack.c.h.b16 %v163
    %v654 = vunpack.c.l.b16 %v164
    %v655 = vunpack.c.h.b16 %v164
    %v656 = vunpack.c.l.b16 %v165
    %v657 = vunpack.c.h.b16 %v165
    %v658 = vunpack.c.l.b16 %v166
    %v659 = vunpack.c.h.b16 %v166
    %v660 = vunpack.c.l.b16 %v167
    %v661 = vunpack.c.h.b16 %v167
    %v662 = vunpack.c.l.b16 %v168
    %v663 = vunpack.c.h.b16 %v168
    %v664 = vunpack.c.l.b16 %v169
    %v665 = vunpack.c.h.b16 %v169
    %v666 = vunpack.c.l.b16 %v170
    %v667 = vunpack.c.h.b16 %v170
    %v668 = vunpack.c.l.b16 %v171
    %v669 = vunpack.c.h.b16 %v171
    %v670 = vunpack.c.l.b16 %v172
    %v671 = vunpack.c.h.b16 %v172
    %v672 = vunpack.c.l.b16 %v173
    %v673 = vunpack.c.h.b16 %v173
    %v674 = vunpack.c.l.b16 %v174
    %v675 = vunpack.c.h.b16 %v174
    %v676 = vunpack.c.l.b16 %v175
    %v677 = vunpack.c.h.b16 %v175
    %v678 = vunpack.c.l.b16 %v176
    %v679 = vunpack.c.h.b16 %v176
    %v680 = vunpack.c.l.b16 %v177
    %v681 = vunpack.c.h.b16 %v177
    %v682 = vunpack.c.l.b16 %v178
    %v683 = vunpack.c.h.b16 %v178
    %v684 = vunpack.c.l.b16 %v179
    %v685 = vunpack.c.h.b16 %v179
    %v686 = vunpack.c.l.b16 %v180
    %v687 = vunpack.c.h.b16 %v180
    %v688 = vunpack.c.l.b16 %v181
    %v689 = vunpack.c.h.b16 %v181
    %v690 = vunpack.c.l.b16 %v182
    %v691 = vunpack.c.h.b16 %v182
    %v692 = vunpack.c.l.b16 %v183
    %v693 = vunpack.c.h.b16 %v183
    %v694 = vunpack.c.l.b16 %v184
    %v695 = vunpack.c.h.b16 %v184
    %v696 = vunpack.c.l.b16 %v185
    %v697 = vunpack.c.h.b16 %v185
    %v698 = vunpack.c.l.b16 %v186
    %v699 = vunpack.c.h.b16 %v186
    %v700 = vunpack.c.l.b16 %v187
    %v701 = vunpack.c.h.b16 %v187
    %v702 = vunpack.c.l.b16 %v188
    %v703 = vunpack.c.h.b16 %v188
    %v704 = vunpack.c.l.b16 %v189
    %v705 = vunpack.c.h.b16 %v189
    %v706 = vunpack.c.l.b16 %v190
    %v707 = vunpack.c.h.b16 %v190
    %v708 = vunpack.c.l.b16 %v191
    %v709 = vunpack.c.h.b16 %v191
    %v710 = vunpack.c.l.b16 %v192
    %v711 = vunpack.c.h.b16 %v192
    %v712 = vunpack.c.l.b16 %v193
    %v713 = vunpack.c.h.b16 %v193
    %v714 = vunpack.c.l.b16 %v194
    %v715 = vunpack.c.h.b16 %v194
    %v716 = vunpack.c.l.b16 %v195
    %v717 = vunpack.c.h.b16 %v195
    %v718 = vunpack.c.l.b16 %v196
    %v719 = vunpack.c.h.b16 %v196
    %v720 = vunpack.c.l.b16 %v197
    %v721 = vunpack.c.h.b16 %v197
    %v722 = vunpack.c.l.b16 %v198
    %v723 = vunpack.c.h.b16 %v198
    %v724 = vunpack.c.l.b16 %v199
    %v725 = vunpack.c.h.b16 %v199
    %v726 = vunpack.c.l.b16 %v200
    %v727 = vunpack.c.h.b16 %v200
    %v728 = vunpack.c.l.b16 %v201
    %v729 = vunpack.c.h.b16 %v201
    %v730 = vunpack.c.l.b16 %v202
    %v731 = vunpack.c.h.b16 %v202
    %v732 = vunpack.c.l.b16 %v203
    %v733 = vunpack.c.h.b16 %v203
    %v734 = vunpack.c.l.b16 %v204
    %v735 = vunpack.c.h.b16 %v204
    %v736 = vunpack.c.l.b16 %v205
    %v737 = vunpack.c.h.b16 %v205
    %v738 = vunpack.c.l.b16 %v206
    %v739 = vunpack.c.h.b16 %v206
    %v740 = vunpack.c.l.b16 %v207
    %v741 = vunpack.c.h.b16 %v207
    %v742 = vunpack.c.l.b16 %v208
    %v743 = vunpack.c.h.b16 %v208
    %v744 = vunpack.c.l.b16 %v209
    %v745 = vunpack.c.h.b16 %v209
    %v746 = vunpack.c.l.b16 %v210
    %v747 = vunpack.c.h.b16 %v210
    %v748 = vunpack.c.l.b16 %v211
    %v749 = vunpack.c.h.b16 %v211
    %v750 = vunpack.c.l.b16 %v212
    %v751 = vunpack.c.h.b16 %v212
    %v752 = vunpack.c.l.b16 %v213
    %v753 = vunpack.c.h.b16 %v213
    %v754 = vunpack.c.l.b16 %v214
    %v755 = vunpack.c.h.b16 %v214
    %v756 = vunpack.c.l.b16 %v215
    %v757 = vunpack.c.h.b16 %v215
    %v758 = vunpack.c.l.b16 %v216
    %v759 = vunpack.c.h.b16 %v216
    %v760 = vunpack.c.l.b16 %v217
    %v761 = vunpack.c.h.b16 %v217
    %v762 = vunpack.c.l.b16 %v218
    %v763 = vunpack.c.h.b16 %v218
    %v764 = vunpack.c.l.b16 %v219
    %v765 = vunpack.c.h.b16 %v219
    %v766 = vunpack.c.l.b16 %v220
    %v767 = vunpack.c.h.b16 %v220
    %v768 = vunpack.c.l.b16 %v221
    %v769 = vunpack.c.h.b16 %v221
    %v770 = vunpack.c.l.b16 %v222
    %v771 = vunpack.c.h.b16 %v222
    %v772 = vunpack.c.l.b16 %v223
    %v773 = vunpack.c.h.b16 %v223
    %v774 = vunpack.c.l.b16 %v224
    %v775 = vunpack.c.h.b16 %v224
    %v776 = vunpack.c.l.b16 %v225
    %v777 = vunpack.c.h.b16 %v225
    %v778 = vunpack.c.l.b16 %v226
    %v779 = vunpack.c.h.b16 %v226
    %v780 = vunpack.c.l.b16 %v227
    %v781 = vunpack.c.h.b16 %v227
    %v782 = vunpack.c.l.b16 %v228
    %v783 = vunpack.c.h.b16 %v228
    %v784 = vunpack.c.l.b16 %v229
    %v785 = vunpack.c.h.b16 %v229
    %v786 = vunpack.c.l.b16 %v230
    %v787 = vunpack.c.h.b16 %v230
    %v788 = vunpack.c.l.b16 %v231
    %v789 = vunpack.c.h.b16 %v231
    %v790 = vunpack.c.l.b16 %v232
    %v791 = vunpack.c.h.b16 %v232
    %v792 = vunpack.c.l.b16 %v233
    %v793 = vunpack.c.h.b16 %v233
    %v794 = vunpack.c.l.b16 %v234
    %v795 = vunpack.c.h.b16 %v234
    %v796 = vunpack.c.l.b16 %v235
    %v797 = vunpack.c.h.b16 %v235
    %v798 = vunpack.c.l.b16 %v236
    %v799 = vunpack.c.h.b16 %v236
    %v800 = vunpack.c.l.b16 %v237
    %v801 = vunpack.c.h.b16 %v237
    %v802 = vunpack.c.l.b16 %v238
    %v803 = vunpack.c.h.b16 %v238
    %v804 = vunpack.c.l.b16 %v239
    %v805 = vunpack.c.h.b16 %v239
    %v806 = vunpack.c.l.b16 %v240
    %v807 = vunpack.c.h.b16 %v240
    %v808 = vunpack.c.l.b16 %v241
    %v809 = vunpack.c.h.b16 %v241
    %v810 = vunpack.c.l.b16 %v242
    %v811 = vunpack.c.h.b16 %v242
    %v812 = vunpack.c.l.b16 %v243
    %v813 = vunpack.c.h.b16 %v243
    %v814 = vunpack.c.l.b16 %v244
    %v815 = vunpack.c.h.b16 %v244
    %v816 = vunpack.c.l.b16 %v245
    %v817 = vunpack.c.h.b16 %v245
    %v818 = vunpack.c.l.b16 %v246
    %v819 = vunpack.c.h.b16 %v246
    %v820 = vunpack.c.l.b16 %v247
    %v821 = vunpack.c.h.b16 %v247
    %v822 = vunpack.c.l.b16 %v248
    %v823 = vunpack.c.h.b16 %v248
    %v824 = vunpack.c.l.b16 %v249
    %v825 = vunpack.c.h.b16 %v249
    %v826 = vunpack.c.l.b16 %v250
    %v827 = vunpack.c.h.b16 %v250
    %v828 = vunpack.c.l.b16 %v251
    %v829 = vunpack.c.h.b16 %v251
    %v830 = vunpack.c.l.b16 %v252
    %v831 = vunpack.c.h.b16 %v252
    %v832 = vunpack.c.l.b16 %v253
    %v833 = vunpack.c.h.b16 %v253
    %v834 = vunpack.c.l.b16 %v254
    %v835 = vunpack.c.h.b16 %v254
    %v836 = vunpack.c.l.b16 %v255
    %v837 = vunpack.c.h.b16 %v255
    %v838 = vunpack.c.l.b16 %v256
    %v839 = vunpack.c.h.b16 %v256
    %v840 = vunpack.c.l.b16 %v257
    %v841 = vunpack.c.h.b16 %v257
    %v842 = vunpack.c.l.b16 %v258
    %v843 = vunpack.c.h.b16 %v258
    %v844 = vunpack.c.l.b16 %v259
    %v845 = vunpack.c.h.b16 %v259
    %v846 = vunpack.c.l.b16 %v260
    %v847 = vunpack.c.h.b16 %v260
    %v848 = vunpack.c.l.b16 %v261
    %v849 = vunpack.c.h.b16 %v261
    %v850 = vunpack.c.l.b16 %v262
    %v851 = vunpack.c.h.b16 %v262
    %v852 = vunpack.c.l.b16 %v263
    %v853 = vunpack.c.h.b16 %v263
    %v854 = vunpack.c.l.b16 %v264
    %v855 = vunpack.c.h.b16 %v264
    %v856 = vunpack.c.l.b16 %v265
    %v857 = vunpack.c.h.b16 %v265
    %v858 = vunpack.c.l.b16 %v266
    %v859 = vunpack.c.h.b16 %v266
    %v860 = vunpack.c.l.b16 %v267
    %v861 = vunpack.c.h.b16 %v267
    %v862 = vunpack.c.l.b16 %v268
    %v863 = vunpack.c.h.b16 %v268
    %v864 = vunpack.c.l.b16 %v269
    %v865 = vunpack.c.h.b16 %v269
    %v866 = vunpack.c.l.b16 %v270
    %v867 = vunpack.c.h.b16 %v270
    %v868 = vunpack.c.l.b16 %v271
    %v869 = vunpack.c.h.b16 %v271
    %v870 = vunpack.c.l.b16 %v272
    %v871 = vunpack.c.h.b16 %v272
    %v872 = vunpack.c.l.b16 %v273
    %v873 = vunpack.c.h.b16 %v273
    %v874 = vunpack.c.l.b16 %v274
    %v875 = vunpack.c.h.b16 %v274
    %v876 = vunpack.c.l.b16 %v275
    %v877 = vunpack.c.h.b16 %v275
    %v878 = vunpack.c.l.b16 %v276
    %v879 = vunpack.c.h.b16 %v276
    %v880 = vunpack.c.l.b16 %v277
    %v881 = vunpack.c.h.b16 %v277
    %v882 = vunpack.c.l.b16 %v278
    %v883 = vunpack.c.h.b16 %v278
    %v884 = vunpack.c.l.b16 %v279
    %v885 = vunpack.c.h.b16 %v279
    %v886 = vunpack.c.l.b16 %v280
    %v887 = vunpack.c.h.b16 %v280
    %v888 = vunpack.c.l.b16 %v281
    %v889 = vunpack.c.h.b16 %v281
    %v890 = vunpack.c.l.b16 %v282
    %v891 = vunpack.c.h.b16 %v282
    %v892 = vunpack.c.l.b16 %v283
    %v893 = vunpack.c.h.b16 %v283
    %v894 = vunpack.c.l.b16 %v284
    %v895 = vunpack.c.h.b16 %v284
    %v896 = vunpack.c.l.b16 %v285
    %v897 = vunpack.c.h.b16 %v285
    %v898 = vunpack.c.l.b16 %v286
    %v899 = vunpack.c.h.b16 %v286
    %v900 = vunpack.c.l.b16 %v287
    %v901 = vunpack.c.h.b16 %v287
    %v902 = vunpack.c.l.b16 %v288
    %v903 = vunpack.c.h.b16 %v288
    %v904 = vunpack.c.l.b16 %v289
    %v905 = vunpack.c.h.b16 %v289
    %v906 = vunpack.c.l.b16 %v290
    %v907 = vunpack.c.h.b16 %v290
    %v908 = vunpack.c.l.b16 %v291
    %v909 = vunpack.c.h.b16 %v291
    %v910 = vunpack.c.l.b16 %v292
    %v911 = vunpack.c.h.b16 %v292
    %v912 = vpack.c.b16 %v524, %v520
    %v913 = vpack.c.b16 %v525, %v521
    %v914 = vpack.c.b16 %v526, %v522
    %v915 = vpack.c.b16 %v527, %v523
    %v916 = vpack.c.b16 %v532, %v528
    %v917 = vpack.c.b16 %v533, %v529
    %v918 = vpack.c.b16 %v534, %v530
    %v919 = vpack.c.b16 %v535, %v531
    %v920 = vpack.c.b16 %v540, %v536
    %v921 = vpack.c.b16 %v541, %v537
    %v922 = vpack.c.b16 %v542, %v538
    %v923 = vpack.c.b16 %v543, %v539
    %v924 = vpack.c.b16 %v548, %v544
    %v925 = vpack.c.b16 %v549, %v545
    %v926 = vpack.c.b16 %v550, %v546
    %v927 = vpack.c.b16 %v551, %v547
    %v928 = vpack.c.b16 %v556, %v552
    %v929 = vpack.c.b16 %v557, %v553
    %v930 = vpack.c.b16 %v558, %v554
    %v931 = vpack.c.b16 %v559, %v555
    %v932 = vpack.c.b16 %v564, %v560
    %v933 = vpack.c.b16 %v565, %v561
    %v934 = vpack.c.b16 %v566, %v562
    %v935 = vpack.c.b16 %v567, %v563
    %v936 = vpack.c.b16 %v572, %v568
    %v937 = vpack.c.b16 %v573, %v569
    %v938 = vpack.c.b16 %v574, %v570
    %v939 = vpack.c.b16 %v575, %v571
    %v940 = vpack.c.b16 %v580, %v576
    %v941 = vpack.c.b16 %v581, %v577
    %v942 = vpack.c.b16 %v582, %v578
    %v943 = vpack.c.b16 %v583, %v579
    %v944 = vpack.c.b16 %v588, %v584
    %v945 = vpack.c.b16 %v589, %v585
    %v946 = vpack.c.b16 %v590, %v586
    %v947 = vpack.c.b16 %v591, %v587
    %v948 = vpack.c.b16 %v596, %v592
    %v949 = vpack.c.b16 %v597, %v593
    %v950 = vpack.c.b16 %v598, %v594
    %v951 = vpack.c.b16 %v599, %v595
    %v952 = vpack.c.b16 %v604, %v600
    %v953 = vpack.c.b16 %v605, %v601
    %v954 = vpack.c.b16 %v606, %v602
    %v955 = vpack.c.b16 %v607, %v603
    %v956 = vpack.c.b16 %v612, %v608
    %v957 = vpack.c.b16 %v613, %v609
    %v958 = vpack.c.b16 %v614, %v610
    %v959 = vpack.c.b16 %v615, %v611
    %v960 = vpack.c.b16 %v620, %v616
    %v961 = vpack.c.b16 %v621, %v617
    %v962 = vpack.c.b16 %v622, %v618
    %v963 = vpack.c.b16 %v623, %v619
    %v964 = vpack.c.b16 %v628, %v624
    %v965 = vpack.c.b16 %v629, %v625
    %v966 = vpack.c.b16 %v630, %v626
    %v967 = vpack.c.b16 %v631, %v627
    %v968 = vpack.c.b16 %v636, %v632
    %v969 = vpack.c.b16 %v637, %v633
    %v970 = vpack.c.b16 %v638, %v634
    %v971 = vpack.c.b16 %v639, %v635
    %v972 = vpack.c.b16 %v644, %v640
    %v973 = vpack.c.b16 %v645, %v641
    %v974 = vpack.c.b16 %v646, %v642
    %v975 = vpack.c.b16 %v647, %v643
    %v976 = vpack.c.b16 %v652, %v648
    %v977 = vpack.c.b16 %v653, %v649
    %v978 = vpack.c.b16 %v654, %v650
    %v979 = vpack.c.b16 %v655, %v651
    %v980 = vpack.c.b16 %v660, %v656
    %v981 = vpack.c.b16 %v661, %v657
    %v982 = vpack.c.b16 %v662, %v658
    %v983 = vpack.c.b16 %v663, %v659
    %v984 = vpack.c.b16 %v668, %v664
    %v985 = vpack.c.b16 %v669, %v665
    %v986 = vpack.c.b16 %v670, %v666
    %v987 = vpack.c.b16 %v671, %v667
    %v988 = vpack.c.b16 %v676, %v672
    %v989 = vpack.c.b16 %v677, %v673
    %v990 = vpack.c.b16 %v678, %v674
    %v991 = vpack.c.b16 %v679, %v675
    %v992 = vpack.c.b16 %v684, %v680
    %v993 = vpack.c.b16 %v685, %v681
    %v994 = vpack.c.b16 %v686, %v682
    %v995 = vpack.c.b16 %v687, %v683
    %v996 = vpack.c.b16 %v692, %v688
    %v997 = vpack.c.b16 %v693, %v689
    %v998 = vpack.c.b16 %v694, %v690
    %v999 = vpack.c.b16 %v695, %v691
    %v1000 = vpack.c.b16 %v700, %v696
    %v1001 = vpack.c.b16 %v701, %v697
    %v1002 = vpack.c.b16 %v702, %v698
    %v1003 = vpack.c.b16 %v703, %v699
    %v1004 = vpack.c.b16 %v708, %v704
    %v1005 = vpack.c.b16 %v709, %v705
    %v1006 = vpack.c.b16 %v710, %v706
    %v1007 = vpack.c.b16 %v711, %v707
    %v1008 = vpack.c.b16 %v716, %v712
    %v1009 = vpack.c.b16 %v717, %v713
    %v1010 = vpack.c.b16 %v718, %v714
    %v1011 = vpack.c.b16 %v719, %v715
    %v1012 = vpack.c.b16 %v724, %v720
    %v1013 = vpack.c.b16 %v725, %v721
    %v1014 = vpack.c.b16 %v726, %v722
    %v1015 = vpack.c.b16 %v727, %v723
    %v1016 = vpack.c.b16 %v732, %v728
    %v1017 = vpack.c.b16 %v733, %v729
    %v1018 = vpack.c.b16 %v734, %v730
    %v1019 = vpack.c.b16 %v735, %v731
    %v1020 = vpack.c.b16 %v740, %v736
    %v1021 = vpack.c.b16 %v741, %v737
    %v1022 = vpack.c.b16 %v742, %v738
    %v1023 = vpack.c.b16 %v743, %v739
    %v1024 = vpack.c.b16 %v748, %v744
    %v1025 = vpack.c.b16 %v749, %v745
    %v1026 = vpack.c.b16 %v750, %v746
    %v1027 = vpack.c.b16 %v751, %v747
    %v1028 = vpack.c.b16 %v756, %v752
    %v1029 = vpack.c.b16 %v757, %v753
    %v1030 = vpack.c.b16 %v758, %v754
    %v1031 = vpack.c.b16 %v759, %v755
    %v1032 = vpack.c.b16 %v764, %v760
    %v1033 = vpack.c.b16 %v765, %v761
    %v1034 = vpack.c.b16 %v766, %v762
    %v1035 = vpack.c.b16 %v767, %v763
    %v1036 = vpack.c.b16 %v772, %v768
    %v1037 = vpack.c.b16 %v773, %v769
    %v1038 = vpack.c.b16 %v774, %v770
    %v1039 = vpack.c.b16 %v775, %v771
    %v1040 = vpack.c.b16 %v780, %v776
    %v1041 = vpack.c.b16 %v781, %v777
    %v1042 = vpack.c.b16 %v782, %v778
    %v1043 = vpack.c.b16 %v783, %v779
    %v1044 = vpack.c.b16 %v788, %v784
    %v1045 = vpack.c.b16 %v789, %v785
    %v1046 = vpack.c.b16 %v790, %v786
    %v1047 = vpack.c.b16 %v791, %v787
    %v1048 = vpack.c.b16 %v796, %v792
    %v1049 = vpack.c.b16 %v797, %v793
    %v1050 = vpack.c.b16 %v798, %v794
    %v1051 = vpack.c.b16 %v799, %v795
    %v1052 = vpack.c.b16 %v804, %v800
    %v1053 = vpack.c.b16 %v805, %v801
    %v1054 = vpack.c.b16 %v806, %v802
    %v1055 = vpack.c.b16 %v807, %v803
    %v1056 = vpack.c.b16 %v812, %v808
    %v1057 = vpack.c.b16 %v813, %v809
    %v1058 = vpack.c.b16 %v814, %v810
    %v1059 = vpack.c.b16 %v815, %v811
    %v1060 = vpack.c.b16 %v820, %v816
    %v1061 = vpack.c.b16 %v821, %v817
    %v1062 = vpack.c.b16 %v822, %v818
    %v1063 = vpack.c.b16 %v823, %v819
    %v1064 = vpack.c.b16 %v828, %v824
    %v1065 = vpack.c.b16 %v829, %v825
    %v1066 = vpack.c.b16 %v830, %v826
    %v1067 = vpack.c.b16 %v831, %v827
    %v1068 = vpack.c.b16 %v836, %v832
    %v1069 = vpack.c.b16 %v837, %v833
    %v1070 = vpack.c.b16 %v838, %v834
    %v1071 = vpack.c.b16 %v839, %v835
    %v1072 = vpack.c.b16 %v844, %v840
    %v1073 = vpack.c.b16 %v845, %v841
    %v1074 = vpack.c.b16 %v846, %v842
    %v1075 = vpack.c.b16 %v847, %v843
    %v1076 = vpack.c.b16 %v852, %v848
    %v1077 = vpack.c.b16 %v853, %v849
    %v1078 = vpack.c.b16 %v854, %v850
    %v1079 = vpack.c.b16 %v855, %v851
    %v1080 = vpack.c.b16 %v860, %v856
    %v1081 = vpack.c.b16 %v861, %v857
    %v1082 = vpack.c.b16 %v862, %v858
    %v1083 = vpack.c.b16 %v863, %v859
    %v1084 = vpack.c.b16 %v868, %v864
    %v1085 = vpack.c.b16 %v869, %v865
    %v1086 = vpack.c.b16 %v870, %v866
    %v1087 = vpack.c.b16 %v871, %v867
    %v1088 = vpack.c.b16 %v876, %v872
    %v1089 = vpack.c.b16 %v877, %v873
    %v1090 = vpack.c.b16 %v878, %v874
    %v1091 = vpack.c.b16 %v879, %v875
    %v1092 = vpack.c.b16 %v884, %v880
    %v1093 = vpack.c.b16 %v885, %v881
    %v1094 = vpack.c.b16 %v886, %v882
    %v1095 = vpack.c.b16 %v887, %v883
    %v1096 = vpack.c.b16 %v892, %v888
    %v1097 = vpack.c.b16 %v893, %v889
    %v1098 = vpack.c.b16 %v894, %v890
    %v1099 = vpack.c.b16 %v895, %v891
    %v1100 = vpack.c.b16 %v900, %v896
    %v1101 = vpack.c.b16 %v901, %v897
    %v1102 = vpack.c.b16 %v902, %v898
    %v1103 = vpack.c.b16 %v903, %v899
    %v1104 = vpack.c.b16 %v908, %v904
    %v1105 = vpack.c.b16 %v909, %v905
    %v1106 = vpack.c.b16 %v910, %v906
    %v1107 = vpack.c.b16 %v911, %v907
    %vm1304 = vcmask 130048
    %v1306 = vsel %vm1304, %v95, 0
    %1308 = vmatprep.subr.bf16.mxu0 %v941
    %1309 = vmatpush1.bf16.msra.mxu0 %v940
    %1310 = vmatprep.subr.bf16.mxu0 %v937
    %1311 = vmatpush1.bf16.msra.mxu0 %v936
    %1312 = vmatprep.subr.bf16.mxu0 %v933
    %1313 = vmatpush1.bf16.msra.mxu0 %v932
    %1314 = vmatprep.subr.bf16.mxu0 %v929
    %1315 = vmatpush1.bf16.msra.mxu0 %v928
    %1316 = vmatprep.subr.bf16.mxu0 %v925
    %1317 = vmatpush1.bf16.msra.mxu0 %v924
    %1318 = vmatprep.subr.bf16.mxu0 %v921
    %1319 = vmatpush1.bf16.msra.mxu0 %v920
    %1320 = vmatprep.subr.bf16.mxu0 %v917
    %1321 = vmatpush1.bf16.msra.mxu0 %v916
    %1322 = vmatprep.subr.bf16.mxu0 %v913
    %1323 = vmatpush1.bf16.msra.mxu0 %v912
    %1324 = vmatprep.subr.bf16.mxu0 %v973
    %1325 = vmatpush2.bf16.msra.mxu0 %v972
    %1326 = vmatprep.subr.bf16.mxu0 %v969
    %1327 = vmatpush2.bf16.msra.mxu0 %v968
    %1328 = vmatprep.subr.bf16.mxu0 %v965
    %1329 = vmatpush2.bf16.msra.mxu0 %v964
    %1330 = vmatprep.subr.bf16.mxu0 %v961
    %1331 = vmatpush2.bf16.msra.mxu0 %v960
    %1332 = vmatprep.subr.bf16.mxu0 %v957
    %1333 = vmatpush2.bf16.msra.mxu0 %v956
    %1334 = vmatprep.subr.bf16.mxu0 %v953
    %1335 = vmatpush2.bf16.msra.mxu0 %v952
    %1336 = vmatprep.subr.bf16.mxu0 %v949
    %1337 = vmatpush2.bf16.msra.mxu0 %v948
    %1338 = vmatprep.subr.bf16.mxu0 %v945
    %1339 = vmatpush2.bf16.msra.mxu0 %v944
    %1340 = vmatprep.mubr.bf16.mxu0 %v90
    %1341 = vmatmul.mubr.bf16.gmra.mxu0 %v89
    %v1342 = vpop.f32.mrf.mxu0
    %v1343 = vadd.f32 %v320, %v1342
    %v1344 = vpop.f32.mrf.mxu0
    %v1345 = vadd.f32 %v321, %v1344
    %v1346 = vpop.f32.mrf.mxu0
    %v1347 = vpop.f32.mrf.mxu0
    %1348 = vdwg.mxu0
    %1349 = vmatprep.subr.bf16.mxu0 %v1005
    %1350 = vmatpush1.bf16.msra.mxu0 %v1004
    %1351 = vmatprep.subr.bf16.mxu0 %v1001
    %1352 = vmatpush1.bf16.msra.mxu0 %v1000
    %1353 = vmatprep.subr.bf16.mxu0 %v997
    %1354 = vmatpush1.bf16.msra.mxu0 %v996
    %1355 = vmatprep.subr.bf16.mxu0 %v993
    %1356 = vmatpush1.bf16.msra.mxu0 %v992
    %1357 = vmatprep.subr.bf16.mxu0 %v989
    %1358 = vmatpush1.bf16.msra.mxu0 %v988
    %1359 = vmatprep.subr.bf16.mxu0 %v985
    %1360 = vmatpush1.bf16.msra.mxu0 %v984
    %1361 = vmatprep.subr.bf16.mxu0 %v981
    %1362 = vmatpush1.bf16.msra.mxu0 %v980
    %1363 = vmatprep.subr.bf16.mxu0 %v977
    %1364 = vmatpush1.bf16.msra.mxu0 %v976
    %1365 = vmatprep.subr.bf16.mxu0 %v1037
    %1366 = vmatpush2.bf16.msra.mxu0 %v1036
    %1367 = vmatprep.subr.bf16.mxu0 %v1033
    %1368 = vmatpush2.bf16.msra.mxu0 %v1032
    %1369 = vmatprep.subr.bf16.mxu0 %v1029
    %1370 = vmatpush2.bf16.msra.mxu0 %v1028
    %1371 = vmatprep.subr.bf16.mxu0 %v1025
    %1372 = vmatpush2.bf16.msra.mxu0 %v1024
    %1373 = vmatprep.subr.bf16.mxu0 %v1021
    %1374 = vmatpush2.bf16.msra.mxu0 %v1020
    %1375 = vmatprep.subr.bf16.mxu0 %v1017
    %1376 = vmatpush2.bf16.msra.mxu0 %v1016
    %1377 = vmatprep.subr.bf16.mxu0 %v1013
    %1378 = vmatpush2.bf16.msra.mxu0 %v1012
    %1379 = vmatprep.subr.bf16.mxu0 %v1009
    %1380 = vmatpush2.bf16.msra.mxu0 %v1008
    %1381 = vmatprep.mubr.bf16.mxu0 %v92
    %1382 = vmatmul.mubr.bf16.gmra.mxu0 %v91
    %v1383 = vpop.f32.mrf.mxu0
    %v1384 = vadd.f32 %v1343, %v1383
    %v1385 = vpop.f32.mrf.mxu0
    %v1386 = vadd.f32 %v1345, %v1385
    %v1387 = vpop.f32.mrf.mxu0
    %v1388 = vpop.f32.mrf.mxu0
    %1389 = vdwg.mxu0
    %1390 = vmatprep.subr.bf16.mxu0 %v1069
    %1391 = vmatpush1.bf16.msra.mxu0 %v1068
    %1392 = vmatprep.subr.bf16.mxu0 %v1065
    %1393 = vmatpush1.bf16.msra.mxu0 %v1064
    %1394 = vmatprep.subr.bf16.mxu0 %v1061
    %1395 = vmatpush1.bf16.msra.mxu0 %v1060
    %1396 = vmatprep.subr.bf16.mxu0 %v1057
    %1397 = vmatpush1.bf16.msra.mxu0 %v1056
    %1398 = vmatprep.subr.bf16.mxu0 %v1053
    %1399 = vmatpush1.bf16.msra.mxu0 %v1052
    %1400 = vmatprep.subr.bf16.mxu0 %v1049
    %1401 = vmatpush1.bf16.msra.mxu0 %v1048
    %1402 = vmatprep.subr.bf16.mxu0 %v1045
    %1403 = vmatpush1.bf16.msra.mxu0 %v1044
    %1404 = vmatprep.subr.bf16.mxu0 %v1041
    %1405 = vmatpush1.bf16.msra.mxu0 %v1040
    %1406 = vmatprep.subr.bf16.mxu0 %v1101
    %1407 = vmatpush2.bf16.msra.mxu0 %v1100
    %1408 = vmatprep.subr.bf16.mxu0 %v1097
    %1409 = vmatpush2.bf16.msra.mxu0 %v1096
    %1410 = vmatprep.subr.bf16.mxu0 %v1093
    %1411 = vmatpush2.bf16.msra.mxu0 %v1092
    %1412 = vmatprep.subr.bf16.mxu0 %v1089
    %1413 = vmatpush2.bf16.msra.mxu0 %v1088
    %1414 = vmatprep.subr.bf16.mxu0 %v1085
    %1415 = vmatpush2.bf16.msra.mxu0 %v1084
    %1416 = vmatprep.subr.bf16.mxu0 %v1081
    %1417 = vmatpush2.bf16.msra.mxu0 %v1080
    %1418 = vmatprep.subr.bf16.mxu0 %v1077
    %1419 = vmatpush2.bf16.msra.mxu0 %v1076
    %1420 = vmatprep.subr.bf16.mxu0 %v1073
    %1421 = vmatpush2.bf16.msra.mxu0 %v1072
    %1422 = vmatprep.mubr.bf16.mxu0 %v94
    %1423 = vmatmul.mubr.bf16.gmra.mxu0 %v93
    %v1424 = vpop.f32.mrf.mxu0
    %v1425 = vadd.f32 %v1384, %v1424
    %v1426 = vpop.f32.mrf.mxu0
    %v1427 = vadd.f32 %v1386, %v1426
    %v1428 = vpop.f32.mrf.mxu0
    %v1429 = vpop.f32.mrf.mxu0
    %1430 = vdwg.mxu0
    %1431 = vmatprep.subr.bf16.mxu0 0
    %1432 = vmatpush1.bf16.msra.mxu0 0
    %1433 = vmatprep.subr.bf16.mxu0 0
    %1434 = vmatpush1.bf16.msra.mxu0 0
    %1435 = vmatprep.subr.bf16.mxu0 0
    %1436 = vmatpush1.bf16.msra.mxu0 0
    %1437 = vmatprep.subr.bf16.mxu0 0
    %1438 = vmatpush1.bf16.msra.mxu0 0
    %1439 = vmatprep.subr.bf16.mxu0 0
    %1440 = vmatpush1.bf16.msra.mxu0 0
    %1441 = vmatprep.subr.bf16.mxu0 0
    %1442 = vmatpush1.bf16.msra.mxu0 0
    %1443 = vmatprep.subr.bf16.mxu0 0
    %1444 = vmatpush1.bf16.msra.mxu0 0
    %1445 = vmatprep.subr.bf16.mxu0 %v1105
    %1446 = vmatpush1.bf16.msra.mxu0 %v1104
    %1447 = vmatprep.subr.bf16.mxu0 0
    %1448 = vmatpush2.bf16.msra.mxu0 0
    %1449 = vmatprep.subr.bf16.mxu0 0
    %1450 = vmatpush2.bf16.msra.mxu0 0
    %1451 = vmatprep.subr.bf16.mxu0 0
    %1452 = vmatpush2.bf16.msra.mxu0 0
    %1453 = vmatprep.subr.bf16.mxu0 0
    %1454 = vmatpush2.bf16.msra.mxu0 0
    %1455 = vmatprep.subr.bf16.mxu0 0
    %1456 = vmatpush2.bf16.msra.mxu0 0
    %1457 = vmatprep.subr.bf16.mxu0 0
    %1458 = vmatpush2.bf16.msra.mxu0 0
    %1459 = vmatprep.subr.bf16.mxu0 0
    %1460 = vmatpush2.bf16.msra.mxu0 0
    %1461 = vmatprep.subr.bf16.mxu0 0
    %1462 = vmatpush2.bf16.msra.mxu0 0
    %1463 = vmatprep.mubr.bf16.mxu0 0
    %1464 = vmatmul.mubr.bf16.gmra.mxu0 %v1306
    %v1465 = vpop.f32.mrf.mxu0
    %v1466 = vadd.f32 %v1425, %v1465
    %v1467 = vpop.f32.mrf.mxu0
    %v1468 = vadd.f32 %v1427, %v1467
    %v1469 = vpop.f32.mrf.mxu0
    %v1470 = vpop.f32.mrf.mxu0
    %1471 = vdwg.mxu0
    %1472 = vmatprep.subr.bf16.mxu0 %v943
    %1473 = vmatpush1.bf16.msra.mxu0 %v942
    %1474 = vmatprep.subr.bf16.mxu0 %v939
    %1475 = vmatpush1.bf16.msra.mxu0 %v938
    %1476 = vmatprep.subr.bf16.mxu0 %v935
    %1477 = vmatpush1.bf16.msra.mxu0 %v934
    %1478 = vmatprep.subr.bf16.mxu0 %v931
    %1479 = vmatpush1.bf16.msra.mxu0 %v930
    %1480 = vmatprep.subr.bf16.mxu0 %v927
    %1481 = vmatpush1.bf16.msra.mxu0 %v926
    %1482 = vmatprep.subr.bf16.mxu0 %v923
    %1483 = vmatpush1.bf16.msra.mxu0 %v922
    %1484 = vmatprep.subr.bf16.mxu0 %v919
    %1485 = vmatpush1.bf16.msra.mxu0 %v918
    %1486 = vmatprep.subr.bf16.mxu0 %v915
    %1487 = vmatpush1.bf16.msra.mxu0 %v914
    %1488 = vmatprep.subr.bf16.mxu0 %v975
    %1489 = vmatpush2.bf16.msra.mxu0 %v974
    %1490 = vmatprep.subr.bf16.mxu0 %v971
    %1491 = vmatpush2.bf16.msra.mxu0 %v970
    %1492 = vmatprep.subr.bf16.mxu0 %v967
    %1493 = vmatpush2.bf16.msra.mxu0 %v966
    %1494 = vmatprep.subr.bf16.mxu0 %v963
    %1495 = vmatpush2.bf16.msra.mxu0 %v962
    %1496 = vmatprep.subr.bf16.mxu0 %v959
    %1497 = vmatpush2.bf16.msra.mxu0 %v958
    %1498 = vmatprep.subr.bf16.mxu0 %v955
    %1499 = vmatpush2.bf16.msra.mxu0 %v954
    %1500 = vmatprep.subr.bf16.mxu0 %v951
    %1501 = vmatpush2.bf16.msra.mxu0 %v950
    %1502 = vmatprep.subr.bf16.mxu0 %v947
    %1503 = vmatpush2.bf16.msra.mxu0 %v946
    %1504 = vmatprep.mubr.bf16.mxu0 %v90
    %1505 = vmatmul.mubr.bf16.gmra.mxu0 %v89
    %v1506 = vpop.f32.mrf.mxu0
    %v1507 = vadd.f32 %v322, %v1506
    %v1508 = vpop.f32.mrf.mxu0
    %v1509 = vadd.f32 %v323, %v1508
    %v1510 = vpop.f32.mrf.mxu0
    %v1511 = vpop.f32.mrf.mxu0
    %1512 = vdwg.mxu0
    %1513 = vmatprep.subr.bf16.mxu0 %v1007
    %1514 = vmatpush1.bf16.msra.mxu0 %v1006
    %1515 = vmatprep.subr.bf16.mxu0 %v1003
    %1516 = vmatpush1.bf16.msra.mxu0 %v1002
    %1517 = vmatprep.subr.bf16.mxu0 %v999
    %1518 = vmatpush1.bf16.msra.mxu0 %v998
    %1519 = vmatprep.subr.bf16.mxu0 %v995
    %1520 = vmatpush1.bf16.msra.mxu0 %v994
    %1521 = vmatprep.subr.bf16.mxu0 %v991
    %1522 = vmatpush1.bf16.msra.mxu0 %v990
    %1523 = vmatprep.subr.bf16.mxu0 %v987
    %1524 = vmatpush1.bf16.msra.mxu0 %v986
    %1525 = vmatprep.subr.bf16.mxu0 %v983
    %1526 = vmatpush1.bf16.msra.mxu0 %v982
    %1527 = vmatprep.subr.bf16.mxu0 %v979
    %1528 = vmatpush1.bf16.msra.mxu0 %v978
    %1529 = vmatprep.subr.bf16.mxu0 %v1039
    %1530 = vmatpush2.bf16.msra.mxu0 %v1038
    %1531 = vmatprep.subr.bf16.mxu0 %v1035
    %1532 = vmatpush2.bf16.msra.mxu0 %v1034
    %1533 = vmatprep.subr.bf16.mxu0 %v1031
    %1534 = vmatpush2.bf16.msra.mxu0 %v1030
    %1535 = vmatprep.subr.bf16.mxu0 %v1027
    %1536 = vmatpush2.bf16.msra.mxu0 %v1026
    %1537 = vmatprep.subr.bf16.mxu0 %v1023
    %1538 = vmatpush2.bf16.msra.mxu0 %v1022
    %1539 = vmatprep.subr.bf16.mxu0 %v1019
    %1540 = vmatpush2.bf16.msra.mxu0 %v1018
    %1541 = vmatprep.subr.bf16.mxu0 %v1015
    %1542 = vmatpush2.bf16.msra.mxu0 %v1014
    %1543 = vmatprep.subr.bf16.mxu0 %v1011
    %1544 = vmatpush2.bf16.msra.mxu0 %v1010
    %1545 = vmatprep.mubr.bf16.mxu0 %v92
    %1546 = vmatmul.mubr.bf16.gmra.mxu0 %v91
    %v1547 = vpop.f32.mrf.mxu0
    %v1548 = vadd.f32 %v1507, %v1547
    %v1549 = vpop.f32.mrf.mxu0
    %v1550 = vadd.f32 %v1509, %v1549
    %v1551 = vpop.f32.mrf.mxu0
    %v1552 = vpop.f32.mrf.mxu0
    %1553 = vdwg.mxu0
    %1554 = vmatprep.subr.bf16.mxu0 %v1071
    %1555 = vmatpush1.bf16.msra.mxu0 %v1070
    %1556 = vmatprep.subr.bf16.mxu0 %v1067
    %1557 = vmatpush1.bf16.msra.mxu0 %v1066
    %1558 = vmatprep.subr.bf16.mxu0 %v1063
    %1559 = vmatpush1.bf16.msra.mxu0 %v1062
    %1560 = vmatprep.subr.bf16.mxu0 %v1059
    %1561 = vmatpush1.bf16.msra.mxu0 %v1058
    %1562 = vmatprep.subr.bf16.mxu0 %v1055
    %1563 = vmatpush1.bf16.msra.mxu0 %v1054
    %1564 = vmatprep.subr.bf16.mxu0 %v1051
    %1565 = vmatpush1.bf16.msra.mxu0 %v1050
    %1566 = vmatprep.subr.bf16.mxu0 %v1047
    %1567 = vmatpush1.bf16.msra.mxu0 %v1046
    %1568 = vmatprep.subr.bf16.mxu0 %v1043
    %1569 = vmatpush1.bf16.msra.mxu0 %v1042
    %1570 = vmatprep.subr.bf16.mxu0 %v1103
    %1571 = vmatpush2.bf16.msra.mxu0 %v1102
    %1572 = vmatprep.subr.bf16.mxu0 %v1099
    %1573 = vmatpush2.bf16.msra.mxu0 %v1098
    %1574 = vmatprep.subr.bf16.mxu0 %v1095
    %1575 = vmatpush2.bf16.msra.mxu0 %v1094
    %1576 = vmatprep.subr.bf16.mxu0 %v1091
    %1577 = vmatpush2.bf16.msra.mxu0 %v1090
    %1578 = vmatprep.subr.bf16.mxu0 %v1087
    %1579 = vmatpush2.bf16.msra.mxu0 %v1086
    %1580 = vmatprep.subr.bf16.mxu0 %v1083
    %1581 = vmatpush2.bf16.msra.mxu0 %v1082
    %1582 = vmatprep.subr.bf16.mxu0 %v1079
    %1583 = vmatpush2.bf16.msra.mxu0 %v1078
    %1584 = vmatprep.subr.bf16.mxu0 %v1075
    %1585 = vmatpush2.bf16.msra.mxu0 %v1074
    %1586 = vmatprep.mubr.bf16.mxu0 %v94
    %1587 = vmatmul.mubr.bf16.gmra.mxu0 %v93
    %v1588 = vpop.f32.mrf.mxu0
    %v1589 = vadd.f32 %v1548, %v1588
    %v1590 = vpop.f32.mrf.mxu0
    %v1591 = vadd.f32 %v1550, %v1590
    %v1592 = vpop.f32.mrf.mxu0
    %v1593 = vpop.f32.mrf.mxu0
    %1594 = vdwg.mxu0
    %1595 = vmatprep.subr.bf16.mxu0 0
    %1596 = vmatpush1.bf16.msra.mxu0 0
    %1597 = vmatprep.subr.bf16.mxu0 0
    %1598 = vmatpush1.bf16.msra.mxu0 0
    %1599 = vmatprep.subr.bf16.mxu0 0
    %1600 = vmatpush1.bf16.msra.mxu0 0
    %1601 = vmatprep.subr.bf16.mxu0 0
    %1602 = vmatpush1.bf16.msra.mxu0 0
    %1603 = vmatprep.subr.bf16.mxu0 0
    %1604 = vmatpush1.bf16.msra.mxu0 0
    %1605 = vmatprep.subr.bf16.mxu0 0
    %1606 = vmatpush1.bf16.msra.mxu0 0
    %1607 = vmatprep.subr.bf16.mxu0 0
    %1608 = vmatpush1.bf16.msra.mxu0 0
    %1609 = vmatprep.subr.bf16.mxu0 %v1107
    %1610 = vmatpush1.bf16.msra.mxu0 %v1106
    %1611 = vmatprep.subr.bf16.mxu0 0
    %1612 = vmatpush2.bf16.msra.mxu0 0
    %1613 = vmatprep.subr.bf16.mxu0 0
    %1614 = vmatpush2.bf16.msra.mxu0 0
    %1615 = vmatprep.subr.bf16.mxu0 0
    %1616 = vmatpush2.bf16.msra.mxu0 0
    %1617 = vmatprep.subr.bf16.mxu0 0
    %1618 = vmatpush2.bf16.msra.mxu0 0
    %1619 = vmatprep.subr.bf16.mxu0 0
    %1620 = vmatpush2.bf16.msra.mxu0 0
    %1621 = vmatprep.subr.bf16.mxu0 0
    %1622 = vmatpush2.bf16.msra.mxu0 0
    %1623 = vmatprep.subr.bf16.mxu0 0
    %1624 = vmatpush2.bf16.msra.mxu0 0
    %1625 = vmatprep.subr.bf16.mxu0 0
    %1626 = vmatpush2.bf16.msra.mxu0 0
    %1627 = vmatprep.mubr.bf16.mxu0 0
    %1628 = vmatmul.mubr.bf16.gmra.mxu0 %v1306
    %v1629 = vpop.f32.mrf.mxu0
    %v1630 = vadd.f32 %v1589, %v1629
    %v1631 = vpop.f32.mrf.mxu0
    %v1632 = vadd.f32 %v1591, %v1631
    %v1633 = vpop.f32.mrf.mxu0
    %v1634 = vpop.f32.mrf.mxu0
    %1635 = vdwg.mxu0
    %v1636 = vld [vmem:[%s4] sm:$0xf]
    %v1638 = vlaneseq
    %v1639 = vshrl.u32 %v1638, 7
    %v1640 = vsub.s32 0, %v1639
    %v1641 = vrot.slane %v1636, %v1640
    %v1642 = vlaneseq
    %v1643 = vshrl.u32 %v1642, 7
    %v1644 = vsub.s32 1, %v1643
    %v1645 = vrot.slane %v1636, %v1644
    %v1646 = vlaneseq
    %v1647 = vshrl.u32 %v1646, 7
    %v1648 = vsub.s32 2, %v1647
    %v1649 = vrot.slane %v1636, %v1648
    %v1650 = vlaneseq
    %v1651 = vshrl.u32 %v1650, 7
    %v1652 = vsub.s32 3, %v1651
    %v1653 = vrot.slane %v1636, %v1652
    %v1658 = vadd.f32 %v1466, %v1641
    %v1659 = vadd.f32 %v1468, %v1645
    %v1660 = vadd.f32 %v1630, %v1649
    %v1661 = vadd.f32 %v1632, %v1653
    %vm1662 = vcmp.gt.f32.partialorder %v1658, 0.0
    %vm1663 = vcmp.gt.f32.partialorder %v1659, 0.0
    %vm1664 = vcmp.gt.f32.partialorder %v1660, 0.0
    %vm1665 = vcmp.gt.f32.partialorder %v1661, 0.0
    %v1666 = vmul.f32 %v1658, 0.2
    %v1667 = vmul.f32 %v1659, 0.2
    %v1668 = vmul.f32 %v1660, 0.2
    %v1669 = vmul.f32 %v1661, 0.2
    %v1670 = vsel %vm1662, %v1658, %v1666
    %v1671 = vsel %vm1663, %v1659, %v1667
    %v1672 = vsel %vm1664, %v1660, %v1668
    %v1673 = vsel %vm1665, %v1661, %v1669
    %v1674 = vpack.c.bf16 %v1670, %v1670
    %v1675 = vpack.c.bf16 %v1671, %v1671
    %v1676 = vpack.c.bf16 %v1672, %v1672
    %v1677 = vpack.c.bf16 %v1673, %v1673
    %v1678 = vld [vmem:[#allocation5] sm:$0xff]
    %v1679 = vld [vmem:[#allocation5 + $0x8] sm:$0xff]
    %v1680 = vld [vmem:[#allocation5 + $0x10] sm:$0xff]
    %v1681 = vld [vmem:[#allocation5 + $0x18] sm:$0xff]
    %v1682 = vld [vmem:[#allocation5 + $0x20] sm:$0xff]
    %v1683 = vld [vmem:[#allocation5 + $0x28] sm:$0xff]
    %v1684 = vld [vmem:[#allocation5 + $0x30] sm:$0xff]
    %v1685 = vld [vmem:[#allocation5 + $0x38] sm:$0xff]
    %v1686 = vld [vmem:[#allocation5 + $0x40] sm:$0xff]
    %v1687 = vld [vmem:[#allocation5 + $0x48] sm:$0xff]
    %v1688 = vld [vmem:[#allocation5 + $0x50] sm:$0xff]
    %v1689 = vld [vmem:[#allocation5 + $0x58] sm:$0xff]
    %v1690 = vld [vmem:[#allocation5 + $0x60] sm:$0xff]
    %v1691 = vld [vmem:[#allocation5 + $0x68] sm:$0xff]
    %v1692 = vld [vmem:[#allocation5 + $0x70] sm:$0xff]
    %v1693 = vld [vmem:[#allocation5 + $0x78] sm:$0xff]
    %v1694 = vld [vmem:[#allocation5 + $0x80] sm:$0xff]
    %v1695 = vld [vmem:[#allocation5 + $0x88] sm:$0xff]
    %v1696 = vld [vmem:[#allocation5 + $0x90] sm:$0xff]
    %v1697 = vld [vmem:[#allocation5 + $0x98] sm:$0xff]
    %v1698 = vld [vmem:[#allocation5 + $0xa0] sm:$0xff]
    %v1699 = vld [vmem:[#allocation5 + $0xa8] sm:$0xff]
    %v1700 = vld [vmem:[#allocation5 + $0xb0] sm:$0xff]
    %v1701 = vld [vmem:[#allocation5 + $0xb8] sm:$0xff]
    %v1702 = vld [vmem:[#allocation5 + $0xc0] sm:$0xff]
    %v1703 = vld [vmem:[#allocation5 + $0xc8] sm:$0xff]
    %v1704 = vld [vmem:[#allocation5 + $0xd0] sm:$0xff]
    %v1705 = vld [vmem:[#allocation5 + $0xd8] sm:$0xff]
    %v1706 = vld [vmem:[#allocation5 + $0xe0] sm:$0xff]
    %v1707 = vld [vmem:[#allocation5 + $0xe8] sm:$0xff]
    %v1708 = vld [vmem:[#allocation5 + $0xf0] sm:$0xff]
    %v1709 = vld [vmem:[#allocation5 + $0xf8] sm:$0xff]
    %v1710 = vld [vmem:[#allocation5 + $0x100] sm:$0xff]
    %v1711 = vld [vmem:[#allocation5 + $0x108] sm:$0xff]
    %v1712 = vld [vmem:[#allocation5 + $0x110] sm:$0xff]
    %v1713 = vld [vmem:[#allocation5 + $0x118] sm:$0xff]
    %v1714 = vld [vmem:[#allocation5 + $0x120] sm:$0xff]
    %v1715 = vld [vmem:[#allocation5 + $0x128] sm:$0xff]
    %v1716 = vld [vmem:[#allocation5 + $0x130] sm:$0xff]
    %v1717 = vld [vmem:[#allocation5 + $0x138] sm:$0xff]
    %v1718 = vld [vmem:[#allocation5 + $0x140] sm:$0xff]
    %v1719 = vld [vmem:[#allocation5 + $0x148] sm:$0xff]
    %v1720 = vld [vmem:[#allocation5 + $0x150] sm:$0xff]
    %v1721 = vld [vmem:[#allocation5 + $0x158] sm:$0xff]
    %v1722 = vld [vmem:[#allocation5 + $0x160] sm:$0xff]
    %v1723 = vld [vmem:[#allocation5 + $0x168] sm:$0xff]
    %v1724 = vld [vmem:[#allocation5 + $0x170] sm:$0xff]
    %v1725 = vld [vmem:[#allocation5 + $0x178] sm:$0xff]
    %v1726 = vld [vmem:[#allocation5 + $0x180] sm:$0xff]
    %v1727 = vld [vmem:[#allocation5 + $0x188] sm:$0xff]
    %v1728 = vld [vmem:[#allocation5 + $0x190] sm:$0xff]
    %v1729 = vld [vmem:[#allocation5 + $0x198] sm:$0xff]
    %v1730 = vld [vmem:[#allocation5 + $0x1a0] sm:$0xff]
    %v1731 = vld [vmem:[#allocation5 + $0x1a8] sm:$0xff]
    %v1732 = vld [vmem:[#allocation5 + $0x1b0] sm:$0xff]
    %v1733 = vld [vmem:[#allocation5 + $0x1b8] sm:$0xff]
    %v1734 = vld [vmem:[#allocation5 + $0x1c0] sm:$0xff]
    %v1735 = vld [vmem:[#allocation5 + $0x1c8] sm:$0xff]
    %v1736 = vld [vmem:[#allocation5 + $0x1d0] sm:$0xff]
    %v1737 = vld [vmem:[#allocation5 + $0x1d8] sm:$0xff]
    %v1738 = vld [vmem:[#allocation5 + $0x1e0] sm:$0xff]
    %v1739 = vld [vmem:[#allocation5 + $0x1e8] sm:$0xff]
    %v1740 = vld [vmem:[#allocation5 + $0x1f0] sm:$0xff]
    %v1741 = vld [vmem:[#allocation5 + $0x1f8] sm:$0xff]
    %v1742 = vld [vmem:[#allocation5 + $0x200] sm:$0xff]
    %v1743 = vld [vmem:[#allocation5 + $0x208] sm:$0xff]
    %v1744 = vld [vmem:[#allocation5 + $0x210] sm:$0xff]
    %v1745 = vld [vmem:[#allocation5 + $0x218] sm:$0xff]
    %v1746 = vld [vmem:[#allocation5 + $0x220] sm:$0xff]
    %v1747 = vld [vmem:[#allocation5 + $0x228] sm:$0xff]
    %v1748 = vld [vmem:[#allocation5 + $0x230] sm:$0xff]
    %v1749 = vld [vmem:[#allocation5 + $0x238] sm:$0xff]
    %v1750 = vld [vmem:[#allocation5 + $0x240] sm:$0xff]
    %v1751 = vld [vmem:[#allocation5 + $0x248] sm:$0xff]
    %v1752 = vld [vmem:[#allocation5 + $0x250] sm:$0xff]
    %v1753 = vld [vmem:[#allocation5 + $0x258] sm:$0xff]
    %v1754 = vld [vmem:[#allocation5 + $0x260] sm:$0xff]
    %v1755 = vld [vmem:[#allocation5 + $0x268] sm:$0xff]
    %v1756 = vld [vmem:[#allocation5 + $0x270] sm:$0xff]
    %v1757 = vld [vmem:[#allocation5 + $0x278] sm:$0xff]
    %v1758 = vld [vmem:[#allocation5 + $0x280] sm:$0xff]
    %v1759 = vld [vmem:[#allocation5 + $0x288] sm:$0xff]
    %v1760 = vld [vmem:[#allocation5 + $0x290] sm:$0xff]
    %v1761 = vld [vmem:[#allocation5 + $0x298] sm:$0xff]
    %v1762 = vld [vmem:[#allocation5 + $0x2a0] sm:$0xff]
    %v1763 = vld [vmem:[#allocation5 + $0x2a8] sm:$0xff]
    %v1764 = vld [vmem:[#allocation5 + $0x2b0] sm:$0xff]
    %v1765 = vld [vmem:[#allocation5 + $0x2b8] sm:$0xff]
    %v1766 = vld [vmem:[#allocation5 + $0x2c0] sm:$0xff]
    %v1767 = vld [vmem:[#allocation5 + $0x2c8] sm:$0xff]
    %v1768 = vld [vmem:[#allocation5 + $0x2d0] sm:$0xff]
    %v1769 = vld [vmem:[#allocation5 + $0x2d8] sm:$0xff]
    %v1770 = vld [vmem:[#allocation5 + $0x2e0] sm:$0xff]
    %v1771 = vld [vmem:[#allocation5 + $0x2e8] sm:$0xff]
    %v1772 = vld [vmem:[#allocation5 + $0x2f0] sm:$0xff]
    %v1773 = vld [vmem:[#allocation5 + $0x2f8] sm:$0xff]
    %v1774 = vld [vmem:[#allocation5 + $0x300] sm:$0xff]
    %v1775 = vld [vmem:[#allocation5 + $0x308] sm:$0xff]
    %v1776 = vld [vmem:[#allocation5 + $0x310] sm:$0xff]
    %v1777 = vld [vmem:[#allocation5 + $0x318] sm:$0xff]
    %v1778 = vld [vmem:[#allocation5 + $0x320] sm:$0xff]
    %v1779 = vld [vmem:[#allocation5 + $0x328] sm:$0xff]
    %v1780 = vld [vmem:[#allocation5 + $0x330] sm:$0xff]
    %v1781 = vld [vmem:[#allocation5 + $0x338] sm:$0xff]
    %v1782 = vld [vmem:[#allocation5 + $0x340] sm:$0xff]
    %v1783 = vld [vmem:[#allocation5 + $0x348] sm:$0xff]
    %v1784 = vld [vmem:[#allocation5 + $0x350] sm:$0xff]
    %v1785 = vld [vmem:[#allocation5 + $0x358] sm:$0xff]
    %v1786 = vld [vmem:[#allocation5 + $0x360] sm:$0xff]
    %v1787 = vld [vmem:[#allocation5 + $0x368] sm:$0xff]
    %v1788 = vld [vmem:[#allocation5 + $0x370] sm:$0xff]
    %v1789 = vld [vmem:[#allocation5 + $0x378] sm:$0xff]
    %v1790 = vld [vmem:[#allocation5 + $0x380] sm:$0xff]
    %v1791 = vld [vmem:[#allocation5 + $0x388] sm:$0xff]
    %v1792 = vld [vmem:[#allocation5 + $0x390] sm:$0xff]
    %v1793 = vld [vmem:[#allocation5 + $0x398] sm:$0xff]
    %v1794 = vld [vmem:[#allocation5 + $0x3a0] sm:$0xff]
    %v1795 = vld [vmem:[#allocation5 + $0x3a8] sm:$0xff]
    %v1796 = vld [vmem:[#allocation5 + $0x3b0] sm:$0xff]
    %v1797 = vld [vmem:[#allocation5 + $0x3b8] sm:$0xff]
    %v1798 = vld [vmem:[#allocation5 + $0x3c0] sm:$0xff]
    %v1799 = vld [vmem:[#allocation5 + $0x3c8] sm:$0xff]
    %v1800 = vld [vmem:[#allocation5 + $0x3d0] sm:$0xff]
    %v1801 = vld [vmem:[#allocation5 + $0x3d8] sm:$0xff]
    %v1802 = vld [vmem:[#allocation5 + $0x3e0] sm:$0xff]
    %v1803 = vld [vmem:[#allocation5 + $0x3e8] sm:$0xff]
    %v1804 = vld [vmem:[#allocation5 + $0x3f0] sm:$0xff]
    %v1805 = vld [vmem:[#allocation5 + $0x3f8] sm:$0xff]
    %v1806 = vld [vmem:[%s6] sm:$0xf]
    %v1808 = vlaneseq
    %v1809 = vshrl.u32 %v1808, 7
    %v1810 = vsub.s32 0, %v1809
    %v1811 = vrot.slane %v1806, %v1810
    %v1812 = vlaneseq
    %v1813 = vshrl.u32 %v1812, 7
    %v1814 = vsub.s32 1, %v1813
    %v1815 = vrot.slane %v1806, %v1814
    %v1816 = vlaneseq
    %v1817 = vshrl.u32 %v1816, 7
    %v1818 = vsub.s32 2, %v1817
    %v1819 = vrot.slane %v1806, %v1818
    %v1820 = vlaneseq
    %v1821 = vshrl.u32 %v1820, 7
    %v1822 = vsub.s32 3, %v1821
    %v1823 = vrot.slane %v1806, %v1822
    %v1956 = vunpack.c.l.b16 %v1678
    %v1957 = vunpack.c.h.b16 %v1678
    %v1958 = vunpack.c.l.b16 %v1679
    %v1959 = vunpack.c.h.b16 %v1679
    %v1960 = vunpack.c.l.b16 %v1680
    %v1961 = vunpack.c.h.b16 %v1680
    %v1962 = vunpack.c.l.b16 %v1681
    %v1963 = vunpack.c.h.b16 %v1681
    %v1964 = vunpack.c.l.b16 %v1682
    %v1965 = vunpack.c.h.b16 %v1682
    %v1966 = vunpack.c.l.b16 %v1683
    %v1967 = vunpack.c.h.b16 %v1683
    %v1968 = vunpack.c.l.b16 %v1684
    %v1969 = vunpack.c.h.b16 %v1684
    %v1970 = vunpack.c.l.b16 %v1685
    %v1971 = vunpack.c.h.b16 %v1685
    %v1972 = vunpack.c.l.b16 %v1686
    %v1973 = vunpack.c.h.b16 %v1686
    %v1974 = vunpack.c.l.b16 %v1687
    %v1975 = vunpack.c.h.b16 %v1687
    %v1976 = vunpack.c.l.b16 %v1688
    %v1977 = vunpack.c.h.b16 %v1688
    %v1978 = vunpack.c.l.b16 %v1689
    %v1979 = vunpack.c.h.b16 %v1689
    %v1980 = vunpack.c.l.b16 %v1690
    %v1981 = vunpack.c.h.b16 %v1690
    %v1982 = vunpack.c.l.b16 %v1691
    %v1983 = vunpack.c.h.b16 %v1691
    %v1984 = vunpack.c.l.b16 %v1692
    %v1985 = vunpack.c.h.b16 %v1692
    %v1986 = vunpack.c.l.b16 %v1693
    %v1987 = vunpack.c.h.b16 %v1693
    %v1988 = vunpack.c.l.b16 %v1694
    %v1989 = vunpack.c.h.b16 %v1694
    %v1990 = vunpack.c.l.b16 %v1695
    %v1991 = vunpack.c.h.b16 %v1695
    %v1992 = vunpack.c.l.b16 %v1696
    %v1993 = vunpack.c.h.b16 %v1696
    %v1994 = vunpack.c.l.b16 %v1697
    %v1995 = vunpack.c.h.b16 %v1697
    %v1996 = vunpack.c.l.b16 %v1698
    %v1997 = vunpack.c.h.b16 %v1698
    %v1998 = vunpack.c.l.b16 %v1699
    %v1999 = vunpack.c.h.b16 %v1699
    %v2000 = vunpack.c.l.b16 %v1700
    %v2001 = vunpack.c.h.b16 %v1700
    %v2002 = vunpack.c.l.b16 %v1701
    %v2003 = vunpack.c.h.b16 %v1701
    %v2004 = vunpack.c.l.b16 %v1702
    %v2005 = vunpack.c.h.b16 %v1702
    %v2006 = vunpack.c.l.b16 %v1703
    %v2007 = vunpack.c.h.b16 %v1703
    %v2008 = vunpack.c.l.b16 %v1704
    %v2009 = vunpack.c.h.b16 %v1704
    %v2010 = vunpack.c.l.b16 %v1705
    %v2011 = vunpack.c.h.b16 %v1705
    %v2012 = vunpack.c.l.b16 %v1706
    %v2013 = vunpack.c.h.b16 %v1706
    %v2014 = vunpack.c.l.b16 %v1707
    %v2015 = vunpack.c.h.b16 %v1707
    %v2016 = vunpack.c.l.b16 %v1708
    %v2017 = vunpack.c.h.b16 %v1708
    %v2018 = vunpack.c.l.b16 %v1709
    %v2019 = vunpack.c.h.b16 %v1709
    %v2020 = vunpack.c.l.b16 %v1710
    %v2021 = vunpack.c.h.b16 %v1710
    %v2022 = vunpack.c.l.b16 %v1711
    %v2023 = vunpack.c.h.b16 %v1711
    %v2024 = vunpack.c.l.b16 %v1712
    %v2025 = vunpack.c.h.b16 %v1712
    %v2026 = vunpack.c.l.b16 %v1713
    %v2027 = vunpack.c.h.b16 %v1713
    %v2028 = vunpack.c.l.b16 %v1714
    %v2029 = vunpack.c.h.b16 %v1714
    %v2030 = vunpack.c.l.b16 %v1715
    %v2031 = vunpack.c.h.b16 %v1715
    %v2032 = vunpack.c.l.b16 %v1716
    %v2033 = vunpack.c.h.b16 %v1716
    %v2034 = vunpack.c.l.b16 %v1717
    %v2035 = vunpack.c.h.b16 %v1717
    %v2036 = vunpack.c.l.b16 %v1718
    %v2037 = vunpack.c.h.b16 %v1718
    %v2038 = vunpack.c.l.b16 %v1719
    %v2039 = vunpack.c.h.b16 %v1719
    %v2040 = vunpack.c.l.b16 %v1720
    %v2041 = vunpack.c.h.b16 %v1720
    %v2042 = vunpack.c.l.b16 %v1721
    %v2043 = vunpack.c.h.b16 %v1721
    %v2044 = vunpack.c.l.b16 %v1722
    %v2045 = vunpack.c.h.b16 %v1722
    %v2046 = vunpack.c.l.b16 %v1723
    %v2047 = vunpack.c.h.b16 %v1723
    %v2048 = vunpack.c.l.b16 %v1724
    %v2049 = vunpack.c.h.b16 %v1724
    %v2050 = vunpack.c.l.b16 %v1725
    %v2051 = vunpack.c.h.b16 %v1725
    %v2052 = vunpack.c.l.b16 %v1726
    %v2053 = vunpack.c.h.b16 %v1726
    %v2054 = vunpack.c.l.b16 %v1727
    %v2055 = vunpack.c.h.b16 %v1727
    %v2056 = vunpack.c.l.b16 %v1728
    %v2057 = vunpack.c.h.b16 %v1728
    %v2058 = vunpack.c.l.b16 %v1729
    %v2059 = vunpack.c.h.b16 %v1729
    %v2060 = vunpack.c.l.b16 %v1730
    %v2061 = vunpack.c.h.b16 %v1730
    %v2062 = vunpack.c.l.b16 %v1731
    %v2063 = vunpack.c.h.b16 %v1731
    %v2064 = vunpack.c.l.b16 %v1732
    %v2065 = vunpack.c.h.b16 %v1732
    %v2066 = vunpack.c.l.b16 %v1733
    %v2067 = vunpack.c.h.b16 %v1733
    %v2068 = vunpack.c.l.b16 %v1734
    %v2069 = vunpack.c.h.b16 %v1734
    %v2070 = vunpack.c.l.b16 %v1735
    %v2071 = vunpack.c.h.b16 %v1735
    %v2072 = vunpack.c.l.b16 %v1736
    %v2073 = vunpack.c.h.b16 %v1736
    %v2074 = vunpack.c.l.b16 %v1737
    %v2075 = vunpack.c.h.b16 %v1737
    %v2076 = vunpack.c.l.b16 %v1738
    %v2077 = vunpack.c.h.b16 %v1738
    %v2078 = vunpack.c.l.b16 %v1739
    %v2079 = vunpack.c.h.b16 %v1739
    %v2080 = vunpack.c.l.b16 %v1740
    %v2081 = vunpack.c.h.b16 %v1740
    %v2082 = vunpack.c.l.b16 %v1741
    %v2083 = vunpack.c.h.b16 %v1741
    %v2084 = vunpack.c.l.b16 %v1742
    %v2085 = vunpack.c.h.b16 %v1742
    %v2086 = vunpack.c.l.b16 %v1743
    %v2087 = vunpack.c.h.b16 %v1743
    %v2088 = vunpack.c.l.b16 %v1744
    %v2089 = vunpack.c.h.b16 %v1744
    %v2090 = vunpack.c.l.b16 %v1745
    %v2091 = vunpack.c.h.b16 %v1745
    %v2092 = vunpack.c.l.b16 %v1746
    %v2093 = vunpack.c.h.b16 %v1746
    %v2094 = vunpack.c.l.b16 %v1747
    %v2095 = vunpack.c.h.b16 %v1747
    %v2096 = vunpack.c.l.b16 %v1748
    %v2097 = vunpack.c.h.b16 %v1748
    %v2098 = vunpack.c.l.b16 %v1749
    %v2099 = vunpack.c.h.b16 %v1749
    %v2100 = vunpack.c.l.b16 %v1750
    %v2101 = vunpack.c.h.b16 %v1750
    %v2102 = vunpack.c.l.b16 %v1751
    %v2103 = vunpack.c.h.b16 %v1751
    %v2104 = vunpack.c.l.b16 %v1752
    %v2105 = vunpack.c.h.b16 %v1752
    %v2106 = vunpack.c.l.b16 %v1753
    %v2107 = vunpack.c.h.b16 %v1753
    %v2108 = vunpack.c.l.b16 %v1754
    %v2109 = vunpack.c.h.b16 %v1754
    %v2110 = vunpack.c.l.b16 %v1755
    %v2111 = vunpack.c.h.b16 %v1755
    %v2112 = vunpack.c.l.b16 %v1756
    %v2113 = vunpack.c.h.b16 %v1756
    %v2114 = vunpack.c.l.b16 %v1757
    %v2115 = vunpack.c.h.b16 %v1757
    %v2116 = vunpack.c.l.b16 %v1758
    %v2117 = vunpack.c.h.b16 %v1758
    %v2118 = vunpack.c.l.b16 %v1759
    %v2119 = vunpack.c.h.b16 %v1759
    %v2120 = vunpack.c.l.b16 %v1760
    %v2121 = vunpack.c.h.b16 %v1760
    %v2122 = vunpack.c.l.b16 %v1761
    %v2123 = vunpack.c.h.b16 %v1761
    %v2124 = vunpack.c.l.b16 %v1762
    %v2125 = vunpack.c.h.b16 %v1762
    %v2126 = vunpack.c.l.b16 %v1763
    %v2127 = vunpack.c.h.b16 %v1763
    %v2128 = vunpack.c.l.b16 %v1764
    %v2129 = vunpack.c.h.b16 %v1764
    %v2130 = vunpack.c.l.b16 %v1765
    %v2131 = vunpack.c.h.b16 %v1765
    %v2132 = vunpack.c.l.b16 %v1766
    %v2133 = vunpack.c.h.b16 %v1766
    %v2134 = vunpack.c.l.b16 %v1767
    %v2135 = vunpack.c.h.b16 %v1767
    %v2136 = vunpack.c.l.b16 %v1768
    %v2137 = vunpack.c.h.b16 %v1768
    %v2138 = vunpack.c.l.b16 %v1769
    %v2139 = vunpack.c.h.b16 %v1769
    %v2140 = vunpack.c.l.b16 %v1770
    %v2141 = vunpack.c.h.b16 %v1770
    %v2142 = vunpack.c.l.b16 %v1771
    %v2143 = vunpack.c.h.b16 %v1771
    %v2144 = vunpack.c.l.b16 %v1772
    %v2145 = vunpack.c.h.b16 %v1772
    %v2146 = vunpack.c.l.b16 %v1773
    %v2147 = vunpack.c.h.b16 %v1773
    %v2148 = vunpack.c.l.b16 %v1774
    %v2149 = vunpack.c.h.b16 %v1774
    %v2150 = vunpack.c.l.b16 %v1775
    %v2151 = vunpack.c.h.b16 %v1775
    %v2152 = vunpack.c.l.b16 %v1776
    %v2153 = vunpack.c.h.b16 %v1776
    %v2154 = vunpack.c.l.b16 %v1777
    %v2155 = vunpack.c.h.b16 %v1777
    %v2156 = vunpack.c.l.b16 %v1778
    %v2157 = vunpack.c.h.b16 %v1778
    %v2158 = vunpack.c.l.b16 %v1779
    %v2159 = vunpack.c.h.b16 %v1779
    %v2160 = vunpack.c.l.b16 %v1780
    %v2161 = vunpack.c.h.b16 %v1780
    %v2162 = vunpack.c.l.b16 %v1781
    %v2163 = vunpack.c.h.b16 %v1781
    %v2164 = vunpack.c.l.b16 %v1782
    %v2165 = vunpack.c.h.b16 %v1782
    %v2166 = vunpack.c.l.b16 %v1783
    %v2167 = vunpack.c.h.b16 %v1783
    %v2168 = vunpack.c.l.b16 %v1784
    %v2169 = vunpack.c.h.b16 %v1784
    %v2170 = vunpack.c.l.b16 %v1785
    %v2171 = vunpack.c.h.b16 %v1785
    %v2172 = vunpack.c.l.b16 %v1786
    %v2173 = vunpack.c.h.b16 %v1786
    %v2174 = vunpack.c.l.b16 %v1787
    %v2175 = vunpack.c.h.b16 %v1787
    %v2176 = vunpack.c.l.b16 %v1788
    %v2177 = vunpack.c.h.b16 %v1788
    %v2178 = vunpack.c.l.b16 %v1789
    %v2179 = vunpack.c.h.b16 %v1789
    %v2180 = vunpack.c.l.b16 %v1790
    %v2181 = vunpack.c.h.b16 %v1790
    %v2182 = vunpack.c.l.b16 %v1791
    %v2183 = vunpack.c.h.b16 %v1791
    %v2184 = vunpack.c.l.b16 %v1792
    %v2185 = vunpack.c.h.b16 %v1792
    %v2186 = vunpack.c.l.b16 %v1793
    %v2187 = vunpack.c.h.b16 %v1793
    %v2188 = vunpack.c.l.b16 %v1794
    %v2189 = vunpack.c.h.b16 %v1794
    %v2190 = vunpack.c.l.b16 %v1795
    %v2191 = vunpack.c.h.b16 %v1795
    %v2192 = vunpack.c.l.b16 %v1796
    %v2193 = vunpack.c.h.b16 %v1796
    %v2194 = vunpack.c.l.b16 %v1797
    %v2195 = vunpack.c.h.b16 %v1797
    %v2196 = vunpack.c.l.b16 %v1798
    %v2197 = vunpack.c.h.b16 %v1798
    %v2198 = vunpack.c.l.b16 %v1799
    %v2199 = vunpack.c.h.b16 %v1799
    %v2200 = vunpack.c.l.b16 %v1800
    %v2201 = vunpack.c.h.b16 %v1800
    %v2202 = vunpack.c.l.b16 %v1801
    %v2203 = vunpack.c.h.b16 %v1801
    %v2204 = vunpack.c.l.b16 %v1802
    %v2205 = vunpack.c.h.b16 %v1802
    %v2206 = vunpack.c.l.b16 %v1803
    %v2207 = vunpack.c.h.b16 %v1803
    %v2208 = vunpack.c.l.b16 %v1804
    %v2209 = vunpack.c.h.b16 %v1804
    %v2210 = vunpack.c.l.b16 %v1805
    %v2211 = vunpack.c.h.b16 %v1805
    %v2212 = vpack.c.b16 %v1960, %v1956
    %v2213 = vpack.c.b16 %v1961, %v1957
    %v2214 = vpack.c.b16 %v1962, %v1958
    %v2215 = vpack.c.b16 %v1963, %v1959
    %v2216 = vpack.c.b16 %v1968, %v1964
    %v2217 = vpack.c.b16 %v1969, %v1965
    %v2218 = vpack.c.b16 %v1970, %v1966
    %v2219 = vpack.c.b16 %v1971, %v1967
    %v2220 = vpack.c.b16 %v1976, %v1972
    %v2221 = vpack.c.b16 %v1977, %v1973
    %v2222 = vpack.c.b16 %v1978, %v1974
    %v2223 = vpack.c.b16 %v1979, %v1975
    %v2224 = vpack.c.b16 %v1984, %v1980
    %v2225 = vpack.c.b16 %v1985, %v1981
    %v2226 = vpack.c.b16 %v1986, %v1982
    %v2227 = vpack.c.b16 %v1987, %v1983
    %v2228 = vpack.c.b16 %v1992, %v1988
    %v2229 = vpack.c.b16 %v1993, %v1989
    %v2230 = vpack.c.b16 %v1994, %v1990
    %v2231 = vpack.c.b16 %v1995, %v1991
    %v2232 = vpack.c.b16 %v2000, %v1996
    %v2233 = vpack.c.b16 %v2001, %v1997
    %v2234 = vpack.c.b16 %v2002, %v1998
    %v2235 = vpack.c.b16 %v2003, %v1999
    %v2236 = vpack.c.b16 %v2008, %v2004
    %v2237 = vpack.c.b16 %v2009, %v2005
    %v2238 = vpack.c.b16 %v2010, %v2006
    %v2239 = vpack.c.b16 %v2011, %v2007
    %v2240 = vpack.c.b16 %v2016, %v2012
    %v2241 = vpack.c.b16 %v2017, %v2013
    %v2242 = vpack.c.b16 %v2018, %v2014
    %v2243 = vpack.c.b16 %v2019, %v2015
    %v2244 = vpack.c.b16 %v2024, %v2020
    %v2245 = vpack.c.b16 %v2025, %v2021
    %v2246 = vpack.c.b16 %v2026, %v2022
    %v2247 = vpack.c.b16 %v2027, %v2023
    %v2248 = vpack.c.b16 %v2032, %v2028
    %v2249 = vpack.c.b16 %v2033, %v2029
    %v2250 = vpack.c.b16 %v2034, %v2030
    %v2251 = vpack.c.b16 %v2035, %v2031
    %v2252 = vpack.c.b16 %v2040, %v2036
    %v2253 = vpack.c.b16 %v2041, %v2037
    %v2254 = vpack.c.b16 %v2042, %v2038
    %v2255 = vpack.c.b16 %v2043, %v2039
    %v2256 = vpack.c.b16 %v2048, %v2044
    %v2257 = vpack.c.b16 %v2049, %v2045
    %v2258 = vpack.c.b16 %v2050, %v2046
    %v2259 = vpack.c.b16 %v2051, %v2047
    %v2260 = vpack.c.b16 %v2056, %v2052
    %v2261 = vpack.c.b16 %v2057, %v2053
    %v2262 = vpack.c.b16 %v2058, %v2054
    %v2263 = vpack.c.b16 %v2059, %v2055
    %v2264 = vpack.c.b16 %v2064, %v2060
    %v2265 = vpack.c.b16 %v2065, %v2061
    %v2266 = vpack.c.b16 %v2066, %v2062
    %v2267 = vpack.c.b16 %v2067, %v2063
    %v2268 = vpack.c.b16 %v2072, %v2068
    %v2269 = vpack.c.b16 %v2073, %v2069
    %v2270 = vpack.c.b16 %v2074, %v2070
    %v2271 = vpack.c.b16 %v2075, %v2071
    %v2272 = vpack.c.b16 %v2080, %v2076
    %v2273 = vpack.c.b16 %v2081, %v2077
    %v2274 = vpack.c.b16 %v2082, %v2078
    %v2275 = vpack.c.b16 %v2083, %v2079
    %v2276 = vpack.c.b16 %v2088, %v2084
    %v2277 = vpack.c.b16 %v2089, %v2085
    %v2278 = vpack.c.b16 %v2090, %v2086
    %v2279 = vpack.c.b16 %v2091, %v2087
    %v2280 = vpack.c.b16 %v2096, %v2092
    %v2281 = vpack.c.b16 %v2097, %v2093
    %v2282 = vpack.c.b16 %v2098, %v2094
    %v2283 = vpack.c.b16 %v2099, %v2095
    %v2284 = vpack.c.b16 %v2104, %v2100
    %v2285 = vpack.c.b16 %v2105, %v2101
    %v2286 = vpack.c.b16 %v2106, %v2102
    %v2287 = vpack.c.b16 %v2107, %v2103
    %v2288 = vpack.c.b16 %v2112, %v2108
    %v2289 = vpack.c.b16 %v2113, %v2109
    %v2290 = vpack.c.b16 %v2114, %v2110
    %v2291 = vpack.c.b16 %v2115, %v2111
    %v2292 = vpack.c.b16 %v2120, %v2116
    %v2293 = vpack.c.b16 %v2121, %v2117
    %v2294 = vpack.c.b16 %v2122, %v2118
    %v2295 = vpack.c.b16 %v2123, %v2119
    %v2296 = vpack.c.b16 %v2128, %v2124
    %v2297 = vpack.c.b16 %v2129, %v2125
    %v2298 = vpack.c.b16 %v2130, %v2126
    %v2299 = vpack.c.b16 %v2131, %v2127
    %v2300 = vpack.c.b16 %v2136, %v2132
    %v2301 = vpack.c.b16 %v2137, %v2133
    %v2302 = vpack.c.b16 %v2138, %v2134
    %v2303 = vpack.c.b16 %v2139, %v2135
    %v2304 = vpack.c.b16 %v2144, %v2140
    %v2305 = vpack.c.b16 %v2145, %v2141
    %v2306 = vpack.c.b16 %v2146, %v2142
    %v2307 = vpack.c.b16 %v2147, %v2143
    %v2308 = vpack.c.b16 %v2152, %v2148
    %v2309 = vpack.c.b16 %v2153, %v2149
    %v2310 = vpack.c.b16 %v2154, %v2150
    %v2311 = vpack.c.b16 %v2155, %v2151
    %v2312 = vpack.c.b16 %v2160, %v2156
    %v2313 = vpack.c.b16 %v2161, %v2157
    %v2314 = vpack.c.b16 %v2162, %v2158
    %v2315 = vpack.c.b16 %v2163, %v2159
    %v2316 = vpack.c.b16 %v2168, %v2164
    %v2317 = vpack.c.b16 %v2169, %v2165
    %v2318 = vpack.c.b16 %v2170, %v2166
    %v2319 = vpack.c.b16 %v2171, %v2167
    %v2320 = vpack.c.b16 %v2176, %v2172
    %v2321 = vpack.c.b16 %v2177, %v2173
    %v2322 = vpack.c.b16 %v2178, %v2174
    %v2323 = vpack.c.b16 %v2179, %v2175
    %v2324 = vpack.c.b16 %v2184, %v2180
    %v2325 = vpack.c.b16 %v2185, %v2181
    %v2326 = vpack.c.b16 %v2186, %v2182
    %v2327 = vpack.c.b16 %v2187, %v2183
    %v2328 = vpack.c.b16 %v2192, %v2188
    %v2329 = vpack.c.b16 %v2193, %v2189
    %v2330 = vpack.c.b16 %v2194, %v2190
    %v2331 = vpack.c.b16 %v2195, %v2191
    %v2332 = vpack.c.b16 %v2200, %v2196
    %v2333 = vpack.c.b16 %v2201, %v2197
    %v2334 = vpack.c.b16 %v2202, %v2198
    %v2335 = vpack.c.b16 %v2203, %v2199
    %v2336 = vpack.c.b16 %v2208, %v2204
    %v2337 = vpack.c.b16 %v2209, %v2205
    %v2338 = vpack.c.b16 %v2210, %v2206
    %v2339 = vpack.c.b16 %v2211, %v2207
    %2468 = vmatprep.subr.bf16.mxu0 %v2241
    %2469 = vmatpush1.bf16.msra.mxu0 %v2240
    %2470 = vmatprep.subr.bf16.mxu0 %v2237
    %2471 = vmatpush1.bf16.msra.mxu0 %v2236
    %2472 = vmatprep.subr.bf16.mxu0 %v2233
    %2473 = vmatpush1.bf16.msra.mxu0 %v2232
    %2474 = vmatprep.subr.bf16.mxu0 %v2229
    %2475 = vmatpush1.bf16.msra.mxu0 %v2228
    %2476 = vmatprep.subr.bf16.mxu0 %v2225
    %2477 = vmatpush1.bf16.msra.mxu0 %v2224
    %2478 = vmatprep.subr.bf16.mxu0 %v2221
    %2479 = vmatpush1.bf16.msra.mxu0 %v2220
    %2480 = vmatprep.subr.bf16.mxu0 %v2217
    %2481 = vmatpush1.bf16.msra.mxu0 %v2216
    %2482 = vmatprep.subr.bf16.mxu0 %v2213
    %2483 = vmatpush1.bf16.msra.mxu0 %v2212
    %2484 = vmatprep.subr.bf16.mxu0 %v2273
    %2485 = vmatpush2.bf16.msra.mxu0 %v2272
    %2486 = vmatprep.subr.bf16.mxu0 %v2269
    %2487 = vmatpush2.bf16.msra.mxu0 %v2268
    %2488 = vmatprep.subr.bf16.mxu0 %v2265
    %2489 = vmatpush2.bf16.msra.mxu0 %v2264
    %2490 = vmatprep.subr.bf16.mxu0 %v2261
    %2491 = vmatpush2.bf16.msra.mxu0 %v2260
    %2492 = vmatprep.subr.bf16.mxu0 %v2257
    %2493 = vmatpush2.bf16.msra.mxu0 %v2256
    %2494 = vmatprep.subr.bf16.mxu0 %v2253
    %2495 = vmatpush2.bf16.msra.mxu0 %v2252
    %2496 = vmatprep.subr.bf16.mxu0 %v2249
    %2497 = vmatpush2.bf16.msra.mxu0 %v2248
    %2498 = vmatprep.subr.bf16.mxu0 %v2245
    %2499 = vmatpush2.bf16.msra.mxu0 %v2244
    %2500 = vmatprep.mubr.bf16.mxu0 %v1675
    %2501 = vmatmul.mubr.bf16.gmra.mxu0 %v1674
    %v2502 = vpop.f32.mrf.mxu0
    %v2503 = vadd.f32 %v1811, %v2502
    %v2504 = vpop.f32.mrf.mxu0
    %v2505 = vadd.f32 %v1815, %v2504
    %v2506 = vpop.f32.mrf.mxu0
    %v2507 = vpop.f32.mrf.mxu0
    %2508 = vdwg.mxu0
    %2509 = vmatprep.subr.bf16.mxu0 %v2305
    %2510 = vmatpush1.bf16.msra.mxu0 %v2304
    %2511 = vmatprep.subr.bf16.mxu0 %v2301
    %2512 = vmatpush1.bf16.msra.mxu0 %v2300
    %2513 = vmatprep.subr.bf16.mxu0 %v2297
    %2514 = vmatpush1.bf16.msra.mxu0 %v2296
    %2515 = vmatprep.subr.bf16.mxu0 %v2293
    %2516 = vmatpush1.bf16.msra.mxu0 %v2292
    %2517 = vmatprep.subr.bf16.mxu0 %v2289
    %2518 = vmatpush1.bf16.msra.mxu0 %v2288
    %2519 = vmatprep.subr.bf16.mxu0 %v2285
    %2520 = vmatpush1.bf16.msra.mxu0 %v2284
    %2521 = vmatprep.subr.bf16.mxu0 %v2281
    %2522 = vmatpush1.bf16.msra.mxu0 %v2280
    %2523 = vmatprep.subr.bf16.mxu0 %v2277
    %2524 = vmatpush1.bf16.msra.mxu0 %v2276
    %2525 = vmatprep.subr.bf16.mxu0 %v2337
    %2526 = vmatpush2.bf16.msra.mxu0 %v2336
    %2527 = vmatprep.subr.bf16.mxu0 %v2333
    %2528 = vmatpush2.bf16.msra.mxu0 %v2332
    %2529 = vmatprep.subr.bf16.mxu0 %v2329
    %2530 = vmatpush2.bf16.msra.mxu0 %v2328
    %2531 = vmatprep.subr.bf16.mxu0 %v2325
    %2532 = vmatpush2.bf16.msra.mxu0 %v2324
    %2533 = vmatprep.subr.bf16.mxu0 %v2321
    %2534 = vmatpush2.bf16.msra.mxu0 %v2320
    %2535 = vmatprep.subr.bf16.mxu0 %v2317
    %2536 = vmatpush2.bf16.msra.mxu0 %v2316
    %2537 = vmatprep.subr.bf16.mxu0 %v2313
    %2538 = vmatpush2.bf16.msra.mxu0 %v2312
    %2539 = vmatprep.subr.bf16.mxu0 %v2309
    %2540 = vmatpush2.bf16.msra.mxu0 %v2308
    %2541 = vmatprep.mubr.bf16.mxu0 %v1677
    %2542 = vmatmul.mubr.bf16.gmra.mxu0 %v1676
    %v2543 = vpop.f32.mrf.mxu0
    %v2544 = vadd.f32 %v2503, %v2543
    %v2545 = vpop.f32.mrf.mxu0
    %v2546 = vadd.f32 %v2505, %v2545
    %v2547 = vpop.f32.mrf.mxu0
    %v2548 = vpop.f32.mrf.mxu0
    %2549 = vdwg.mxu0
    %2550 = vmatprep.subr.bf16.mxu0 %v2243
    %2551 = vmatpush1.bf16.msra.mxu0 %v2242
    %2552 = vmatprep.subr.bf16.mxu0 %v2239
    %2553 = vmatpush1.bf16.msra.mxu0 %v2238
    %2554 = vmatprep.subr.bf16.mxu0 %v2235
    %2555 = vmatpush1.bf16.msra.mxu0 %v2234
    %2556 = vmatprep.subr.bf16.mxu0 %v2231
    %2557 = vmatpush1.bf16.msra.mxu0 %v2230
    %2558 = vmatprep.subr.bf16.mxu0 %v2227
    %2559 = vmatpush1.bf16.msra.mxu0 %v2226
    %2560 = vmatprep.subr.bf16.mxu0 %v2223
    %2561 = vmatpush1.bf16.msra.mxu0 %v2222
    %2562 = vmatprep.subr.bf16.mxu0 %v2219
    %2563 = vmatpush1.bf16.msra.mxu0 %v2218
    %2564 = vmatprep.subr.bf16.mxu0 %v2215
    %2565 = vmatpush1.bf16.msra.mxu0 %v2214
    %2566 = vmatprep.subr.bf16.mxu0 %v2275
    %2567 = vmatpush2.bf16.msra.mxu0 %v2274
    %2568 = vmatprep.subr.bf16.mxu0 %v2271
    %2569 = vmatpush2.bf16.msra.mxu0 %v2270
    %2570 = vmatprep.subr.bf16.mxu0 %v2267
    %2571 = vmatpush2.bf16.msra.mxu0 %v2266
    %2572 = vmatprep.subr.bf16.mxu0 %v2263
    %2573 = vmatpush2.bf16.msra.mxu0 %v2262
    %2574 = vmatprep.subr.bf16.mxu0 %v2259
    %2575 = vmatpush2.bf16.msra.mxu0 %v2258
    %2576 = vmatprep.subr.bf16.mxu0 %v2255
    %2577 = vmatpush2.bf16.msra.mxu0 %v2254
    %2578 = vmatprep.subr.bf16.mxu0 %v2251
    %2579 = vmatpush2.bf16.msra.mxu0 %v2250
    %2580 = vmatprep.subr.bf16.mxu0 %v2247
    %2581 = vmatpush2.bf16.msra.mxu0 %v2246
    %2582 = vmatprep.mubr.bf16.mxu0 %v1675
    %2583 = vmatmul.mubr.bf16.gmra.mxu0 %v1674
    %v2584 = vpop.f32.mrf.mxu0
    %v2585 = vadd.f32 %v1819, %v2584
    %v2586 = vpop.f32.mrf.mxu0
    %v2587 = vadd.f32 %v1823, %v2586
    %v2588 = vpop.f32.mrf.mxu0
    %v2589 = vpop.f32.mrf.mxu0
    %2590 = vdwg.mxu0
    %2591 = vmatprep.subr.bf16.mxu0 %v2307
    %2592 = vmatpush1.bf16.msra.mxu0 %v2306
    %2593 = vmatprep.subr.bf16.mxu0 %v2303
    %2594 = vmatpush1.bf16.msra.mxu0 %v2302
    %2595 = vmatprep.subr.bf16.mxu0 %v2299
    %2596 = vmatpush1.bf16.msra.mxu0 %v2298
    %2597 = vmatprep.subr.bf16.mxu0 %v2295
    %2598 = vmatpush1.bf16.msra.mxu0 %v2294
    %2599 = vmatprep.subr.bf16.mxu0 %v2291
    %2600 = vmatpush1.bf16.msra.mxu0 %v2290
    %2601 = vmatprep.subr.bf16.mxu0 %v2287
    %2602 = vmatpush1.bf16.msra.mxu0 %v2286
    %2603 = vmatprep.subr.bf16.mxu0 %v2283
    %2604 = vmatpush1.bf16.msra.mxu0 %v2282
    %2605 = vmatprep.subr.bf16.mxu0 %v2279
    %2606 = vmatpush1.bf16.msra.mxu0 %v2278
    %2607 = vmatprep.subr.bf16.mxu0 %v2339
    %2608 = vmatpush2.bf16.msra.mxu0 %v2338
    %2609 = vmatprep.subr.bf16.mxu0 %v2335
    %2610 = vmatpush2.bf16.msra.mxu0 %v2334
    %2611 = vmatprep.subr.bf16.mxu0 %v2331
    %2612 = vmatpush2.bf16.msra.mxu0 %v2330
    %2613 = vmatprep.subr.bf16.mxu0 %v2327
    %2614 = vmatpush2.bf16.msra.mxu0 %v2326
    %2615 = vmatprep.subr.bf16.mxu0 %v2323
    %2616 = vmatpush2.bf16.msra.mxu0 %v2322
    %2617 = vmatprep.subr.bf16.mxu0 %v2319
    %2618 = vmatpush2.bf16.msra.mxu0 %v2318
    %2619 = vmatprep.subr.bf16.mxu0 %v2315
    %2620 = vmatpush2.bf16.msra.mxu0 %v2314
    %2621 = vmatprep.subr.bf16.mxu0 %v2311
    %2622 = vmatpush2.bf16.msra.mxu0 %v2310
    %2623 = vmatprep.mubr.bf16.mxu0 %v1677
    %2624 = vmatmul.mubr.bf16.gmra.mxu0 %v1676
    %v2625 = vpop.f32.mrf.mxu0
    %v2626 = vadd.f32 %v2585, %v2625
    %v2627 = vpop.f32.mrf.mxu0
    %v2628 = vadd.f32 %v2587, %v2627
    %v2629 = vpop.f32.mrf.mxu0
    %v2630 = vpop.f32.mrf.mxu0
    %2631 = vdwg.mxu0
    %vm2632 = vcmp.gt.f32.partialorder %v2544, 0.0
    %vm2633 = vcmp.gt.f32.partialorder %v2546, 0.0
    %vm2634 = vcmp.gt.f32.partialorder %v2626, 0.0
    %vm2635 = vcmp.gt.f32.partialorder %v2628, 0.0
    %v2636 = vmul.f32 %v2544, 0.2
    %v2637 = vmul.f32 %v2546, 0.2
    %v2638 = vmul.f32 %v2626, 0.2
    %v2639 = vmul.f32 %v2628, 0.2
    %v2640 = vsel %vm2632, %v2544, %v2636
    %v2641 = vsel %vm2633, %v2546, %v2637
    %v2642 = vsel %vm2634, %v2626, %v2638
    %v2643 = vsel %vm2635, %v2628, %v2639
    %v2644 = vpack.c.bf16 %v2640, %v2640
    %v2645 = vpack.c.bf16 %v2641, %v2641
    %v2646 = vpack.c.bf16 %v2642, %v2642
    %v2647 = vpack.c.bf16 %v2643, %v2643
    %v2648 = vld [vmem:[#allocation7] sm:$0xff]
    %v2649 = vld [vmem:[#allocation7 + $0x8] sm:$0xff]
    %v2650 = vld [vmem:[#allocation7 + $0x10] sm:$0xff]
    %v2651 = vld [vmem:[#allocation7 + $0x18] sm:$0xff]
    %v2652 = vld [vmem:[#allocation7 + $0x20] sm:$0xff]
    %v2653 = vld [vmem:[#allocation7 + $0x28] sm:$0xff]
    %v2654 = vld [vmem:[#allocation7 + $0x30] sm:$0xff]
    %v2655 = vld [vmem:[#allocation7 + $0x38] sm:$0xff]
    %v2656 = vld [vmem:[#allocation7 + $0x40] sm:$0xff]
    %v2657 = vld [vmem:[#allocation7 + $0x48] sm:$0xff]
    %v2658 = vld [vmem:[#allocation7 + $0x50] sm:$0xff]
    %v2659 = vld [vmem:[#allocation7 + $0x58] sm:$0xff]
    %v2660 = vld [vmem:[#allocation7 + $0x60] sm:$0xff]
    %v2661 = vld [vmem:[#allocation7 + $0x68] sm:$0xff]
    %v2662 = vld [vmem:[#allocation7 + $0x70] sm:$0xff]
    %v2663 = vld [vmem:[#allocation7 + $0x78] sm:$0xff]
    %v2664 = vld [vmem:[#allocation7 + $0x80] sm:$0xff]
    %v2665 = vld [vmem:[#allocation7 + $0x88] sm:$0xff]
    %v2666 = vld [vmem:[#allocation7 + $0x90] sm:$0xff]
    %v2667 = vld [vmem:[#allocation7 + $0x98] sm:$0xff]
    %v2668 = vld [vmem:[#allocation7 + $0xa0] sm:$0xff]
    %v2669 = vld [vmem:[#allocation7 + $0xa8] sm:$0xff]
    %v2670 = vld [vmem:[#allocation7 + $0xb0] sm:$0xff]
    %v2671 = vld [vmem:[#allocation7 + $0xb8] sm:$0xff]
    %v2672 = vld [vmem:[#allocation7 + $0xc0] sm:$0xff]
    %v2673 = vld [vmem:[#allocation7 + $0xc8] sm:$0xff]
    %v2674 = vld [vmem:[#allocation7 + $0xd0] sm:$0xff]
    %v2675 = vld [vmem:[#allocation7 + $0xd8] sm:$0xff]
    %v2676 = vld [vmem:[#allocation7 + $0xe0] sm:$0xff]
    %v2677 = vld [vmem:[#allocation7 + $0xe8] sm:$0xff]
    %v2678 = vld [vmem:[#allocation7 + $0xf0] sm:$0xff]
    %v2679 = vld [vmem:[#allocation7 + $0xf8] sm:$0xff]
    %v2680 = vld [vmem:[#allocation7 + $0x100] sm:$0xff]
    %v2681 = vld [vmem:[#allocation7 + $0x108] sm:$0xff]
    %v2682 = vld [vmem:[#allocation7 + $0x110] sm:$0xff]
    %v2683 = vld [vmem:[#allocation7 + $0x118] sm:$0xff]
    %v2684 = vld [vmem:[#allocation7 + $0x120] sm:$0xff]
    %v2685 = vld [vmem:[#allocation7 + $0x128] sm:$0xff]
    %v2686 = vld [vmem:[#allocation7 + $0x130] sm:$0xff]
    %v2687 = vld [vmem:[#allocation7 + $0x138] sm:$0xff]
    %v2688 = vld [vmem:[#allocation7 + $0x140] sm:$0xff]
    %v2689 = vld [vmem:[#allocation7 + $0x148] sm:$0xff]
    %v2690 = vld [vmem:[#allocation7 + $0x150] sm:$0xff]
    %v2691 = vld [vmem:[#allocation7 + $0x158] sm:$0xff]
    %v2692 = vld [vmem:[#allocation7 + $0x160] sm:$0xff]
    %v2693 = vld [vmem:[#allocation7 + $0x168] sm:$0xff]
    %v2694 = vld [vmem:[#allocation7 + $0x170] sm:$0xff]
    %v2695 = vld [vmem:[#allocation7 + $0x178] sm:$0xff]
    %v2696 = vld [vmem:[#allocation7 + $0x180] sm:$0xff]
    %v2697 = vld [vmem:[#allocation7 + $0x188] sm:$0xff]
    %v2698 = vld [vmem:[#allocation7 + $0x190] sm:$0xff]
    %v2699 = vld [vmem:[#allocation7 + $0x198] sm:$0xff]
    %v2700 = vld [vmem:[#allocation7 + $0x1a0] sm:$0xff]
    %v2701 = vld [vmem:[#allocation7 + $0x1a8] sm:$0xff]
    %v2702 = vld [vmem:[#allocation7 + $0x1b0] sm:$0xff]
    %v2703 = vld [vmem:[#allocation7 + $0x1b8] sm:$0xff]
    %v2704 = vld [vmem:[#allocation7 + $0x1c0] sm:$0xff]
    %v2705 = vld [vmem:[#allocation7 + $0x1c8] sm:$0xff]
    %v2706 = vld [vmem:[#allocation7 + $0x1d0] sm:$0xff]
    %v2707 = vld [vmem:[#allocation7 + $0x1d8] sm:$0xff]
    %v2708 = vld [vmem:[#allocation7 + $0x1e0] sm:$0xff]
    %v2709 = vld [vmem:[#allocation7 + $0x1e8] sm:$0xff]
    %v2710 = vld [vmem:[#allocation7 + $0x1f0] sm:$0xff]
    %v2711 = vld [vmem:[#allocation7 + $0x1f8] sm:$0xff]
    %v2712 = vld [vmem:[#allocation7 + $0x200] sm:$0xff]
    %v2713 = vld [vmem:[#allocation7 + $0x208] sm:$0xff]
    %v2714 = vld [vmem:[#allocation7 + $0x210] sm:$0xff]
    %v2715 = vld [vmem:[#allocation7 + $0x218] sm:$0xff]
    %v2716 = vld [vmem:[#allocation7 + $0x220] sm:$0xff]
    %v2717 = vld [vmem:[#allocation7 + $0x228] sm:$0xff]
    %v2718 = vld [vmem:[#allocation7 + $0x230] sm:$0xff]
    %v2719 = vld [vmem:[#allocation7 + $0x238] sm:$0xff]
    %v2720 = vld [vmem:[#allocation7 + $0x240] sm:$0xff]
    %v2721 = vld [vmem:[#allocation7 + $0x248] sm:$0xff]
    %v2722 = vld [vmem:[#allocation7 + $0x250] sm:$0xff]
    %v2723 = vld [vmem:[#allocation7 + $0x258] sm:$0xff]
    %v2724 = vld [vmem:[#allocation7 + $0x260] sm:$0xff]
    %v2725 = vld [vmem:[#allocation7 + $0x268] sm:$0xff]
    %v2726 = vld [vmem:[#allocation7 + $0x270] sm:$0xff]
    %v2727 = vld [vmem:[#allocation7 + $0x278] sm:$0xff]
    %v2728 = vld [vmem:[#allocation7 + $0x280] sm:$0xff]
    %v2729 = vld [vmem:[#allocation7 + $0x288] sm:$0xff]
    %v2730 = vld [vmem:[#allocation7 + $0x290] sm:$0xff]
    %v2731 = vld [vmem:[#allocation7 + $0x298] sm:$0xff]
    %v2732 = vld [vmem:[#allocation7 + $0x2a0] sm:$0xff]
    %v2733 = vld [vmem:[#allocation7 + $0x2a8] sm:$0xff]
    %v2734 = vld [vmem:[#allocation7 + $0x2b0] sm:$0xff]
    %v2735 = vld [vmem:[#allocation7 + $0x2b8] sm:$0xff]
    %v2736 = vld [vmem:[#allocation7 + $0x2c0] sm:$0xff]
    %v2737 = vld [vmem:[#allocation7 + $0x2c8] sm:$0xff]
    %v2738 = vld [vmem:[#allocation7 + $0x2d0] sm:$0xff]
    %v2739 = vld [vmem:[#allocation7 + $0x2d8] sm:$0xff]
    %v2740 = vld [vmem:[#allocation7 + $0x2e0] sm:$0xff]
    %v2741 = vld [vmem:[#allocation7 + $0x2e8] sm:$0xff]
    %v2742 = vld [vmem:[#allocation7 + $0x2f0] sm:$0xff]
    %v2743 = vld [vmem:[#allocation7 + $0x2f8] sm:$0xff]
    %v2744 = vld [vmem:[#allocation7 + $0x300] sm:$0xff]
    %v2745 = vld [vmem:[#allocation7 + $0x308] sm:$0xff]
    %v2746 = vld [vmem:[#allocation7 + $0x310] sm:$0xff]
    %v2747 = vld [vmem:[#allocation7 + $0x318] sm:$0xff]
    %v2748 = vld [vmem:[#allocation7 + $0x320] sm:$0xff]
    %v2749 = vld [vmem:[#allocation7 + $0x328] sm:$0xff]
    %v2750 = vld [vmem:[#allocation7 + $0x330] sm:$0xff]
    %v2751 = vld [vmem:[#allocation7 + $0x338] sm:$0xff]
    %v2752 = vld [vmem:[#allocation7 + $0x340] sm:$0xff]
    %v2753 = vld [vmem:[#allocation7 + $0x348] sm:$0xff]
    %v2754 = vld [vmem:[#allocation7 + $0x350] sm:$0xff]
    %v2755 = vld [vmem:[#allocation7 + $0x358] sm:$0xff]
    %v2756 = vld [vmem:[#allocation7 + $0x360] sm:$0xff]
    %v2757 = vld [vmem:[#allocation7 + $0x368] sm:$0xff]
    %v2758 = vld [vmem:[#allocation7 + $0x370] sm:$0xff]
    %v2759 = vld [vmem:[#allocation7 + $0x378] sm:$0xff]
    %v2760 = vld [vmem:[#allocation7 + $0x380] sm:$0xff]
    %v2761 = vld [vmem:[#allocation7 + $0x388] sm:$0xff]
    %v2762 = vld [vmem:[#allocation7 + $0x390] sm:$0xff]
    %v2763 = vld [vmem:[#allocation7 + $0x398] sm:$0xff]
    %v2764 = vld [vmem:[#allocation7 + $0x3a0] sm:$0xff]
    %v2765 = vld [vmem:[#allocation7 + $0x3a8] sm:$0xff]
    %v2766 = vld [vmem:[#allocation7 + $0x3b0] sm:$0xff]
    %v2767 = vld [vmem:[#allocation7 + $0x3b8] sm:$0xff]
    %v2768 = vld [vmem:[#allocation7 + $0x3c0] sm:$0xff]
    %v2769 = vld [vmem:[#allocation7 + $0x3c8] sm:$0xff]
    %v2770 = vld [vmem:[#allocation7 + $0x3d0] sm:$0xff]
    %v2771 = vld [vmem:[#allocation7 + $0x3d8] sm:$0xff]
    %v2772 = vld [vmem:[#allocation7 + $0x3e0] sm:$0xff]
    %v2773 = vld [vmem:[#allocation7 + $0x3e8] sm:$0xff]
    %v2774 = vld [vmem:[#allocation7 + $0x3f0] sm:$0xff]
    %v2775 = vld [vmem:[#allocation7 + $0x3f8] sm:$0xff]
    %v2776 = vld [vmem:[%s8] sm:$0xf]
    %v2778 = vlaneseq
    %v2779 = vshrl.u32 %v2778, 7
    %v2780 = vsub.s32 0, %v2779
    %v2781 = vrot.slane %v2776, %v2780
    %v2782 = vlaneseq
    %v2783 = vshrl.u32 %v2782, 7
    %v2784 = vsub.s32 1, %v2783
    %v2785 = vrot.slane %v2776, %v2784
    %v2786 = vlaneseq
    %v2787 = vshrl.u32 %v2786, 7
    %v2788 = vsub.s32 2, %v2787
    %v2789 = vrot.slane %v2776, %v2788
    %v2790 = vlaneseq
    %v2791 = vshrl.u32 %v2790, 7
    %v2792 = vsub.s32 3, %v2791
    %v2793 = vrot.slane %v2776, %v2792
    %v2926 = vunpack.c.l.b16 %v2648
    %v2927 = vunpack.c.h.b16 %v2648
    %v2928 = vunpack.c.l.b16 %v2649
    %v2929 = vunpack.c.h.b16 %v2649
    %v2930 = vunpack.c.l.b16 %v2650
    %v2931 = vunpack.c.h.b16 %v2650
    %v2932 = vunpack.c.l.b16 %v2651
    %v2933 = vunpack.c.h.b16 %v2651
    %v2934 = vunpack.c.l.b16 %v2652
    %v2935 = vunpack.c.h.b16 %v2652
    %v2936 = vunpack.c.l.b16 %v2653
    %v2937 = vunpack.c.h.b16 %v2653
    %v2938 = vunpack.c.l.b16 %v2654
    %v2939 = vunpack.c.h.b16 %v2654
    %v2940 = vunpack.c.l.b16 %v2655
    %v2941 = vunpack.c.h.b16 %v2655
    %v2942 = vunpack.c.l.b16 %v2656
    %v2943 = vunpack.c.h.b16 %v2656
    %v2944 = vunpack.c.l.b16 %v2657
    %v2945 = vunpack.c.h.b16 %v2657
    %v2946 = vunpack.c.l.b16 %v2658
    %v2947 = vunpack.c.h.b16 %v2658
    %v2948 = vunpack.c.l.b16 %v2659
    %v2949 = vunpack.c.h.b16 %v2659
    %v2950 = vunpack.c.l.b16 %v2660
    %v2951 = vunpack.c.h.b16 %v2660
    %v2952 = vunpack.c.l.b16 %v2661
    %v2953 = vunpack.c.h.b16 %v2661
    %v2954 = vunpack.c.l.b16 %v2662
    %v2955 = vunpack.c.h.b16 %v2662
    %v2956 = vunpack.c.l.b16 %v2663
    %v2957 = vunpack.c.h.b16 %v2663
    %v2958 = vunpack.c.l.b16 %v2664
    %v2959 = vunpack.c.h.b16 %v2664
    %v2960 = vunpack.c.l.b16 %v2665
    %v2961 = vunpack.c.h.b16 %v2665
    %v2962 = vunpack.c.l.b16 %v2666
    %v2963 = vunpack.c.h.b16 %v2666
    %v2964 = vunpack.c.l.b16 %v2667
    %v2965 = vunpack.c.h.b16 %v2667
    %v2966 = vunpack.c.l.b16 %v2668
    %v2967 = vunpack.c.h.b16 %v2668
    %v2968 = vunpack.c.l.b16 %v2669
    %v2969 = vunpack.c.h.b16 %v2669
    %v2970 = vunpack.c.l.b16 %v2670
    %v2971 = vunpack.c.h.b16 %v2670
    %v2972 = vunpack.c.l.b16 %v2671
    %v2973 = vunpack.c.h.b16 %v2671
    %v2974 = vunpack.c.l.b16 %v2672
    %v2975 = vunpack.c.h.b16 %v2672
    %v2976 = vunpack.c.l.b16 %v2673
    %v2977 = vunpack.c.h.b16 %v2673
    %v2978 = vunpack.c.l.b16 %v2674
    %v2979 = vunpack.c.h.b16 %v2674
    %v2980 = vunpack.c.l.b16 %v2675
    %v2981 = vunpack.c.h.b16 %v2675
    %v2982 = vunpack.c.l.b16 %v2676
    %v2983 = vunpack.c.h.b16 %v2676
    %v2984 = vunpack.c.l.b16 %v2677
    %v2985 = vunpack.c.h.b16 %v2677
    %v2986 = vunpack.c.l.b16 %v2678
    %v2987 = vunpack.c.h.b16 %v2678
    %v2988 = vunpack.c.l.b16 %v2679
    %v2989 = vunpack.c.h.b16 %v2679
    %v2990 = vunpack.c.l.b16 %v2680
    %v2991 = vunpack.c.h.b16 %v2680
    %v2992 = vunpack.c.l.b16 %v2681
    %v2993 = vunpack.c.h.b16 %v2681
    %v2994 = vunpack.c.l.b16 %v2682
    %v2995 = vunpack.c.h.b16 %v2682
    %v2996 = vunpack.c.l.b16 %v2683
    %v2997 = vunpack.c.h.b16 %v2683
    %v2998 = vunpack.c.l.b16 %v2684
    %v2999 = vunpack.c.h.b16 %v2684
    %v3000 = vunpack.c.l.b16 %v2685
    %v3001 = vunpack.c.h.b16 %v2685
    %v3002 = vunpack.c.l.b16 %v2686
    %v3003 = vunpack.c.h.b16 %v2686
    %v3004 = vunpack.c.l.b16 %v2687
    %v3005 = vunpack.c.h.b16 %v2687
    %v3006 = vunpack.c.l.b16 %v2688
    %v3007 = vunpack.c.h.b16 %v2688
    %v3008 = vunpack.c.l.b16 %v2689
    %v3009 = vunpack.c.h.b16 %v2689
    %v3010 = vunpack.c.l.b16 %v2690
    %v3011 = vunpack.c.h.b16 %v2690
    %v3012 = vunpack.c.l.b16 %v2691
    %v3013 = vunpack.c.h.b16 %v2691
    %v3014 = vunpack.c.l.b16 %v2692
    %v3015 = vunpack.c.h.b16 %v2692
    %v3016 = vunpack.c.l.b16 %v2693
    %v3017 = vunpack.c.h.b16 %v2693
    %v3018 = vunpack.c.l.b16 %v2694
    %v3019 = vunpack.c.h.b16 %v2694
    %v3020 = vunpack.c.l.b16 %v2695
    %v3021 = vunpack.c.h.b16 %v2695
    %v3022 = vunpack.c.l.b16 %v2696
    %v3023 = vunpack.c.h.b16 %v2696
    %v3024 = vunpack.c.l.b16 %v2697
    %v3025 = vunpack.c.h.b16 %v2697
    %v3026 = vunpack.c.l.b16 %v2698
    %v3027 = vunpack.c.h.b16 %v2698
    %v3028 = vunpack.c.l.b16 %v2699
    %v3029 = vunpack.c.h.b16 %v2699
    %v3030 = vunpack.c.l.b16 %v2700
    %v3031 = vunpack.c.h.b16 %v2700
    %v3032 = vunpack.c.l.b16 %v2701
    %v3033 = vunpack.c.h.b16 %v2701
    %v3034 = vunpack.c.l.b16 %v2702
    %v3035 = vunpack.c.h.b16 %v2702
    %v3036 = vunpack.c.l.b16 %v2703
    %v3037 = vunpack.c.h.b16 %v2703
    %v3038 = vunpack.c.l.b16 %v2704
    %v3039 = vunpack.c.h.b16 %v2704
    %v3040 = vunpack.c.l.b16 %v2705
    %v3041 = vunpack.c.h.b16 %v2705
    %v3042 = vunpack.c.l.b16 %v2706
    %v3043 = vunpack.c.h.b16 %v2706
    %v3044 = vunpack.c.l.b16 %v2707
    %v3045 = vunpack.c.h.b16 %v2707
    %v3046 = vunpack.c.l.b16 %v2708
    %v3047 = vunpack.c.h.b16 %v2708
    %v3048 = vunpack.c.l.b16 %v2709
    %v3049 = vunpack.c.h.b16 %v2709
    %v3050 = vunpack.c.l.b16 %v2710
    %v3051 = vunpack.c.h.b16 %v2710
    %v3052 = vunpack.c.l.b16 %v2711
    %v3053 = vunpack.c.h.b16 %v2711
    %v3054 = vunpack.c.l.b16 %v2712
    %v3055 = vunpack.c.h.b16 %v2712
    %v3056 = vunpack.c.l.b16 %v2713
    %v3057 = vunpack.c.h.b16 %v2713
    %v3058 = vunpack.c.l.b16 %v2714
    %v3059 = vunpack.c.h.b16 %v2714
    %v3060 = vunpack.c.l.b16 %v2715
    %v3061 = vunpack.c.h.b16 %v2715
    %v3062 = vunpack.c.l.b16 %v2716
    %v3063 = vunpack.c.h.b16 %v2716
    %v3064 = vunpack.c.l.b16 %v2717
    %v3065 = vunpack.c.h.b16 %v2717
    %v3066 = vunpack.c.l.b16 %v2718
    %v3067 = vunpack.c.h.b16 %v2718
    %v3068 = vunpack.c.l.b16 %v2719
    %v3069 = vunpack.c.h.b16 %v2719
    %v3070 = vunpack.c.l.b16 %v2720
    %v3071 = vunpack.c.h.b16 %v2720
    %v3072 = vunpack.c.l.b16 %v2721
    %v3073 = vunpack.c.h.b16 %v2721
    %v3074 = vunpack.c.l.b16 %v2722
    %v3075 = vunpack.c.h.b16 %v2722
    %v3076 = vunpack.c.l.b16 %v2723
    %v3077 = vunpack.c.h.b16 %v2723
    %v3078 = vunpack.c.l.b16 %v2724
    %v3079 = vunpack.c.h.b16 %v2724
    %v3080 = vunpack.c.l.b16 %v2725
    %v3081 = vunpack.c.h.b16 %v2725
    %v3082 = vunpack.c.l.b16 %v2726
    %v3083 = vunpack.c.h.b16 %v2726
    %v3084 = vunpack.c.l.b16 %v2727
    %v3085 = vunpack.c.h.b16 %v2727
    %v3086 = vunpack.c.l.b16 %v2728
    %v3087 = vunpack.c.h.b16 %v2728
    %v3088 = vunpack.c.l.b16 %v2729
    %v3089 = vunpack.c.h.b16 %v2729
    %v3090 = vunpack.c.l.b16 %v2730
    %v3091 = vunpack.c.h.b16 %v2730
    %v3092 = vunpack.c.l.b16 %v2731
    %v3093 = vunpack.c.h.b16 %v2731
    %v3094 = vunpack.c.l.b16 %v2732
    %v3095 = vunpack.c.h.b16 %v2732
    %v3096 = vunpack.c.l.b16 %v2733
    %v3097 = vunpack.c.h.b16 %v2733
    %v3098 = vunpack.c.l.b16 %v2734
    %v3099 = vunpack.c.h.b16 %v2734
    %v3100 = vunpack.c.l.b16 %v2735
    %v3101 = vunpack.c.h.b16 %v2735
    %v3102 = vunpack.c.l.b16 %v2736
    %v3103 = vunpack.c.h.b16 %v2736
    %v3104 = vunpack.c.l.b16 %v2737
    %v3105 = vunpack.c.h.b16 %v2737
    %v3106 = vunpack.c.l.b16 %v2738
    %v3107 = vunpack.c.h.b16 %v2738
    %v3108 = vunpack.c.l.b16 %v2739
    %v3109 = vunpack.c.h.b16 %v2739
    %v3110 = vunpack.c.l.b16 %v2740
    %v3111 = vunpack.c.h.b16 %v2740
    %v3112 = vunpack.c.l.b16 %v2741
    %v3113 = vunpack.c.h.b16 %v2741
    %v3114 = vunpack.c.l.b16 %v2742
    %v3115 = vunpack.c.h.b16 %v2742
    %v3116 = vunpack.c.l.b16 %v2743
    %v3117 = vunpack.c.h.b16 %v2743
    %v3118 = vunpack.c.l.b16 %v2744
    %v3119 = vunpack.c.h.b16 %v2744
    %v3120 = vunpack.c.l.b16 %v2745
    %v3121 = vunpack.c.h.b16 %v2745
    %v3122 = vunpack.c.l.b16 %v2746
    %v3123 = vunpack.c.h.b16 %v2746
    %v3124 = vunpack.c.l.b16 %v2747
    %v3125 = vunpack.c.h.b16 %v2747
    %v3126 = vunpack.c.l.b16 %v2748
    %v3127 = vunpack.c.h.b16 %v2748
    %v3128 = vunpack.c.l.b16 %v2749
    %v3129 = vunpack.c.h.b16 %v2749
    %v3130 = vunpack.c.l.b16 %v2750
    %v3131 = vunpack.c.h.b16 %v2750
    %v3132 = vunpack.c.l.b16 %v2751
    %v3133 = vunpack.c.h.b16 %v2751
    %v3134 = vunpack.c.l.b16 %v2752
    %v3135 = vunpack.c.h.b16 %v2752
    %v3136 = vunpack.c.l.b16 %v2753
    %v3137 = vunpack.c.h.b16 %v2753
    %v3138 = vunpack.c.l.b16 %v2754
    %v3139 = vunpack.c.h.b16 %v2754
    %v3140 = vunpack.c.l.b16 %v2755
    %v3141 = vunpack.c.h.b16 %v2755
    %v3142 = vunpack.c.l.b16 %v2756
    %v3143 = vunpack.c.h.b16 %v2756
    %v3144 = vunpack.c.l.b16 %v2757
    %v3145 = vunpack.c.h.b16 %v2757
    %v3146 = vunpack.c.l.b16 %v2758
    %v3147 = vunpack.c.h.b16 %v2758
    %v3148 = vunpack.c.l.b16 %v2759
    %v3149 = vunpack.c.h.b16 %v2759
    %v3150 = vunpack.c.l.b16 %v2760
    %v3151 = vunpack.c.h.b16 %v2760
    %v3152 = vunpack.c.l.b16 %v2761
    %v3153 = vunpack.c.h.b16 %v2761
    %v3154 = vunpack.c.l.b16 %v2762
    %v3155 = vunpack.c.h.b16 %v2762
    %v3156 = vunpack.c.l.b16 %v2763
    %v3157 = vunpack.c.h.b16 %v2763
    %v3158 = vunpack.c.l.b16 %v2764
    %v3159 = vunpack.c.h.b16 %v2764
    %v3160 = vunpack.c.l.b16 %v2765
    %v3161 = vunpack.c.h.b16 %v2765
    %v3162 = vunpack.c.l.b16 %v2766
    %v3163 = vunpack.c.h.b16 %v2766
    %v3164 = vunpack.c.l.b16 %v2767
    %v3165 = vunpack.c.h.b16 %v2767
    %v3166 = vunpack.c.l.b16 %v2768
    %v3167 = vunpack.c.h.b16 %v2768
    %v3168 = vunpack.c.l.b16 %v2769
    %v3169 = vunpack.c.h.b16 %v2769
    %v3170 = vunpack.c.l.b16 %v2770
    %v3171 = vunpack.c.h.b16 %v2770
    %v3172 = vunpack.c.l.b16 %v2771
    %v3173 = vunpack.c.h.b16 %v2771
    %v3174 = vunpack.c.l.b16 %v2772
    %v3175 = vunpack.c.h.b16 %v2772
    %v3176 = vunpack.c.l.b16 %v2773
    %v3177 = vunpack.c.h.b16 %v2773
    %v3178 = vunpack.c.l.b16 %v2774
    %v3179 = vunpack.c.h.b16 %v2774
    %v3180 = vunpack.c.l.b16 %v2775
    %v3181 = vunpack.c.h.b16 %v2775
    %v3182 = vpack.c.b16 %v2930, %v2926
    %v3183 = vpack.c.b16 %v2931, %v2927
    %v3184 = vpack.c.b16 %v2932, %v2928
    %v3185 = vpack.c.b16 %v2933, %v2929
    %v3186 = vpack.c.b16 %v2938, %v2934
    %v3187 = vpack.c.b16 %v2939, %v2935
    %v3188 = vpack.c.b16 %v2940, %v2936
    %v3189 = vpack.c.b16 %v2941, %v2937
    %v3190 = vpack.c.b16 %v2946, %v2942
    %v3191 = vpack.c.b16 %v2947, %v2943
    %v3192 = vpack.c.b16 %v2948, %v2944
    %v3193 = vpack.c.b16 %v2949, %v2945
    %v3194 = vpack.c.b16 %v2954, %v2950
    %v3195 = vpack.c.b16 %v2955, %v2951
    %v3196 = vpack.c.b16 %v2956, %v2952
    %v3197 = vpack.c.b16 %v2957, %v2953
    %v3198 = vpack.c.b16 %v2962, %v2958
    %v3199 = vpack.c.b16 %v2963, %v2959
    %v3200 = vpack.c.b16 %v2964, %v2960
    %v3201 = vpack.c.b16 %v2965, %v2961
    %v3202 = vpack.c.b16 %v2970, %v2966
    %v3203 = vpack.c.b16 %v2971, %v2967
    %v3204 = vpack.c.b16 %v2972, %v2968
    %v3205 = vpack.c.b16 %v2973, %v2969
    %v3206 = vpack.c.b16 %v2978, %v2974
    %v3207 = vpack.c.b16 %v2979, %v2975
    %v3208 = vpack.c.b16 %v2980, %v2976
    %v3209 = vpack.c.b16 %v2981, %v2977
    %v3210 = vpack.c.b16 %v2986, %v2982
    %v3211 = vpack.c.b16 %v2987, %v2983
    %v3212 = vpack.c.b16 %v2988, %v2984
    %v3213 = vpack.c.b16 %v2989, %v2985
    %v3214 = vpack.c.b16 %v2994, %v2990
    %v3215 = vpack.c.b16 %v2995, %v2991
    %v3216 = vpack.c.b16 %v2996, %v2992
    %v3217 = vpack.c.b16 %v2997, %v2993
    %v3218 = vpack.c.b16 %v3002, %v2998
    %v3219 = vpack.c.b16 %v3003, %v2999
    %v3220 = vpack.c.b16 %v3004, %v3000
    %v3221 = vpack.c.b16 %v3005, %v3001
    %v3222 = vpack.c.b16 %v3010, %v3006
    %v3223 = vpack.c.b16 %v3011, %v3007
    %v3224 = vpack.c.b16 %v3012, %v3008
    %v3225 = vpack.c.b16 %v3013, %v3009
    %v3226 = vpack.c.b16 %v3018, %v3014
    %v3227 = vpack.c.b16 %v3019, %v3015
    %v3228 = vpack.c.b16 %v3020, %v3016
    %v3229 = vpack.c.b16 %v3021, %v3017
    %v3230 = vpack.c.b16 %v3026, %v3022
    %v3231 = vpack.c.b16 %v3027, %v3023
    %v3232 = vpack.c.b16 %v3028, %v3024
    %v3233 = vpack.c.b16 %v3029, %v3025
    %v3234 = vpack.c.b16 %v3034, %v3030
    %v3235 = vpack.c.b16 %v3035, %v3031
    %v3236 = vpack.c.b16 %v3036, %v3032
    %v3237 = vpack.c.b16 %v3037, %v3033
    %v3238 = vpack.c.b16 %v3042, %v3038
    %v3239 = vpack.c.b16 %v3043, %v3039
    %v3240 = vpack.c.b16 %v3044, %v3040
    %v3241 = vpack.c.b16 %v3045, %v3041
    %v3242 = vpack.c.b16 %v3050, %v3046
    %v3243 = vpack.c.b16 %v3051, %v3047
    %v3244 = vpack.c.b16 %v3052, %v3048
    %v3245 = vpack.c.b16 %v3053, %v3049
    %v3246 = vpack.c.b16 %v3058, %v3054
    %v3247 = vpack.c.b16 %v3059, %v3055
    %v3248 = vpack.c.b16 %v3060, %v3056
    %v3249 = vpack.c.b16 %v3061, %v3057
    %v3250 = vpack.c.b16 %v3066, %v3062
    %v3251 = vpack.c.b16 %v3067, %v3063
    %v3252 = vpack.c.b16 %v3068, %v3064
    %v3253 = vpack.c.b16 %v3069, %v3065
    %v3254 = vpack.c.b16 %v3074, %v3070
    %v3255 = vpack.c.b16 %v3075, %v3071
    %v3256 = vpack.c.b16 %v3076, %v3072
    %v3257 = vpack.c.b16 %v3077, %v3073
    %v3258 = vpack.c.b16 %v3082, %v3078
    %v3259 = vpack.c.b16 %v3083, %v3079
    %v3260 = vpack.c.b16 %v3084, %v3080
    %v3261 = vpack.c.b16 %v3085, %v3081
    %v3262 = vpack.c.b16 %v3090, %v3086
    %v3263 = vpack.c.b16 %v3091, %v3087
    %v3264 = vpack.c.b16 %v3092, %v3088
    %v3265 = vpack.c.b16 %v3093, %v3089
    %v3266 = vpack.c.b16 %v3098, %v3094
    %v3267 = vpack.c.b16 %v3099, %v3095
    %v3268 = vpack.c.b16 %v3100, %v3096
    %v3269 = vpack.c.b16 %v3101, %v3097
    %v3270 = vpack.c.b16 %v3106, %v3102
    %v3271 = vpack.c.b16 %v3107, %v3103
    %v3272 = vpack.c.b16 %v3108, %v3104
    %v3273 = vpack.c.b16 %v3109, %v3105
    %v3274 = vpack.c.b16 %v3114, %v3110
    %v3275 = vpack.c.b16 %v3115, %v3111
    %v3276 = vpack.c.b16 %v3116, %v3112
    %v3277 = vpack.c.b16 %v3117, %v3113
    %v3278 = vpack.c.b16 %v3122, %v3118
    %v3279 = vpack.c.b16 %v3123, %v3119
    %v3280 = vpack.c.b16 %v3124, %v3120
    %v3281 = vpack.c.b16 %v3125, %v3121
    %v3282 = vpack.c.b16 %v3130, %v3126
    %v3283 = vpack.c.b16 %v3131, %v3127
    %v3284 = vpack.c.b16 %v3132, %v3128
    %v3285 = vpack.c.b16 %v3133, %v3129
    %v3286 = vpack.c.b16 %v3138, %v3134
    %v3287 = vpack.c.b16 %v3139, %v3135
    %v3288 = vpack.c.b16 %v3140, %v3136
    %v3289 = vpack.c.b16 %v3141, %v3137
    %v3290 = vpack.c.b16 %v3146, %v3142
    %v3291 = vpack.c.b16 %v3147, %v3143
    %v3292 = vpack.c.b16 %v3148, %v3144
    %v3293 = vpack.c.b16 %v3149, %v3145
    %v3294 = vpack.c.b16 %v3154, %v3150
    %v3295 = vpack.c.b16 %v3155, %v3151
    %v3296 = vpack.c.b16 %v3156, %v3152
    %v3297 = vpack.c.b16 %v3157, %v3153
    %v3298 = vpack.c.b16 %v3162, %v3158
    %v3299 = vpack.c.b16 %v3163, %v3159
    %v3300 = vpack.c.b16 %v3164, %v3160
    %v3301 = vpack.c.b16 %v3165, %v3161
    %v3302 = vpack.c.b16 %v3170, %v3166
    %v3303 = vpack.c.b16 %v3171, %v3167
    %v3304 = vpack.c.b16 %v3172, %v3168
    %v3305 = vpack.c.b16 %v3173, %v3169
    %v3306 = vpack.c.b16 %v3178, %v3174
    %v3307 = vpack.c.b16 %v3179, %v3175
    %v3308 = vpack.c.b16 %v3180, %v3176
    %v3309 = vpack.c.b16 %v3181, %v3177
    %3438 = vmatprep.subr.bf16.mxu0 %v3211
    %3439 = vmatpush1.bf16.msra.mxu0 %v3210
    %3440 = vmatprep.subr.bf16.mxu0 %v3207
    %3441 = vmatpush1.bf16.msra.mxu0 %v3206
    %3442 = vmatprep.subr.bf16.mxu0 %v3203
    %3443 = vmatpush1.bf16.msra.mxu0 %v3202
    %3444 = vmatprep.subr.bf16.mxu0 %v3199
    %3445 = vmatpush1.bf16.msra.mxu0 %v3198
    %3446 = vmatprep.subr.bf16.mxu0 %v3195
    %3447 = vmatpush1.bf16.msra.mxu0 %v3194
    %3448 = vmatprep.subr.bf16.mxu0 %v3191
    %3449 = vmatpush1.bf16.msra.mxu0 %v3190
    %3450 = vmatprep.subr.bf16.mxu0 %v3187
    %3451 = vmatpush1.bf16.msra.mxu0 %v3186
    %3452 = vmatprep.subr.bf16.mxu0 %v3183
    %3453 = vmatpush1.bf16.msra.mxu0 %v3182
    %3454 = vmatprep.subr.bf16.mxu0 %v3243
    %3455 = vmatpush2.bf16.msra.mxu0 %v3242
    %3456 = vmatprep.subr.bf16.mxu0 %v3239
    %3457 = vmatpush2.bf16.msra.mxu0 %v3238
    %3458 = vmatprep.subr.bf16.mxu0 %v3235
    %3459 = vmatpush2.bf16.msra.mxu0 %v3234
    %3460 = vmatprep.subr.bf16.mxu0 %v3231
    %3461 = vmatpush2.bf16.msra.mxu0 %v3230
    %3462 = vmatprep.subr.bf16.mxu0 %v3227
    %3463 = vmatpush2.bf16.msra.mxu0 %v3226
    %3464 = vmatprep.subr.bf16.mxu0 %v3223
    %3465 = vmatpush2.bf16.msra.mxu0 %v3222
    %3466 = vmatprep.subr.bf16.mxu0 %v3219
    %3467 = vmatpush2.bf16.msra.mxu0 %v3218
    %3468 = vmatprep.subr.bf16.mxu0 %v3215
    %3469 = vmatpush2.bf16.msra.mxu0 %v3214
    %3470 = vmatprep.mubr.bf16.mxu0 %v2645
    %3471 = vmatmul.mubr.bf16.gmra.mxu0 %v2644
    %v3472 = vpop.f32.mrf.mxu0
    %v3473 = vadd.f32 %v2781, %v3472
    %v3474 = vpop.f32.mrf.mxu0
    %v3475 = vadd.f32 %v2785, %v3474
    %v3476 = vpop.f32.mrf.mxu0
    %v3477 = vpop.f32.mrf.mxu0
    %3478 = vdwg.mxu0
    %3479 = vmatprep.subr.bf16.mxu0 %v3275
    %3480 = vmatpush1.bf16.msra.mxu0 %v3274
    %3481 = vmatprep.subr.bf16.mxu0 %v3271
    %3482 = vmatpush1.bf16.msra.mxu0 %v3270
    %3483 = vmatprep.subr.bf16.mxu0 %v3267
    %3484 = vmatpush1.bf16.msra.mxu0 %v3266
    %3485 = vmatprep.subr.bf16.mxu0 %v3263
    %3486 = vmatpush1.bf16.msra.mxu0 %v3262
    %3487 = vmatprep.subr.bf16.mxu0 %v3259
    %3488 = vmatpush1.bf16.msra.mxu0 %v3258
    %3489 = vmatprep.subr.bf16.mxu0 %v3255
    %3490 = vmatpush1.bf16.msra.mxu0 %v3254
    %3491 = vmatprep.subr.bf16.mxu0 %v3251
    %3492 = vmatpush1.bf16.msra.mxu0 %v3250
    %3493 = vmatprep.subr.bf16.mxu0 %v3247
    %3494 = vmatpush1.bf16.msra.mxu0 %v3246
    %3495 = vmatprep.subr.bf16.mxu0 %v3307
    %3496 = vmatpush2.bf16.msra.mxu0 %v3306
    %3497 = vmatprep.subr.bf16.mxu0 %v3303
    %3498 = vmatpush2.bf16.msra.mxu0 %v3302
    %3499 = vmatprep.subr.bf16.mxu0 %v3299
    %3500 = vmatpush2.bf16.msra.mxu0 %v3298
    %3501 = vmatprep.subr.bf16.mxu0 %v3295
    %3502 = vmatpush2.bf16.msra.mxu0 %v3294
    %3503 = vmatprep.subr.bf16.mxu0 %v3291
    %3504 = vmatpush2.bf16.msra.mxu0 %v3290
    %3505 = vmatprep.subr.bf16.mxu0 %v3287
    %3506 = vmatpush2.bf16.msra.mxu0 %v3286
    %3507 = vmatprep.subr.bf16.mxu0 %v3283
    %3508 = vmatpush2.bf16.msra.mxu0 %v3282
    %3509 = vmatprep.subr.bf16.mxu0 %v3279
    %3510 = vmatpush2.bf16.msra.mxu0 %v3278
    %3511 = vmatprep.mubr.bf16.mxu0 %v2647
    %3512 = vmatmul.mubr.bf16.gmra.mxu0 %v2646
    %v3513 = vpop.f32.mrf.mxu0
    %v3514 = vadd.f32 %v3473, %v3513
    %v3515 = vpop.f32.mrf.mxu0
    %v3516 = vadd.f32 %v3475, %v3515
    %v3517 = vpop.f32.mrf.mxu0
    %v3518 = vpop.f32.mrf.mxu0
    %3519 = vdwg.mxu0
    %3520 = vmatprep.subr.bf16.mxu0 %v3213
    %3521 = vmatpush1.bf16.msra.mxu0 %v3212
    %3522 = vmatprep.subr.bf16.mxu0 %v3209
    %3523 = vmatpush1.bf16.msra.mxu0 %v3208
    %3524 = vmatprep.subr.bf16.mxu0 %v3205
    %3525 = vmatpush1.bf16.msra.mxu0 %v3204
    %3526 = vmatprep.subr.bf16.mxu0 %v3201
    %3527 = vmatpush1.bf16.msra.mxu0 %v3200
    %3528 = vmatprep.subr.bf16.mxu0 %v3197
    %3529 = vmatpush1.bf16.msra.mxu0 %v3196
    %3530 = vmatprep.subr.bf16.mxu0 %v3193
    %3531 = vmatpush1.bf16.msra.mxu0 %v3192
    %3532 = vmatprep.subr.bf16.mxu0 %v3189
    %3533 = vmatpush1.bf16.msra.mxu0 %v3188
    %3534 = vmatprep.subr.bf16.mxu0 %v3185
    %3535 = vmatpush1.bf16.msra.mxu0 %v3184
    %3536 = vmatprep.subr.bf16.mxu0 %v3245
    %3537 = vmatpush2.bf16.msra.mxu0 %v3244
    %3538 = vmatprep.subr.bf16.mxu0 %v3241
    %3539 = vmatpush2.bf16.msra.mxu0 %v3240
    %3540 = vmatprep.subr.bf16.mxu0 %v3237
    %3541 = vmatpush2.bf16.msra.mxu0 %v3236
    %3542 = vmatprep.subr.bf16.mxu0 %v3233
    %3543 = vmatpush2.bf16.msra.mxu0 %v3232
    %3544 = vmatprep.subr.bf16.mxu0 %v3229
    %3545 = vmatpush2.bf16.msra.mxu0 %v3228
    %3546 = vmatprep.subr.bf16.mxu0 %v3225
    %3547 = vmatpush2.bf16.msra.mxu0 %v3224
    %3548 = vmatprep.subr.bf16.mxu0 %v3221
    %3549 = vmatpush2.bf16.msra.mxu0 %v3220
    %3550 = vmatprep.subr.bf16.mxu0 %v3217
    %3551 = vmatpush2.bf16.msra.mxu0 %v3216
    %3552 = vmatprep.mubr.bf16.mxu0 %v2645
    %3553 = vmatmul.mubr.bf16.gmra.mxu0 %v2644
    %v3554 = vpop.f32.mrf.mxu0
    %v3555 = vadd.f32 %v2789, %v3554
    %v3556 = vpop.f32.mrf.mxu0
    %v3557 = vadd.f32 %v2793, %v3556
    %v3558 = vpop.f32.mrf.mxu0
    %v3559 = vpop.f32.mrf.mxu0
    %3560 = vdwg.mxu0
    %3561 = vmatprep.subr.bf16.mxu0 %v3277
    %3562 = vmatpush1.bf16.msra.mxu0 %v3276
    %3563 = vmatprep.subr.bf16.mxu0 %v3273
    %3564 = vmatpush1.bf16.msra.mxu0 %v3272
    %3565 = vmatprep.subr.bf16.mxu0 %v3269
    %3566 = vmatpush1.bf16.msra.mxu0 %v3268
    %3567 = vmatprep.subr.bf16.mxu0 %v3265
    %3568 = vmatpush1.bf16.msra.mxu0 %v3264
    %3569 = vmatprep.subr.bf16.mxu0 %v3261
    %3570 = vmatpush1.bf16.msra.mxu0 %v3260
    %3571 = vmatprep.subr.bf16.mxu0 %v3257
    %3572 = vmatpush1.bf16.msra.mxu0 %v3256
    %3573 = vmatprep.subr.bf16.mxu0 %v3253
    %3574 = vmatpush1.bf16.msra.mxu0 %v3252
    %3575 = vmatprep.subr.bf16.mxu0 %v3249
    %3576 = vmatpush1.bf16.msra.mxu0 %v3248
    %3577 = vmatprep.subr.bf16.mxu0 %v3309
    %3578 = vmatpush2.bf16.msra.mxu0 %v3308
    %3579 = vmatprep.subr.bf16.mxu0 %v3305
    %3580 = vmatpush2.bf16.msra.mxu0 %v3304
    %3581 = vmatprep.subr.bf16.mxu0 %v3301
    %3582 = vmatpush2.bf16.msra.mxu0 %v3300
    %3583 = vmatprep.subr.bf16.mxu0 %v3297
    %3584 = vmatpush2.bf16.msra.mxu0 %v3296
    %3585 = vmatprep.subr.bf16.mxu0 %v3293
    %3586 = vmatpush2.bf16.msra.mxu0 %v3292
    %3587 = vmatprep.subr.bf16.mxu0 %v3289
    %3588 = vmatpush2.bf16.msra.mxu0 %v3288
    %3589 = vmatprep.subr.bf16.mxu0 %v3285
    %3590 = vmatpush2.bf16.msra.mxu0 %v3284
    %3591 = vmatprep.subr.bf16.mxu0 %v3281
    %3592 = vmatpush2.bf16.msra.mxu0 %v3280
    %3593 = vmatprep.mubr.bf16.mxu0 %v2647
    %3594 = vmatmul.mubr.bf16.gmra.mxu0 %v2646
    %v3595 = vpop.f32.mrf.mxu0
    %v3596 = vadd.f32 %v3555, %v3595
    %v3597 = vpop.f32.mrf.mxu0
    %v3598 = vadd.f32 %v3557, %v3597
    %v3599 = vpop.f32.mrf.mxu0
    %v3600 = vpop.f32.mrf.mxu0
    %3601 = vdwg.mxu0
    %vm3602 = vcmp.gt.f32.partialorder %v3514, 0.0
    %vm3603 = vcmp.gt.f32.partialorder %v3516, 0.0
    %vm3604 = vcmp.gt.f32.partialorder %v3596, 0.0
    %vm3605 = vcmp.gt.f32.partialorder %v3598, 0.0
    %v3606 = vmul.f32 %v3514, 0.2
    %v3607 = vmul.f32 %v3516, 0.2
    %v3608 = vmul.f32 %v3596, 0.2
    %v3609 = vmul.f32 %v3598, 0.2
    %v3610 = vsel %vm3602, %v3514, %v3606
    %v3611 = vsel %vm3603, %v3516, %v3607
    %v3612 = vsel %vm3604, %v3596, %v3608
    %v3613 = vsel %vm3605, %v3598, %v3609
    %v3614 = vld [vmem:[%s9] sm:$0xf]
    %v3616 = vlaneseq
    %v3617 = vshrl.u32 %v3616, 7
    %v3618 = vsub.s32 0, %v3617
    %v3619 = vrot.slane %v3614, %v3618
    %v3620 = vlaneseq
    %v3621 = vshrl.u32 %v3620, 7
    %v3622 = vsub.s32 1, %v3621
    %v3623 = vrot.slane %v3614, %v3622
    %v3624 = vlaneseq
    %v3625 = vshrl.u32 %v3624, 7
    %v3626 = vsub.s32 2, %v3625
    %v3627 = vrot.slane %v3614, %v3626
    %v3628 = vlaneseq
    %v3629 = vshrl.u32 %v3628, 7
    %v3630 = vsub.s32 3, %v3629
    %v3631 = vrot.slane %v3614, %v3630
    %v3636 = vmul.f32 %v3610, %v3619
    %v3637 = vmul.f32 %v3611, %v3623
    %v3638 = vmul.f32 %v3612, %v3627
    %v3639 = vmul.f32 %v3613, %v3631
    %v3640 = vadd.f32 %v3636, %v3637
    %v3641 = vadd.f32 %v3640, %v3638
    %v3642 = vadd.f32 %v3641, %v3639
    %3643 = vadd.xlane.f32.xlu0 %v3642
    %v3644 = vpop.xlane.xlu0 %3643
    %v3645 = vld [vmem:[#allocation2] sm:$0x1]
    %v3647 = vlaneseq
    %v3648 = vshrl.u32 %v3647, 7
    %v3649 = vsub.s32 0, %v3648
    %v3650 = vrot.slane %v3645, %v3649
    %v3652 = vadd.f32 %v3644, %v3650
    %vm3653 = vcmask 7168
    %3654 = vst.msk [vmem:[%s11] sm:$0xff] %vm3653, %v3652
    // Predicated region
    $region58: #{discriminator_forward.1} parent=1 // pred_check
      _
    $region59: #{discriminator_forward.1} parent=1 // pred_check_branch
      %3656 = sbr.rel (0) target = $region61
    $region60: #{discriminator_forward.1} parent=1 // pred_region
      _
    $region61: #{discriminator_forward.1} parent=1 // pred_fallthru
      _
    // Predicated region
    $region62: #{discriminator_forward.1} parent=1 // pred_check
      _
    $region63: #{discriminator_forward.1} parent=1 // pred_check_branch
      %3658 = sbr.rel (0) target = $region65
    $region64: #{discriminator_forward.1} parent=1 // pred_region
      _
    $region65: #{discriminator_forward.1} parent=1 // pred_fallthru
      _
    %3659 = vsyncpa [#allocation4], 1
    %3660 = vsyncpa [#allocation6], 1

</llo_original>
